<compile_context>
chip_gen: v5e
topology: v5e:2x2
jax: 0.10.0
libtpu: 0.0.40
codegen_flags: <defaults>
</compile_context>

<pallas_src>
import functools
import math

import jax
import jax.numpy as jnp
from jax.experimental import pallas as pl
from jax.experimental.pallas import tpu as pltpu

# ---- hyper-parameters (small, consistent with the module's forward) ----
PAD = 0
VOCAB = 50
D_MODEL = 32
N_HEAD = 4
D_FF = 64
N_LAYERS = 2
LN_EPS = 1e-5
NEG_INF = -1e9


# ----------------------------------------------------------------------------
# Pallas kernel: the full N_LAYERS decoder stack for one batch element
# ----------------------------------------------------------------------------
def decoder_stack_kernel(x_ref, enc_ref, tpad_ref, spad_ref, qmask_ref,
                         ln_g_ref, ln_b_ref,
                         s_wkvq_ref, s_bkvq_ref, s_wo_ref, s_bo_ref,
                         c_wkv_ref, c_bkv_ref, c_wq_ref, c_bq_ref,
                         c_wo_ref, c_bo_ref,
                         w1_ref, b1_ref, w2_ref, b2_ref,
                         out_ref, sattn_ref, cattn_ref,
                         *, n_head, n_layers):
    x = x_ref[0]            # (Lt, D)
    enc = enc_ref[0]        # (Ls, D)
    tpad = tpad_ref[0]      # (1, Lt)  1.0 == PAD target token (key padding)
    spad = spad_ref[0]      # (1, Ls)  1.0 == PAD source token
    qmask = qmask_ref[0]    # (Lt, 1)  1.0 == real query token

    Lt, d_model = x.shape
    dk = d_model // n_head
    scale = 1.0 / math.sqrt(dk)

    # Attention masks built in-kernel as additive biases (no O(L^2) HBM mask
    # traffic).  Matches masked_fill semantics whenever a row has at least one
    # unmasked key (always true for non-degenerate inputs).
    row = jax.lax.broadcasted_iota(jnp.int32, (Lt, Lt), 0)
    col = jax.lax.broadcasted_iota(jnp.int32, (Lt, Lt), 1)
    self_bias = jnp.where(jnp.logical_or(col > row, tpad > 0.0), NEG_INF, 0.0)  # (Lt, Lt)
    cross_bias = jnp.where(spad > 0.0, NEG_INF, 0.0)                            # (1, Ls)

    def layer_norm(v, g, b):
        mu = jnp.mean(v, axis=-1, keepdims=True)
        var = jnp.mean(jnp.square(v - mu), axis=-1, keepdims=True)
        return (v - mu) * jax.lax.rsqrt(var + LN_EPS) * g + b

    def mha(k, v, q, Wo, bo, bias):
        # k, v: (Lk, D); q: (Lq, D); bias broadcastable to (Lq, Lk).
        ctxs = []
        attns = []
        for h in range(n_head):          # static unroll over heads
            lo = h * dk
            qh = q[:, lo:lo + dk]
            kh = k[:, lo:lo + dk]
            vh = v[:, lo:lo + dk]
            # (Lq, dk) x (Lk, dk)^T -> (Lq, Lk) without explicit transpose
            s = jax.lax.dot_general(qh, kh, (((1,), (1,)), ((), ())),
                                    preferred_element_type=jnp.float32)
            s = s * scale + bias
            m = jnp.max(s, axis=-1, keepdims=True)
            e = jnp.exp(s - m)
            a = e / jnp.sum(e, axis=-1, keepdims=True)
            attns.append(a)
            ctxs.append(jnp.dot(a, vh, preferred_element_type=jnp.float32))
        ctx = jnp.concatenate(ctxs, axis=-1)            # (Lq, D)
        a_cat = jnp.concatenate(attns, axis=-1)         # (Lq, H*Lk) lane-dense
        out = jnp.dot(ctx, Wo, preferred_element_type=jnp.float32) + bo
        return out * qmask, a_cat        # zero outputs at padded query positions

    for li in range(n_layers):           # static unroll over layers; x stays in VMEM
        last = (li == n_layers - 1)
        g = ln_g_ref[li]                 # (3, D)
        lb = ln_b_ref[li]

        # ---- self-attention sub-layer (fused K/V/Q projection) ----
        kvq = jnp.dot(x, s_wkvq_ref[li],
                      preferred_element_type=jnp.float32) + s_bkvq_ref[li]
        sk = kvq[:, 0:d_model]
        sv = kvq[:, d_model:2 * d_model]
        sq = kvq[:, 2 * d_model:3 * d_model]
        sa, sa_attn = mha(sk, sv, sq, s_wo_ref[li], s_bo_ref[li], self_bias)
        if last:                         # only the last layer's maps are returned
            sattn_ref[0] = sa_attn       # one lane-dense store: (Lt, H*Lt)
        x = layer_norm(x + sa, g[0:1, :], lb[0:1, :])

        # ---- encoder-decoder attention sub-layer (fused K/V projection) ----
        kv = jnp.dot(enc, c_wkv_ref[li],
                     preferred_element_type=jnp.float32) + c_bkv_ref[li]
        ck = kv[:, 0:d_model]
        cv = kv[:, d_model:2 * d_model]
        cq = jnp.dot(x, c_wq_ref[li],
                     preferred_element_type=jnp.float32) + c_bq_ref[li]
        ca, ca_attn = mha(ck, cv, cq, c_wo_ref[li], c_bo_ref[li], cross_bias)
        if last:
            cattn_ref[0] = ca_attn       # one lane-dense store: (Lt, H*Ls)
        x = layer_norm(x + ca, g[1:2, :], lb[1:2, :])

        # ---- position-wise feed-forward sub-layer ----
        h1 = jnp.maximum(
            jnp.dot(x, w1_ref[li], preferred_element_type=jnp.float32) + b1_ref[li],
            0.0)
        ff = jnp.dot(h1, w2_ref[li], preferred_element_type=jnp.float32) + b2_ref[li]
        x = layer_norm(x + ff, g[2:3, :], lb[2:3, :])

    out_ref[0] = x


def run_decoder_stack(x, enc, tpad, spad, qmask, p):
    B, Lt, D = x.shape
    Ls = enc.shape[1]
    H = N_HEAD

    kernel = functools.partial(decoder_stack_kernel, n_head=H, n_layers=N_LAYERS)

    def batch_spec(shape):
        n = len(shape)
        return pl.BlockSpec(shape, lambda b, _n=n: (b,) + (0,) * (_n - 1))

    def const_spec(arr):
        n = arr.ndim
        return pl.BlockSpec(arr.shape, lambda b, _n=n: (0,) * _n)

    weights = [p["ln_g"], p["ln_b"],
               p["s_wkvq"], p["s_bkvq"], p["s_wo"], p["s_bo"],
               p["c_wkv"], p["c_bkv"], p["c_wq"], p["c_bq"], p["c_wo"], p["c_bo"],
               p["w1"], p["b1"], p["w2"], p["b2"]]

    in_specs = [
        batch_spec((1, Lt, D)),      # x
        batch_spec((1, Ls, D)),      # enc_output
        batch_spec((1, 1, Lt)),      # target pad flags (keys)
        batch_spec((1, 1, Ls)),      # source pad flags (keys)
        batch_spec((1, Lt, 1)),      # query mask
    ] + [const_spec(w) for w in weights]

    # Attention maps are produced lane-dense: heads packed along the last axis.
    out_specs = (
        batch_spec((1, Lt, D)),
        batch_spec((1, Lt, H * Lt)),
        batch_spec((1, Lt, H * Ls)),
    )
    out_shape = (
        jax.ShapeDtypeStruct((B, Lt, D), jnp.float32),
        jax.ShapeDtypeStruct((B, Lt, H * Lt), jnp.float32),
        jax.ShapeDtypeStruct((B, Lt, H * Ls), jnp.float32),
    )
    out, sattn_packed, cattn_packed = pl.pallas_call(
        kernel,
        out_shape=out_shape,
        grid=(B,),
        in_specs=in_specs,
        out_specs=out_specs,
        compiler_params=pltpu.CompilerParams(dimension_semantics=("parallel",)),
    )(x, enc, tpad, spad, qmask, *weights)

    # Unpack head-concatenated attention maps to (B, H, Lq, Lk) outside the
    # kernel (pure layout plumbing in XLA).
    sattn = sattn_packed.reshape(B, Lt, H, Lt).transpose(0, 2, 1, 3)
    cattn = cattn_packed.reshape(B, Lt, H, Ls).transpose(0, 2, 1, 3)
    return out, sattn, cattn


# ----------------------------------------------------------------------------
# Plain-JAX glue: embedding, positional encoding, parameter init / packing
# ----------------------------------------------------------------------------
def sinusoid_pos_enc(length, d_model):
    pos = jnp.arange(length)[:, None].astype(jnp.float32)
    i = jnp.arange(d_model)[None, :]
    angle = pos / jnp.power(10000.0, (2 * (i // 2)).astype(jnp.float32) / d_model)
    return jnp.where(i % 2 == 0, jnp.sin(angle), jnp.cos(angle)).astype(jnp.float32)


def embed_trg(trg_seq, emb_table):
    Lt = trg_seq.shape[1]
    x = emb_table[trg_seq] * math.sqrt(D_MODEL) + sinusoid_pos_enc(Lt, D_MODEL)[None]
    return x.astype(jnp.float32)


def init_params(key):
    def nrm(k, shape, scale=0.05):
        return scale * jax.random.normal(k, shape, dtype=jnp.float32)

    keys = jax.random.split(key, 1 + N_LAYERS)
    params = {"emb": nrm(keys[0], (VOCAB, D_MODEL), 1.0), "layers": []}
    for li in range(N_LAYERS):
        lk = jax.random.split(keys[1 + li], 10)
        layer = dict(
            ln_g=jnp.ones((3, D_MODEL), jnp.float32),
            ln_b=jnp.zeros((3, D_MODEL), jnp.float32),
            sW=nrm(lk[0], (4, D_MODEL, D_MODEL)),   # order: key, value, query, output
            sb=nrm(lk[1], (4, D_MODEL)),
            cW=nrm(lk[2], (4, D_MODEL, D_MODEL)),
            cb=nrm(lk[3], (4, D_MODEL)),
            w1=nrm(lk[4], (D_MODEL, D_FF)),
            b1=nrm(lk[5], (1, D_FF)),
            w2=nrm(lk[6], (D_FF, D_MODEL)),
            b2=nrm(lk[7], (1, D_MODEL)),
        )
        params["layers"].append(layer)
    return params


def pack_params(params):
    """Stack per-layer weights on a leading layer axis and fuse K/V/Q projections."""
    def stack(f):
        return jnp.stack([f(lp) for lp in params["layers"]])

    return dict(
        ln_g=stack(lambda p: p["ln_g"]),                                  # (L, 3, D)
        ln_b=stack(lambda p: p["ln_b"]),
        s_wkvq=stack(lambda p: jnp.concatenate(
            [p["sW"][0], p["sW"][1], p["sW"][2]], axis=1)),               # (L, D, 3D)
        s_bkvq=stack(lambda p: jnp.concatenate(
            [p["sb"][0], p["sb"][1], p["sb"][2]])[None, :]),              # (L, 1, 3D)
        s_wo=stack(lambda p: p["sW"][3]),                                 # (L, D, D)
        s_bo=stack(lambda p: p["sb"][3][None, :]),                        # (L, 1, D)
        c_wkv=stack(lambda p: jnp.concatenate(
            [p["cW"][0], p["cW"][1]], axis=1)),                           # (L, D, 2D)
        c_bkv=stack(lambda p: jnp.concatenate(
            [p["cb"][0], p["cb"][1]])[None, :]),                          # (L, 1, 2D)
        c_wq=stack(lambda p: p["cW"][2]),
        c_bq=stack(lambda p: p["cb"][2][None, :]),
        c_wo=stack(lambda p: p["cW"][3]),
        c_bo=stack(lambda p: p["cb"][3][None, :]),
        w1=stack(lambda p: p["w1"]), b1=stack(lambda p: p["b1"]),         # (L, D, F), (L, 1, F)
        w2=stack(lambda p: p["w2"]), b2=stack(lambda p: p["b2"]),         # (L, F, D), (L, 1, D)
    )


@jax.jit
def self_att_decoder_forward(trg_seq, src_seq, enc_output, params):
    packed = pack_params(params)
    x = embed_trg(trg_seq, params["emb"])
    tpad = (trg_seq == PAD).astype(jnp.float32)[:, None, :]   # (B, 1, Lt)
    spad = (src_seq == PAD).astype(jnp.float32)[:, None, :]   # (B, 1, Ls)
    qmask = (trg_seq != PAD).astype(jnp.float32)[:, :, None]  # (B, Lt, 1)
    # decoder_normalize_before=False (default) -> no final LayerNorm
    return run_decoder_stack(x, enc_output, tpad, spad, qmask, packed)


# ----------------------------------------------------------------------------
# Pure-JAX reference (original masked_fill semantics) for a sanity check
# ----------------------------------------------------------------------------
def build_masks(trg_seq, src_seq):
    B, Lt = trg_seq.shape
    Ls = src_seq.shape[1]
    trg_pad = (trg_seq == PAD)
    src_pad = (src_seq == PAD)
    future = jnp.triu(jnp.ones((Lt, Lt), jnp.int32), k=1)
    self_mask = ((trg_pad[:, None, :].astype(jnp.int32) + future[None]) > 0
                 ).astype(jnp.float32)
    src_mask = jnp.broadcast_to(src_pad[:, None, :], (B, Lt, Ls)).astype(jnp.float32)
    qmask = (~trg_pad).astype(jnp.float32)[:, :, None]
    return self_mask, src_mask, qmask


def _ref_ln(v, g, b):
    mu = jnp.mean(v, -1, keepdims=True)
    var = jnp.mean((v - mu) ** 2, -1, keepdims=True)
    return (v - mu) / jnp.sqrt(var + LN_EPS) * g + b


def _ref_mha(key_in, val_in, query_in, W, b, mask, qmask):
    dk = D_MODEL // N_HEAD
    k = key_in @ W[0] + b[0]
    v = val_in @ W[1] + b[1]
    q = query_in @ W[2] + b[2]
    B, Lq, _ = q.shape
    Lk = k.shape[1]
    qh = q.reshape(B, Lq, N_HEAD, dk).transpose(0, 2, 1, 3)
    kh = k.reshape(B, Lk, N_HEAD, dk).transpose(0, 2, 1, 3)
    vh = v.reshape(B, Lk, N_HEAD, dk).transpose(0, 2, 1, 3)
    s = jnp.einsum("bhqd,bhkd->bhqk", qh, kh) / math.sqrt(dk)
    s = jnp.where(mask[:, None] > 0.0, NEG_INF, s)
    a = jax.nn.softmax(s, axis=-1)
    ctx = jnp.einsum("bhqk,bhkd->bhqd", a, vh).transpose(0, 2, 1, 3).reshape(B, Lq, -1)
    out = (ctx @ W[3] + b[3]) * qmask
    return out, a


def ref_forward(trg_seq, src_seq, enc_output, params):
    smask, cmask, qmask = build_masks(trg_seq, src_seq)
    x = embed_trg(trg_seq, params["emb"])
    sa_a = ca_a = None
    for p in params["layers"]:
        g, bb = p["ln_g"], p["ln_b"]
        r = x
        sa, sa_a = _ref_mha(x, x, x, p["sW"], p["sb"], smask, qmask)
        x = _ref_ln(r + sa, g[0], bb[0])
        r = x
        ca, ca_a = _ref_mha(enc_output, enc_output, x, p["cW"], p["cb"], cmask, qmask)
        x = _ref_ln(r + ca, g[1], bb[1])
        r = x
        ff = jnp.maximum(x @ p["w1"] + p["b1"], 0.0) @ p["w2"] + p["b2"]
        x = _ref_ln(r + ff, g[2], bb[2])
    return x, sa_a, ca_a


# ----------------------------------------------------------------------------
if __name__ == "__main__":
    key = jax.random.PRNGKey(0)
    k_par, k_trg, k_src, k_enc = jax.random.split(key, 4)

    B, Lt, Ls = 2, 8, 10
    params = init_params(k_par)

    trg_seq = jax.random.randint(k_trg, (B, Lt), 1, VOCAB, dtype=jnp.int32)
    src_seq = jax.random.randint(k_src, (B, Ls), 1, VOCAB, dtype=jnp.int32)
    # a couple of PAD tokens at the tail to exercise masking
    trg_seq = trg_seq.at[1, -2:].set(PAD)
    src_seq = src_seq.at[0, -3:].set(PAD)
    enc_output = jax.random.normal(k_enc, (B, Ls, D_MODEL), dtype=jnp.float32)

    out, self_attns, src_attns = self_att_decoder_forward(trg_seq, src_seq,
                                                          enc_output, params)
    jax.block_until_ready(out)

    # sanity check against the pure-JAX reference
    r_out, r_sa, r_ca = ref_forward(trg_seq, src_seq, enc_output, params)
    assert out.shape == (B, Lt, D_MODEL)
    assert self_attns.shape == (B, N_HEAD, Lt, Lt)
    assert src_attns.shape == (B, N_HEAD, Lt, Ls)
    assert jnp.allclose(out, r_out, atol=2e-4, rtol=1e-3)
    assert jnp.allclose(self_attns, r_sa, atol=2e-4, rtol=1e-3)
    assert jnp.allclose(src_attns, r_ca, atol=2e-4, rtol=1e-3)

    print("KERNEL_OK")
</pallas_src>

<mosaic_0001>
module attributes {stable_mosaic.version = 11 : i64} {
  func.func @decoder_stack_kernel(%arg0: i32, %arg1: memref<1x8x32xf32, #tpu.memory_space<vmem>>, %arg2: memref<1x10x32xf32, #tpu.memory_space<vmem>>, %arg3: memref<1x1x8xf32, #tpu.memory_space<vmem>>, %arg4: memref<1x1x10xf32, #tpu.memory_space<vmem>>, %arg5: memref<1x8x1xf32, #tpu.memory_space<vmem>>, %arg6: memref<2x3x32xf32, #tpu.memory_space<vmem>>, %arg7: memref<2x3x32xf32, #tpu.memory_space<vmem>>, %arg8: memref<2x32x96xf32, #tpu.memory_space<vmem>>, %arg9: memref<2x1x96xf32, #tpu.memory_space<vmem>>, %arg10: memref<2x32x32xf32, #tpu.memory_space<vmem>>, %arg11: memref<2x1x32xf32, #tpu.memory_space<vmem>>, %arg12: memref<2x32x64xf32, #tpu.memory_space<vmem>>, %arg13: memref<2x1x64xf32, #tpu.memory_space<vmem>>, %arg14: memref<2x32x32xf32, #tpu.memory_space<vmem>>, %arg15: memref<2x1x32xf32, #tpu.memory_space<vmem>>, %arg16: memref<2x32x32xf32, #tpu.memory_space<vmem>>, %arg17: memref<2x1x32xf32, #tpu.memory_space<vmem>>, %arg18: memref<2x32x64xf32, #tpu.memory_space<vmem>>, %arg19: memref<2x1x64xf32, #tpu.memory_space<vmem>>, %arg20: memref<2x64x32xf32, #tpu.memory_space<vmem>>, %arg21: memref<2x1x32xf32, #tpu.memory_space<vmem>>, %arg22: memref<1x8x32xf32, #tpu.memory_space<vmem>>, %arg23: memref<1x8x32xf32, #tpu.memory_space<vmem>>, %arg24: memref<1x8x40xf32, #tpu.memory_space<vmem>>) attributes {dimension_semantics = [#tpu.dimension_semantics<parallel>], iteration_bounds = array<i64: 2>, scalar_prefetch = 0 : i64, scratch_operands = 0 : i64, tpu.core_type = #tpu.core_type<tc>, window_params = [{transform_indices = @transform_0, window_bounds = array<i64: 1, 8, 32>}, {transform_indices = @transform_1, window_bounds = array<i64: 1, 10, 32>}, {transform_indices = @transform_2, window_bounds = array<i64: 1, 1, 8>}, {transform_indices = @transform_3, window_bounds = array<i64: 1, 1, 10>}, {transform_indices = @transform_4, window_bounds = array<i64: 1, 8, 1>}, {pipeline_mode = #tpu.pipeline_mode<synchronous>, transform_indices = @transform_5, window_bounds = array<i64: 2, 3, 32>}, {pipeline_mode = #tpu.pipeline_mode<synchronous>, transform_indices = @transform_6, window_bounds = array<i64: 2, 3, 32>}, {pipeline_mode = #tpu.pipeline_mode<synchronous>, transform_indices = @transform_7, window_bounds = array<i64: 2, 32, 96>}, {pipeline_mode = #tpu.pipeline_mode<synchronous>, transform_indices = @transform_8, window_bounds = array<i64: 2, 1, 96>}, {pipeline_mode = #tpu.pipeline_mode<synchronous>, transform_indices = @transform_9, window_bounds = array<i64: 2, 32, 32>}, {pipeline_mode = #tpu.pipeline_mode<synchronous>, transform_indices = @transform_10, window_bounds = array<i64: 2, 1, 32>}, {pipeline_mode = #tpu.pipeline_mode<synchronous>, transform_indices = @transform_11, window_bounds = array<i64: 2, 32, 64>}, {pipeline_mode = #tpu.pipeline_mode<synchronous>, transform_indices = @transform_12, window_bounds = array<i64: 2, 1, 64>}, {pipeline_mode = #tpu.pipeline_mode<synchronous>, transform_indices = @transform_13, window_bounds = array<i64: 2, 32, 32>}, {pipeline_mode = #tpu.pipeline_mode<synchronous>, transform_indices = @transform_14, window_bounds = array<i64: 2, 1, 32>}, {pipeline_mode = #tpu.pipeline_mode<synchronous>, transform_indices = @transform_15, window_bounds = array<i64: 2, 32, 32>}, {pipeline_mode = #tpu.pipeline_mode<synchronous>, transform_indices = @transform_16, window_bounds = array<i64: 2, 1, 32>}, {pipeline_mode = #tpu.pipeline_mode<synchronous>, transform_indices = @transform_17, window_bounds = array<i64: 2, 32, 64>}, {pipeline_mode = #tpu.pipeline_mode<synchronous>, transform_indices = @transform_18, window_bounds = array<i64: 2, 1, 64>}, {pipeline_mode = #tpu.pipeline_mode<synchronous>, transform_indices = @transform_19, window_bounds = array<i64: 2, 64, 32>}, {pipeline_mode = #tpu.pipeline_mode<synchronous>, transform_indices = @transform_20, window_bounds = array<i64: 2, 1, 32>}, {transform_indices = @transform_21, window_bounds = array<i64: 1, 8, 32>}, {transform_indices = @transform_22, window_bounds = array<i64: 1, 8, 32>}, {transform_indices = @transform_23, window_bounds = array<i64: 1, 8, 40>}]} {
    %c0 = arith.constant 0 : index
    %c0_0 = arith.constant 0 : index
    %c0_1 = arith.constant 0 : index
    %0 = vector.load %arg1[%c0, %c0_0, %c0_1] : memref<1x8x32xf32, #tpu.memory_space<vmem>>, vector<1x8x32xf32>
    %1 = vector.shape_cast %0 : vector<1x8x32xf32> to vector<8x32xf32>
    %c0_2 = arith.constant 0 : index
    %c0_3 = arith.constant 0 : index
    %c0_4 = arith.constant 0 : index
    %2 = vector.load %arg2[%c0_2, %c0_3, %c0_4] : memref<1x10x32xf32, #tpu.memory_space<vmem>>, vector<1x10x32xf32>
    %3 = vector.shape_cast %2 : vector<1x10x32xf32> to vector<10x32xf32>
    %c0_5 = arith.constant 0 : index
    %c0_6 = arith.constant 0 : index
    %c0_7 = arith.constant 0 : index
    %4 = vector.load %arg3[%c0_5, %c0_6, %c0_7] : memref<1x1x8xf32, #tpu.memory_space<vmem>>, vector<1x1x8xf32>
    %5 = vector.shape_cast %4 : vector<1x1x8xf32> to vector<1x8xf32>
    %c0_8 = arith.constant 0 : index
    %c0_9 = arith.constant 0 : index
    %c0_10 = arith.constant 0 : index
    %6 = vector.load %arg4[%c0_8, %c0_9, %c0_10] : memref<1x1x10xf32, #tpu.memory_space<vmem>>, vector<1x1x10xf32>
    %7 = vector.shape_cast %6 : vector<1x1x10xf32> to vector<1x10xf32>
    %c0_11 = arith.constant 0 : index
    %c0_12 = arith.constant 0 : index
    %c0_13 = arith.constant 0 : index
    %8 = vector.load %arg5[%c0_11, %c0_12, %c0_13] : memref<1x8x1xf32, #tpu.memory_space<vmem>>, vector<1x8x1xf32>
    %9 = vector.shape_cast %8 : vector<1x8x1xf32> to vector<8x1xf32>
    %10 = tpu.iota {dimensions = array<i32: 0>} : vector<8x8xi32>
    %11 = tpu.iota {dimensions = array<i32: 1>} : vector<8x8xi32>
    %12 = arith.cmpi sgt, %11, %10 : vector<8x8xi32>
    %cst = arith.constant 0.000000e+00 : f32
    %13 = vector.broadcast %cst : f32 to vector<1x8xf32>
    %14 = arith.cmpf ogt, %5, %13 : vector<1x8xf32>
    %15 = vector.broadcast %14 : vector<1x8xi1> to vector<8x8xi1>
    %16 = arith.ori %12, %15 : vector<8x8xi1>
    %cst_14 = arith.constant -1.000000e+09 : f32
    %cst_15 = arith.constant 0.000000e+00 : f32
    %17 = vector.broadcast %cst_14 : f32 to vector<8x8xf32>
    %18 = vector.broadcast %cst_15 : f32 to vector<8x8xf32>
    %19 = arith.select %16, %17, %18 : vector<8x8xi1>, vector<8x8xf32>
    %cst_16 = arith.constant 0.000000e+00 : f32
    %20 = vector.broadcast %cst_16 : f32 to vector<1x10xf32>
    %21 = arith.cmpf ogt, %7, %20 : vector<1x10xf32>
    %cst_17 = arith.constant -1.000000e+09 : f32
    %cst_18 = arith.constant 0.000000e+00 : f32
    %22 = vector.broadcast %cst_17 : f32 to vector<1x10xf32>
    %23 = vector.broadcast %cst_18 : f32 to vector<1x10xf32>
    %24 = arith.select %21, %22, %23 : vector<1x10xi1>, vector<1x10xf32>
    %c0_19 = arith.constant 0 : index
    %c0_20 = arith.constant 0 : index
    %c0_21 = arith.constant 0 : index
    %25 = vector.load %arg6[%c0_19, %c0_20, %c0_21] : memref<2x3x32xf32, #tpu.memory_space<vmem>>, vector<1x3x32xf32>
    %26 = vector.shape_cast %25 : vector<1x3x32xf32> to vector<3x32xf32>
    %c0_22 = arith.constant 0 : index
    %c0_23 = arith.constant 0 : index
    %c0_24 = arith.constant 0 : index
    %27 = vector.load %arg7[%c0_22, %c0_23, %c0_24] : memref<2x3x32xf32, #tpu.memory_space<vmem>>, vector<1x3x32xf32>
    %28 = vector.shape_cast %27 : vector<1x3x32xf32> to vector<3x32xf32>
    %c0_25 = arith.constant 0 : index
    %c0_26 = arith.constant 0 : index
    %c0_27 = arith.constant 0 : index
    %29 = vector.load %arg8[%c0_25, %c0_26, %c0_27] : memref<2x32x96xf32, #tpu.memory_space<vmem>>, vector<1x32x96xf32>
    %30 = vector.shape_cast %29 : vector<1x32x96xf32> to vector<32x96xf32>
    %cst_28 = arith.constant dense<0.000000e+00> : vector<8x96xf32>
    %31 = tpu.matmul %1, %30, %cst_28 {dimension_numbers = #tpu.dot_dimension_numbers<[1], [0], [0], [1], [0, 0, 1, 1], [], []>} : vector<8x32xf32>, vector<32x96xf32>, vector<8x96xf32> -> vector<8x96xf32>
    %c0_29 = arith.constant 0 : index
    %c0_30 = arith.constant 0 : index
    %c0_31 = arith.constant 0 : index
    %32 = vector.load %arg9[%c0_29, %c0_30, %c0_31] : memref<2x1x96xf32, #tpu.memory_space<vmem>>, vector<1x1x96xf32>
    %33 = vector.shape_cast %32 : vector<1x1x96xf32> to vector<1x96xf32>
    %34 = vector.broadcast %33 : vector<1x96xf32> to vector<8x96xf32>
    %35 = arith.addf %31, %34 : vector<8x96xf32>
    %36 = vector.extract_strided_slice %35 {offsets = [0, 0], sizes = [8, 32], strides = [1, 1]} : vector<8x96xf32> to vector<8x32xf32>
    %37 = vector.extract_strided_slice %35 {offsets = [0, 32], sizes = [8, 32], strides = [1, 1]} : vector<8x96xf32> to vector<8x32xf32>
    %38 = vector.extract_strided_slice %35 {offsets = [0, 64], sizes = [8, 32], strides = [1, 1]} : vector<8x96xf32> to vector<8x32xf32>
    %c0_32 = arith.constant 0 : index
    %c0_33 = arith.constant 0 : index
    %c0_34 = arith.constant 0 : index
    %39 = vector.load %arg10[%c0_32, %c0_33, %c0_34] : memref<2x32x32xf32, #tpu.memory_space<vmem>>, vector<1x32x32xf32>
    %40 = vector.shape_cast %39 : vector<1x32x32xf32> to vector<32x32xf32>
    %c0_35 = arith.constant 0 : index
    %c0_36 = arith.constant 0 : index
    %c0_37 = arith.constant 0 : index
    %41 = vector.load %arg11[%c0_35, %c0_36, %c0_37] : memref<2x1x32xf32, #tpu.memory_space<vmem>>, vector<1x1x32xf32>
    %42 = vector.shape_cast %41 : vector<1x1x32xf32> to vector<1x32xf32>
    %43 = vector.extract_strided_slice %38 {offsets = [0, 0], sizes = [8, 8], strides = [1, 1]} : vector<8x32xf32> to vector<8x8xf32>
    %44 = vector.extract_strided_slice %36 {offsets = [0, 0], sizes = [8, 8], strides = [1, 1]} : vector<8x32xf32> to vector<8x8xf32>
    %45 = vector.extract_strided_slice %37 {offsets = [0, 0], sizes = [8, 8], strides = [1, 1]} : vector<8x32xf32> to vector<8x8xf32>
    %cst_38 = arith.constant dense<0.000000e+00> : vector<8x8xf32>
    %46 = tpu.matmul %43, %44, %cst_38 {dimension_numbers = #tpu.dot_dimension_numbers<[1], [1], [0], [0], [0, 0, 1, 0], [], []>} : vector<8x8xf32>, vector<8x8xf32>, vector<8x8xf32> -> vector<8x8xf32>
    %cst_39 = arith.constant 0.353553385 : f32
    %47 = vector.broadcast %cst_39 : f32 to vector<8x8xf32>
    %48 = arith.mulf %46, %47 : vector<8x8xf32>
    %49 = arith.addf %48, %19 : vector<8x8xf32>
    %cst_40 = arith.constant dense<0xFF800000> : vector<8xf32>
    %50 = vector.multi_reduction <maximumf>, %49, %cst_40 [1] : vector<8x8xf32> to vector<8xf32>
    %51 = vector.shape_cast %50 : vector<8xf32> to vector<8x1xf32>
    %52 = vector.broadcast %51 : vector<8x1xf32> to vector<8x8xf32>
    %53 = arith.subf %49, %52 : vector<8x8xf32>
    %54 = math.exp %53 : vector<8x8xf32>
    %cst_41 = arith.constant dense<0.000000e+00> : vector<8xf32>
    %55 = vector.multi_reduction <add>, %54, %cst_41 [1] : vector<8x8xf32> to vector<8xf32>
    %56 = vector.shape_cast %55 : vector<8xf32> to vector<8x1xf32>
    %57 = vector.broadcast %56 : vector<8x1xf32> to vector<8x8xf32>
    %58 = arith.divf %54, %57 : vector<8x8xf32>
    %cst_42 = arith.constant dense<0.000000e+00> : vector<8x8xf32>
    %59 = tpu.matmul %58, %45, %cst_42 {dimension_numbers = #tpu.dot_dimension_numbers<[1], [0], [0], [1], [0, 0, 1, 1], [], []>} : vector<8x8xf32>, vector<8x8xf32>, vector<8x8xf32> -> vector<8x8xf32>
    %60 = vector.extract_strided_slice %38 {offsets = [0, 8], sizes = [8, 8], strides = [1, 1]} : vector<8x32xf32> to vector<8x8xf32>
    %61 = vector.extract_strided_slice %36 {offsets = [0, 8], sizes = [8, 8], strides = [1, 1]} : vector<8x32xf32> to vector<8x8xf32>
    %62 = vector.extract_strided_slice %37 {offsets = [0, 8], sizes = [8, 8], strides = [1, 1]} : vector<8x32xf32> to vector<8x8xf32>
    %cst_43 = arith.constant dense<0.000000e+00> : vector<8x8xf32>
    %63 = tpu.matmul %60, %61, %cst_43 {dimension_numbers = #tpu.dot_dimension_numbers<[1], [1], [0], [0], [0, 0, 1, 0], [], []>} : vector<8x8xf32>, vector<8x8xf32>, vector<8x8xf32> -> vector<8x8xf32>
    %cst_44 = arith.constant 0.353553385 : f32
    %64 = vector.broadcast %cst_44 : f32 to vector<8x8xf32>
    %65 = arith.mulf %63, %64 : vector<8x8xf32>
    %66 = arith.addf %65, %19 : vector<8x8xf32>
    %cst_45 = arith.constant dense<0xFF800000> : vector<8xf32>
    %67 = vector.multi_reduction <maximumf>, %66, %cst_45 [1] : vector<8x8xf32> to vector<8xf32>
    %68 = vector.shape_cast %67 : vector<8xf32> to vector<8x1xf32>
    %69 = vector.broadcast %68 : vector<8x1xf32> to vector<8x8xf32>
    %70 = arith.subf %66, %69 : vector<8x8xf32>
    %71 = math.exp %70 : vector<8x8xf32>
    %cst_46 = arith.constant dense<0.000000e+00> : vector<8xf32>
    %72 = vector.multi_reduction <add>, %71, %cst_46 [1] : vector<8x8xf32> to vector<8xf32>
    %73 = vector.shape_cast %72 : vector<8xf32> to vector<8x1xf32>
    %74 = vector.broadcast %73 : vector<8x1xf32> to vector<8x8xf32>
    %75 = arith.divf %71, %74 : vector<8x8xf32>
    %cst_47 = arith.constant dense<0.000000e+00> : vector<8x8xf32>
    %76 = tpu.matmul %75, %62, %cst_47 {dimension_numbers = #tpu.dot_dimension_numbers<[1], [0], [0], [1], [0, 0, 1, 1], [], []>} : vector<8x8xf32>, vector<8x8xf32>, vector<8x8xf32> -> vector<8x8xf32>
    %77 = vector.extract_strided_slice %38 {offsets = [0, 16], sizes = [8, 8], strides = [1, 1]} : vector<8x32xf32> to vector<8x8xf32>
    %78 = vector.extract_strided_slice %36 {offsets = [0, 16], sizes = [8, 8], strides = [1, 1]} : vector<8x32xf32> to vector<8x8xf32>
    %79 = vector.extract_strided_slice %37 {offsets = [0, 16], sizes = [8, 8], strides = [1, 1]} : vector<8x32xf32> to vector<8x8xf32>
    %cst_48 = arith.constant dense<0.000000e+00> : vector<8x8xf32>
    %80 = tpu.matmul %77, %78, %cst_48 {dimension_numbers = #tpu.dot_dimension_numbers<[1], [1], [0], [0], [0, 0, 1, 0], [], []>} : vector<8x8xf32>, vector<8x8xf32>, vector<8x8xf32> -> vector<8x8xf32>
    %cst_49 = arith.constant 0.353553385 : f32
    %81 = vector.broadcast %cst_49 : f32 to vector<8x8xf32>
    %82 = arith.mulf %80, %81 : vector<8x8xf32>
    %83 = arith.addf %82, %19 : vector<8x8xf32>
    %cst_50 = arith.constant dense<0xFF800000> : vector<8xf32>
    %84 = vector.multi_reduction <maximumf>, %83, %cst_50 [1] : vector<8x8xf32> to vector<8xf32>
    %85 = vector.shape_cast %84 : vector<8xf32> to vector<8x1xf32>
    %86 = vector.broadcast %85 : vector<8x1xf32> to vector<8x8xf32>
    %87 = arith.subf %83, %86 : vector<8x8xf32>
    %88 = math.exp %87 : vector<8x8xf32>
    %cst_51 = arith.constant dense<0.000000e+00> : vector<8xf32>
    %89 = vector.multi_reduction <add>, %88, %cst_51 [1] : vector<8x8xf32> to vector<8xf32>
    %90 = vector.shape_cast %89 : vector<8xf32> to vector<8x1xf32>
    %91 = vector.broadcast %90 : vector<8x1xf32> to vector<8x8xf32>
    %92 = arith.divf %88, %91 : vector<8x8xf32>
    %cst_52 = arith.constant dense<0.000000e+00> : vector<8x8xf32>
    %93 = tpu.matmul %92, %79, %cst_52 {dimension_numbers = #tpu.dot_dimension_numbers<[1], [0], [0], [1], [0, 0, 1, 1], [], []>} : vector<8x8xf32>, vector<8x8xf32>, vector<8x8xf32> -> vector<8x8xf32>
    %94 = vector.extract_strided_slice %38 {offsets = [0, 24], sizes = [8, 8], strides = [1, 1]} : vector<8x32xf32> to vector<8x8xf32>
    %95 = vector.extract_strided_slice %36 {offsets = [0, 24], sizes = [8, 8], strides = [1, 1]} : vector<8x32xf32> to vector<8x8xf32>
    %96 = vector.extract_strided_slice %37 {offsets = [0, 24], sizes = [8, 8], strides = [1, 1]} : vector<8x32xf32> to vector<8x8xf32>
    %cst_53 = arith.constant dense<0.000000e+00> : vector<8x8xf32>
    %97 = tpu.matmul %94, %95, %cst_53 {dimension_numbers = #tpu.dot_dimension_numbers<[1], [1], [0], [0], [0, 0, 1, 0], [], []>} : vector<8x8xf32>, vector<8x8xf32>, vector<8x8xf32> -> vector<8x8xf32>
    %cst_54 = arith.constant 0.353553385 : f32
    %98 = vector.broadcast %cst_54 : f32 to vector<8x8xf32>
    %99 = arith.mulf %97, %98 : vector<8x8xf32>
    %100 = arith.addf %99, %19 : vector<8x8xf32>
    %cst_55 = arith.constant dense<0xFF800000> : vector<8xf32>
    %101 = vector.multi_reduction <maximumf>, %100, %cst_55 [1] : vector<8x8xf32> to vector<8xf32>
    %102 = vector.shape_cast %101 : vector<8xf32> to vector<8x1xf32>
    %103 = vector.broadcast %102 : vector<8x1xf32> to vector<8x8xf32>
    %104 = arith.subf %100, %103 : vector<8x8xf32>
    %105 = math.exp %104 : vector<8x8xf32>
    %cst_56 = arith.constant dense<0.000000e+00> : vector<8xf32>
    %106 = vector.multi_reduction <add>, %105, %cst_56 [1] : vector<8x8xf32> to vector<8xf32>
    %107 = vector.shape_cast %106 : vector<8xf32> to vector<8x1xf32>
    %108 = vector.broadcast %107 : vector<8x1xf32> to vector<8x8xf32>
    %109 = arith.divf %105, %108 : vector<8x8xf32>
    %cst_57 = arith.constant dense<0.000000e+00> : vector<8x8xf32>
    %110 = tpu.matmul %109, %96, %cst_57 {dimension_numbers = #tpu.dot_dimension_numbers<[1], [0], [0], [1], [0, 0, 1, 1], [], []>} : vector<8x8xf32>, vector<8x8xf32>, vector<8x8xf32> -> vector<8x8xf32>
    %111 = tpu.concatenate %59, %76, %93, %110 in 1 : vector<8x8xf32>, vector<8x8xf32>, vector<8x8xf32>, vector<8x8xf32> -> vector<8x32xf32>
    %cst_58 = arith.constant dense<0.000000e+00> : vector<8x32xf32>
    %112 = tpu.matmul %111, %40, %cst_58 {dimension_numbers = #tpu.dot_dimension_numbers<[1], [0], [0], [1], [0, 0, 1, 1], [], []>} : vector<8x32xf32>, vector<32x32xf32>, vector<8x32xf32> -> vector<8x32xf32>
    %113 = vector.broadcast %42 : vector<1x32xf32> to vector<8x32xf32>
    %114 = arith.addf %112, %113 : vector<8x32xf32>
    %115 = vector.broadcast %9 : vector<8x1xf32> to vector<8x32xf32>
    %116 = arith.mulf %114, %115 : vector<8x32xf32>
    %117 = arith.addf %1, %116 : vector<8x32xf32>
    %118 = vector.extract_strided_slice %26 {offsets = [0, 0], sizes = [1, 32], strides = [1, 1]} : vector<3x32xf32> to vector<1x32xf32>
    %119 = vector.extract_strided_slice %28 {offsets = [0, 0], sizes = [1, 32], strides = [1, 1]} : vector<3x32xf32> to vector<1x32xf32>
    %cst_59 = arith.constant dense<0.000000e+00> : vector<8xf32>
    %120 = vector.multi_reduction <add>, %117, %cst_59 [1] : vector<8x32xf32> to vector<8xf32>
    %121 = vector.shape_cast %120 : vector<8xf32> to vector<8x1xf32>
    %cst_60 = arith.constant 3.200000e+01 : f32
    %122 = vector.broadcast %cst_60 : f32 to vector<8x1xf32>
    %123 = arith.divf %121, %122 : vector<8x1xf32>
    %124 = vector.broadcast %123 : vector<8x1xf32> to vector<8x32xf32>
    %125 = arith.subf %117, %124 : vector<8x32xf32>
    %126 = arith.mulf %125, %125 : vector<8x32xf32>
    %cst_61 = arith.constant dense<0.000000e+00> : vector<8xf32>
    %127 = vector.multi_reduction <add>, %126, %cst_61 [1] : vector<8x32xf32> to vector<8xf32>
    %128 = vector.shape_cast %127 : vector<8xf32> to vector<8x1xf32>
    %cst_62 = arith.constant 3.200000e+01 : f32
    %129 = vector.broadcast %cst_62 : f32 to vector<8x1xf32>
    %130 = arith.divf %128, %129 : vector<8x1xf32>
    %131 = vector.broadcast %123 : vector<8x1xf32> to vector<8x32xf32>
    %132 = arith.subf %117, %131 : vector<8x32xf32>
    %cst_63 = arith.constant 9.99999974E-6 : f32
    %133 = vector.broadcast %cst_63 : f32 to vector<8x1xf32>
    %134 = arith.addf %130, %133 : vector<8x1xf32>
    %135 = math.rsqrt %134 : vector<8x1xf32>
    %136 = vector.broadcast %135 : vector<8x1xf32> to vector<8x32xf32>
    %137 = arith.mulf %132, %136 : vector<8x32xf32>
    %138 = vector.broadcast %118 : vector<1x32xf32> to vector<8x32xf32>
    %139 = arith.mulf %137, %138 : vector<8x32xf32>
    %140 = vector.broadcast %119 : vector<1x32xf32> to vector<8x32xf32>
    %141 = arith.addf %139, %140 : vector<8x32xf32>
    %c0_64 = arith.constant 0 : index
    %c0_65 = arith.constant 0 : index
    %c0_66 = arith.constant 0 : index
    %142 = vector.load %arg12[%c0_64, %c0_65, %c0_66] : memref<2x32x64xf32, #tpu.memory_space<vmem>>, vector<1x32x64xf32>
    %143 = vector.shape_cast %142 : vector<1x32x64xf32> to vector<32x64xf32>
    %cst_67 = arith.constant dense<0.000000e+00> : vector<10x64xf32>
    %144 = tpu.matmul %3, %143, %cst_67 {dimension_numbers = #tpu.dot_dimension_numbers<[1], [0], [0], [1], [0, 0, 1, 1], [], []>} : vector<10x32xf32>, vector<32x64xf32>, vector<10x64xf32> -> vector<10x64xf32>
    %c0_68 = arith.constant 0 : index
    %c0_69 = arith.constant 0 : index
    %c0_70 = arith.constant 0 : index
    %145 = vector.load %arg13[%c0_68, %c0_69, %c0_70] : memref<2x1x64xf32, #tpu.memory_space<vmem>>, vector<1x1x64xf32>
    %146 = vector.shape_cast %145 : vector<1x1x64xf32> to vector<1x64xf32>
    %147 = vector.broadcast %146 : vector<1x64xf32> to vector<10x64xf32>
    %148 = arith.addf %144, %147 : vector<10x64xf32>
    %149 = vector.extract_strided_slice %148 {offsets = [0, 0], sizes = [10, 32], strides = [1, 1]} : vector<10x64xf32> to vector<10x32xf32>
    %150 = vector.extract_strided_slice %148 {offsets = [0, 32], sizes = [10, 32], strides = [1, 1]} : vector<10x64xf32> to vector<10x32xf32>
    %c0_71 = arith.constant 0 : index
    %c0_72 = arith.constant 0 : index
    %c0_73 = arith.constant 0 : index
    %151 = vector.load %arg14[%c0_71, %c0_72, %c0_73] : memref<2x32x32xf32, #tpu.memory_space<vmem>>, vector<1x32x32xf32>
    %152 = vector.shape_cast %151 : vector<1x32x32xf32> to vector<32x32xf32>
    %cst_74 = arith.constant dense<0.000000e+00> : vector<8x32xf32>
    %153 = tpu.matmul %141, %152, %cst_74 {dimension_numbers = #tpu.dot_dimension_numbers<[1], [0], [0], [1], [0, 0, 1, 1], [], []>} : vector<8x32xf32>, vector<32x32xf32>, vector<8x32xf32> -> vector<8x32xf32>
    %c0_75 = arith.constant 0 : index
    %c0_76 = arith.constant 0 : index
    %c0_77 = arith.constant 0 : index
    %154 = vector.load %arg15[%c0_75, %c0_76, %c0_77] : memref<2x1x32xf32, #tpu.memory_space<vmem>>, vector<1x1x32xf32>
    %155 = vector.shape_cast %154 : vector<1x1x32xf32> to vector<1x32xf32>
    %156 = vector.broadcast %155 : vector<1x32xf32> to vector<8x32xf32>
    %157 = arith.addf %153, %156 : vector<8x32xf32>
    %c0_78 = arith.constant 0 : index
    %c0_79 = arith.constant 0 : index
    %c0_80 = arith.constant 0 : index
    %158 = vector.load %arg16[%c0_78, %c0_79, %c0_80] : memref<2x32x32xf32, #tpu.memory_space<vmem>>, vector<1x32x32xf32>
    %159 = vector.shape_cast %158 : vector<1x32x32xf32> to vector<32x32xf32>
    %c0_81 = arith.constant 0 : index
    %c0_82 = arith.constant 0 : index
    %c0_83 = arith.constant 0 : index
    %160 = vector.load %arg17[%c0_81, %c0_82, %c0_83] : memref<2x1x32xf32, #tpu.memory_space<vmem>>, vector<1x1x32xf32>
    %161 = vector.shape_cast %160 : vector<1x1x32xf32> to vector<1x32xf32>
    %162 = vector.extract_strided_slice %157 {offsets = [0, 0], sizes = [8, 8], strides = [1, 1]} : vector<8x32xf32> to vector<8x8xf32>
    %163 = vector.extract_strided_slice %149 {offsets = [0, 0], sizes = [10, 8], strides = [1, 1]} : vector<10x32xf32> to vector<10x8xf32>
    %164 = vector.extract_strided_slice %150 {offsets = [0, 0], sizes = [10, 8], strides = [1, 1]} : vector<10x32xf32> to vector<10x8xf32>
    %cst_84 = arith.constant dense<0.000000e+00> : vector<8x10xf32>
    %165 = tpu.matmul %162, %163, %cst_84 {dimension_numbers = #tpu.dot_dimension_numbers<[1], [1], [0], [0], [0, 0, 1, 0], [], []>} : vector<8x8xf32>, vector<10x8xf32>, vector<8x10xf32> -> vector<8x10xf32>
    %cst_85 = arith.constant 0.353553385 : f32
    %166 = vector.broadcast %cst_85 : f32 to vector<8x10xf32>
    %167 = arith.mulf %165, %166 : vector<8x10xf32>
    %168 = vector.broadcast %24 : vector<1x10xf32> to vector<8x10xf32>
    %169 = arith.addf %167, %168 : vector<8x10xf32>
    %cst_86 = arith.constant dense<0xFF800000> : vector<8xf32>
    %170 = vector.multi_reduction <maximumf>, %169, %cst_86 [1] : vector<8x10xf32> to vector<8xf32>
    %171 = vector.shape_cast %170 : vector<8xf32> to vector<8x1xf32>
    %172 = vector.broadcast %171 : vector<8x1xf32> to vector<8x10xf32>
    %173 = arith.subf %169, %172 : vector<8x10xf32>
    %174 = math.exp %173 : vector<8x10xf32>
    %cst_87 = arith.constant dense<0.000000e+00> : vector<8xf32>
    %175 = vector.multi_reduction <add>, %174, %cst_87 [1] : vector<8x10xf32> to vector<8xf32>
    %176 = vector.shape_cast %175 : vector<8xf32> to vector<8x1xf32>
    %177 = vector.broadcast %176 : vector<8x1xf32> to vector<8x10xf32>
    %178 = arith.divf %174, %177 : vector<8x10xf32>
    %cst_88 = arith.constant dense<0.000000e+00> : vector<8x8xf32>
    %179 = tpu.matmul %178, %164, %cst_88 {dimension_numbers = #tpu.dot_dimension_numbers<[1], [0], [0], [1], [0, 0, 1, 1], [], []>} : vector<8x10xf32>, vector<10x8xf32>, vector<8x8xf32> -> vector<8x8xf32>
    %180 = vector.extract_strided_slice %157 {offsets = [0, 8], sizes = [8, 8], strides = [1, 1]} : vector<8x32xf32> to vector<8x8xf32>
    %181 = vector.extract_strided_slice %149 {offsets = [0, 8], sizes = [10, 8], strides = [1, 1]} : vector<10x32xf32> to vector<10x8xf32>
    %182 = vector.extract_strided_slice %150 {offsets = [0, 8], sizes = [10, 8], strides = [1, 1]} : vector<10x32xf32> to vector<10x8xf32>
    %cst_89 = arith.constant dense<0.000000e+00> : vector<8x10xf32>
    %183 = tpu.matmul %180, %181, %cst_89 {dimension_numbers = #tpu.dot_dimension_numbers<[1], [1], [0], [0], [0, 0, 1, 0], [], []>} : vector<8x8xf32>, vector<10x8xf32>, vector<8x10xf32> -> vector<8x10xf32>
    %cst_90 = arith.constant 0.353553385 : f32
    %184 = vector.broadcast %cst_90 : f32 to vector<8x10xf32>
    %185 = arith.mulf %183, %184 : vector<8x10xf32>
    %186 = vector.broadcast %24 : vector<1x10xf32> to vector<8x10xf32>
    %187 = arith.addf %185, %186 : vector<8x10xf32>
    %cst_91 = arith.constant dense<0xFF800000> : vector<8xf32>
    %188 = vector.multi_reduction <maximumf>, %187, %cst_91 [1] : vector<8x10xf32> to vector<8xf32>
    %189 = vector.shape_cast %188 : vector<8xf32> to vector<8x1xf32>
    %190 = vector.broadcast %189 : vector<8x1xf32> to vector<8x10xf32>
    %191 = arith.subf %187, %190 : vector<8x10xf32>
    %192 = math.exp %191 : vector<8x10xf32>
    %cst_92 = arith.constant dense<0.000000e+00> : vector<8xf32>
    %193 = vector.multi_reduction <add>, %192, %cst_92 [1] : vector<8x10xf32> to vector<8xf32>
    %194 = vector.shape_cast %193 : vector<8xf32> to vector<8x1xf32>
    %195 = vector.broadcast %194 : vector<8x1xf32> to vector<8x10xf32>
    %196 = arith.divf %192, %195 : vector<8x10xf32>
    %cst_93 = arith.constant dense<0.000000e+00> : vector<8x8xf32>
    %197 = tpu.matmul %196, %182, %cst_93 {dimension_numbers = #tpu.dot_dimension_numbers<[1], [0], [0], [1], [0, 0, 1, 1], [], []>} : vector<8x10xf32>, vector<10x8xf32>, vector<8x8xf32> -> vector<8x8xf32>
    %198 = vector.extract_strided_slice %157 {offsets = [0, 16], sizes = [8, 8], strides = [1, 1]} : vector<8x32xf32> to vector<8x8xf32>
    %199 = vector.extract_strided_slice %149 {offsets = [0, 16], sizes = [10, 8], strides = [1, 1]} : vector<10x32xf32> to vector<10x8xf32>
    %200 = vector.extract_strided_slice %150 {offsets = [0, 16], sizes = [10, 8], strides = [1, 1]} : vector<10x32xf32> to vector<10x8xf32>
    %cst_94 = arith.constant dense<0.000000e+00> : vector<8x10xf32>
    %201 = tpu.matmul %198, %199, %cst_94 {dimension_numbers = #tpu.dot_dimension_numbers<[1], [1], [0], [0], [0, 0, 1, 0], [], []>} : vector<8x8xf32>, vector<10x8xf32>, vector<8x10xf32> -> vector<8x10xf32>
    %cst_95 = arith.constant 0.353553385 : f32
    %202 = vector.broadcast %cst_95 : f32 to vector<8x10xf32>
    %203 = arith.mulf %201, %202 : vector<8x10xf32>
    %204 = vector.broadcast %24 : vector<1x10xf32> to vector<8x10xf32>
    %205 = arith.addf %203, %204 : vector<8x10xf32>
    %cst_96 = arith.constant dense<0xFF800000> : vector<8xf32>
    %206 = vector.multi_reduction <maximumf>, %205, %cst_96 [1] : vector<8x10xf32> to vector<8xf32>
    %207 = vector.shape_cast %206 : vector<8xf32> to vector<8x1xf32>
    %208 = vector.broadcast %207 : vector<8x1xf32> to vector<8x10xf32>
    %209 = arith.subf %205, %208 : vector<8x10xf32>
    %210 = math.exp %209 : vector<8x10xf32>
    %cst_97 = arith.constant dense<0.000000e+00> : vector<8xf32>
    %211 = vector.multi_reduction <add>, %210, %cst_97 [1] : vector<8x10xf32> to vector<8xf32>
    %212 = vector.shape_cast %211 : vector<8xf32> to vector<8x1xf32>
    %213 = vector.broadcast %212 : vector<8x1xf32> to vector<8x10xf32>
    %214 = arith.divf %210, %213 : vector<8x10xf32>
    %cst_98 = arith.constant dense<0.000000e+00> : vector<8x8xf32>
    %215 = tpu.matmul %214, %200, %cst_98 {dimension_numbers = #tpu.dot_dimension_numbers<[1], [0], [0], [1], [0, 0, 1, 1], [], []>} : vector<8x10xf32>, vector<10x8xf32>, vector<8x8xf32> -> vector<8x8xf32>
    %216 = vector.extract_strided_slice %157 {offsets = [0, 24], sizes = [8, 8], strides = [1, 1]} : vector<8x32xf32> to vector<8x8xf32>
    %217 = vector.extract_strided_slice %149 {offsets = [0, 24], sizes = [10, 8], strides = [1, 1]} : vector<10x32xf32> to vector<10x8xf32>
    %218 = vector.extract_strided_slice %150 {offsets = [0, 24], sizes = [10, 8], strides = [1, 1]} : vector<10x32xf32> to vector<10x8xf32>
    %cst_99 = arith.constant dense<0.000000e+00> : vector<8x10xf32>
    %219 = tpu.matmul %216, %217, %cst_99 {dimension_numbers = #tpu.dot_dimension_numbers<[1], [1], [0], [0], [0, 0, 1, 0], [], []>} : vector<8x8xf32>, vector<10x8xf32>, vector<8x10xf32> -> vector<8x10xf32>
    %cst_100 = arith.constant 0.353553385 : f32
    %220 = vector.broadcast %cst_100 : f32 to vector<8x10xf32>
    %221 = arith.mulf %219, %220 : vector<8x10xf32>
    %222 = vector.broadcast %24 : vector<1x10xf32> to vector<8x10xf32>
    %223 = arith.addf %221, %222 : vector<8x10xf32>
    %cst_101 = arith.constant dense<0xFF800000> : vector<8xf32>
    %224 = vector.multi_reduction <maximumf>, %223, %cst_101 [1] : vector<8x10xf32> to vector<8xf32>
    %225 = vector.shape_cast %224 : vector<8xf32> to vector<8x1xf32>
    %226 = vector.broadcast %225 : vector<8x1xf32> to vector<8x10xf32>
    %227 = arith.subf %223, %226 : vector<8x10xf32>
    %228 = math.exp %227 : vector<8x10xf32>
    %cst_102 = arith.constant dense<0.000000e+00> : vector<8xf32>
    %229 = vector.multi_reduction <add>, %228, %cst_102 [1] : vector<8x10xf32> to vector<8xf32>
    %230 = vector.shape_cast %229 : vector<8xf32> to vector<8x1xf32>
    %231 = vector.broadcast %230 : vector<8x1xf32> to vector<8x10xf32>
    %232 = arith.divf %228, %231 : vector<8x10xf32>
    %cst_103 = arith.constant dense<0.000000e+00> : vector<8x8xf32>
    %233 = tpu.matmul %232, %218, %cst_103 {dimension_numbers = #tpu.dot_dimension_numbers<[1], [0], [0], [1], [0, 0, 1, 1], [], []>} : vector<8x10xf32>, vector<10x8xf32>, vector<8x8xf32> -> vector<8x8xf32>
    %234 = tpu.concatenate %179, %197, %215, %233 in 1 : vector<8x8xf32>, vector<8x8xf32>, vector<8x8xf32>, vector<8x8xf32> -> vector<8x32xf32>
    %cst_104 = arith.constant dense<0.000000e+00> : vector<8x32xf32>
    %235 = tpu.matmul %234, %159, %cst_104 {dimension_numbers = #tpu.dot_dimension_numbers<[1], [0], [0], [1], [0, 0, 1, 1], [], []>} : vector<8x32xf32>, vector<32x32xf32>, vector<8x32xf32> -> vector<8x32xf32>
    %236 = vector.broadcast %161 : vector<1x32xf32> to vector<8x32xf32>
    %237 = arith.addf %235, %236 : vector<8x32xf32>
    %238 = vector.broadcast %9 : vector<8x1xf32> to vector<8x32xf32>
    %239 = arith.mulf %237, %238 : vector<8x32xf32>
    %240 = arith.addf %141, %239 : vector<8x32xf32>
    %241 = vector.extract_strided_slice %26 {offsets = [1, 0], sizes = [1, 32], strides = [1, 1]} : vector<3x32xf32> to vector<1x32xf32>
    %242 = vector.extract_strided_slice %28 {offsets = [1, 0], sizes = [1, 32], strides = [1, 1]} : vector<3x32xf32> to vector<1x32xf32>
    %cst_105 = arith.constant dense<0.000000e+00> : vector<8xf32>
    %243 = vector.multi_reduction <add>, %240, %cst_105 [1] : vector<8x32xf32> to vector<8xf32>
    %244 = vector.shape_cast %243 : vector<8xf32> to vector<8x1xf32>
    %cst_106 = arith.constant 3.200000e+01 : f32
    %245 = vector.broadcast %cst_106 : f32 to vector<8x1xf32>
    %246 = arith.divf %244, %245 : vector<8x1xf32>
    %247 = vector.broadcast %246 : vector<8x1xf32> to vector<8x32xf32>
    %248 = arith.subf %240, %247 : vector<8x32xf32>
    %249 = arith.mulf %248, %248 : vector<8x32xf32>
    %cst_107 = arith.constant dense<0.000000e+00> : vector<8xf32>
    %250 = vector.multi_reduction <add>, %249, %cst_107 [1] : vector<8x32xf32> to vector<8xf32>
    %251 = vector.shape_cast %250 : vector<8xf32> to vector<8x1xf32>
    %cst_108 = arith.constant 3.200000e+01 : f32
    %252 = vector.broadcast %cst_108 : f32 to vector<8x1xf32>
    %253 = arith.divf %251, %252 : vector<8x1xf32>
    %254 = vector.broadcast %246 : vector<8x1xf32> to vector<8x32xf32>
    %255 = arith.subf %240, %254 : vector<8x32xf32>
    %cst_109 = arith.constant 9.99999974E-6 : f32
    %256 = vector.broadcast %cst_109 : f32 to vector<8x1xf32>
    %257 = arith.addf %253, %256 : vector<8x1xf32>
    %258 = math.rsqrt %257 : vector<8x1xf32>
    %259 = vector.broadcast %258 : vector<8x1xf32> to vector<8x32xf32>
    %260 = arith.mulf %255, %259 : vector<8x32xf32>
    %261 = vector.broadcast %241 : vector<1x32xf32> to vector<8x32xf32>
    %262 = arith.mulf %260, %261 : vector<8x32xf32>
    %263 = vector.broadcast %242 : vector<1x32xf32> to vector<8x32xf32>
    %264 = arith.addf %262, %263 : vector<8x32xf32>
    %c0_110 = arith.constant 0 : index
    %c0_111 = arith.constant 0 : index
    %c0_112 = arith.constant 0 : index
    %265 = vector.load %arg18[%c0_110, %c0_111, %c0_112] : memref<2x32x64xf32, #tpu.memory_space<vmem>>, vector<1x32x64xf32>
    %266 = vector.shape_cast %265 : vector<1x32x64xf32> to vector<32x64xf32>
    %cst_113 = arith.constant dense<0.000000e+00> : vector<8x64xf32>
    %267 = tpu.matmul %264, %266, %cst_113 {dimension_numbers = #tpu.dot_dimension_numbers<[1], [0], [0], [1], [0, 0, 1, 1], [], []>} : vector<8x32xf32>, vector<32x64xf32>, vector<8x64xf32> -> vector<8x64xf32>
    %c0_114 = arith.constant 0 : index
    %c0_115 = arith.constant 0 : index
    %c0_116 = arith.constant 0 : index
    %268 = vector.load %arg19[%c0_114, %c0_115, %c0_116] : memref<2x1x64xf32, #tpu.memory_space<vmem>>, vector<1x1x64xf32>
    %269 = vector.shape_cast %268 : vector<1x1x64xf32> to vector<1x64xf32>
    %270 = vector.broadcast %269 : vector<1x64xf32> to vector<8x64xf32>
    %271 = arith.addf %267, %270 : vector<8x64xf32>
    %cst_117 = arith.constant 0.000000e+00 : f32
    %272 = vector.broadcast %cst_117 : f32 to vector<8x64xf32>
    %273 = arith.maximumf %271, %272 : vector<8x64xf32>
    %c0_118 = arith.constant 0 : index
    %c0_119 = arith.constant 0 : index
    %c0_120 = arith.constant 0 : index
    %274 = vector.load %arg20[%c0_118, %c0_119, %c0_120] : memref<2x64x32xf32, #tpu.memory_space<vmem>>, vector<1x64x32xf32>
    %275 = vector.shape_cast %274 : vector<1x64x32xf32> to vector<64x32xf32>
    %cst_121 = arith.constant dense<0.000000e+00> : vector<8x32xf32>
    %276 = tpu.matmul %273, %275, %cst_121 {dimension_numbers = #tpu.dot_dimension_numbers<[1], [0], [0], [1], [0, 0, 1, 1], [], []>} : vector<8x64xf32>, vector<64x32xf32>, vector<8x32xf32> -> vector<8x32xf32>
    %c0_122 = arith.constant 0 : index
    %c0_123 = arith.constant 0 : index
    %c0_124 = arith.constant 0 : index
    %277 = vector.load %arg21[%c0_122, %c0_123, %c0_124] : memref<2x1x32xf32, #tpu.memory_space<vmem>>, vector<1x1x32xf32>
    %278 = vector.shape_cast %277 : vector<1x1x32xf32> to vector<1x32xf32>
    %279 = vector.broadcast %278 : vector<1x32xf32> to vector<8x32xf32>
    %280 = arith.addf %276, %279 : vector<8x32xf32>
    %281 = arith.addf %264, %280 : vector<8x32xf32>
    %282 = vector.extract_strided_slice %26 {offsets = [2, 0], sizes = [1, 32], strides = [1, 1]} : vector<3x32xf32> to vector<1x32xf32>
    %283 = vector.extract_strided_slice %28 {offsets = [2, 0], sizes = [1, 32], strides = [1, 1]} : vector<3x32xf32> to vector<1x32xf32>
    %cst_125 = arith.constant dense<0.000000e+00> : vector<8xf32>
    %284 = vector.multi_reduction <add>, %281, %cst_125 [1] : vector<8x32xf32> to vector<8xf32>
    %285 = vector.shape_cast %284 : vector<8xf32> to vector<8x1xf32>
    %cst_126 = arith.constant 3.200000e+01 : f32
    %286 = vector.broadcast %cst_126 : f32 to vector<8x1xf32>
    %287 = arith.divf %285, %286 : vector<8x1xf32>
    %288 = vector.broadcast %287 : vector<8x1xf32> to vector<8x32xf32>
    %289 = arith.subf %281, %288 : vector<8x32xf32>
    %290 = arith.mulf %289, %289 : vector<8x32xf32>
    %cst_127 = arith.constant dense<0.000000e+00> : vector<8xf32>
    %291 = vector.multi_reduction <add>, %290, %cst_127 [1] : vector<8x32xf32> to vector<8xf32>
    %292 = vector.shape_cast %291 : vector<8xf32> to vector<8x1xf32>
    %cst_128 = arith.constant 3.200000e+01 : f32
    %293 = vector.broadcast %cst_128 : f32 to vector<8x1xf32>
    %294 = arith.divf %292, %293 : vector<8x1xf32>
    %295 = vector.broadcast %287 : vector<8x1xf32> to vector<8x32xf32>
    %296 = arith.subf %281, %295 : vector<8x32xf32>
    %cst_129 = arith.constant 9.99999974E-6 : f32
    %297 = vector.broadcast %cst_129 : f32 to vector<8x1xf32>
    %298 = arith.addf %294, %297 : vector<8x1xf32>
    %299 = math.rsqrt %298 : vector<8x1xf32>
    %300 = vector.broadcast %299 : vector<8x1xf32> to vector<8x32xf32>
    %301 = arith.mulf %296, %300 : vector<8x32xf32>
    %302 = vector.broadcast %282 : vector<1x32xf32> to vector<8x32xf32>
    %303 = arith.mulf %301, %302 : vector<8x32xf32>
    %304 = vector.broadcast %283 : vector<1x32xf32> to vector<8x32xf32>
    %305 = arith.addf %303, %304 : vector<8x32xf32>
    %c1 = arith.constant 1 : index
    %c0_130 = arith.constant 0 : index
    %c0_131 = arith.constant 0 : index
    %306 = vector.load %arg6[%c1, %c0_130, %c0_131] : memref<2x3x32xf32, #tpu.memory_space<vmem>>, vector<1x3x32xf32>
    %307 = vector.shape_cast %306 : vector<1x3x32xf32> to vector<3x32xf32>
    %c1_132 = arith.constant 1 : index
    %c0_133 = arith.constant 0 : index
    %c0_134 = arith.constant 0 : index
    %308 = vector.load %arg7[%c1_132, %c0_133, %c0_134] : memref<2x3x32xf32, #tpu.memory_space<vmem>>, vector<1x3x32xf32>
    %309 = vector.shape_cast %308 : vector<1x3x32xf32> to vector<3x32xf32>
    %c1_135 = arith.constant 1 : index
    %c0_136 = arith.constant 0 : index
    %c0_137 = arith.constant 0 : index
    %310 = vector.load %arg8[%c1_135, %c0_136, %c0_137] : memref<2x32x96xf32, #tpu.memory_space<vmem>>, vector<1x32x96xf32>
    %311 = vector.shape_cast %310 : vector<1x32x96xf32> to vector<32x96xf32>
    %cst_138 = arith.constant dense<0.000000e+00> : vector<8x96xf32>
    %312 = tpu.matmul %305, %311, %cst_138 {dimension_numbers = #tpu.dot_dimension_numbers<[1], [0], [0], [1], [0, 0, 1, 1], [], []>} : vector<8x32xf32>, vector<32x96xf32>, vector<8x96xf32> -> vector<8x96xf32>
    %c1_139 = arith.constant 1 : index
    %c0_140 = arith.constant 0 : index
    %c0_141 = arith.constant 0 : index
    %313 = vector.load %arg9[%c1_139, %c0_140, %c0_141] : memref<2x1x96xf32, #tpu.memory_space<vmem>>, vector<1x1x96xf32>
    %314 = vector.shape_cast %313 : vector<1x1x96xf32> to vector<1x96xf32>
    %315 = vector.broadcast %314 : vector<1x96xf32> to vector<8x96xf32>
    %316 = arith.addf %312, %315 : vector<8x96xf32>
    %317 = vector.extract_strided_slice %316 {offsets = [0, 0], sizes = [8, 32], strides = [1, 1]} : vector<8x96xf32> to vector<8x32xf32>
    %318 = vector.extract_strided_slice %316 {offsets = [0, 32], sizes = [8, 32], strides = [1, 1]} : vector<8x96xf32> to vector<8x32xf32>
    %319 = vector.extract_strided_slice %316 {offsets = [0, 64], sizes = [8, 32], strides = [1, 1]} : vector<8x96xf32> to vector<8x32xf32>
    %c1_142 = arith.constant 1 : index
    %c0_143 = arith.constant 0 : index
    %c0_144 = arith.constant 0 : index
    %320 = vector.load %arg10[%c1_142, %c0_143, %c0_144] : memref<2x32x32xf32, #tpu.memory_space<vmem>>, vector<1x32x32xf32>
    %321 = vector.shape_cast %320 : vector<1x32x32xf32> to vector<32x32xf32>
    %c1_145 = arith.constant 1 : index
    %c0_146 = arith.constant 0 : index
    %c0_147 = arith.constant 0 : index
    %322 = vector.load %arg11[%c1_145, %c0_146, %c0_147] : memref<2x1x32xf32, #tpu.memory_space<vmem>>, vector<1x1x32xf32>
    %323 = vector.shape_cast %322 : vector<1x1x32xf32> to vector<1x32xf32>
    %324 = vector.extract_strided_slice %319 {offsets = [0, 0], sizes = [8, 8], strides = [1, 1]} : vector<8x32xf32> to vector<8x8xf32>
    %325 = vector.extract_strided_slice %317 {offsets = [0, 0], sizes = [8, 8], strides = [1, 1]} : vector<8x32xf32> to vector<8x8xf32>
    %326 = vector.extract_strided_slice %318 {offsets = [0, 0], sizes = [8, 8], strides = [1, 1]} : vector<8x32xf32> to vector<8x8xf32>
    %cst_148 = arith.constant dense<0.000000e+00> : vector<8x8xf32>
    %327 = tpu.matmul %324, %325, %cst_148 {dimension_numbers = #tpu.dot_dimension_numbers<[1], [1], [0], [0], [0, 0, 1, 0], [], []>} : vector<8x8xf32>, vector<8x8xf32>, vector<8x8xf32> -> vector<8x8xf32>
    %cst_149 = arith.constant 0.353553385 : f32
    %328 = vector.broadcast %cst_149 : f32 to vector<8x8xf32>
    %329 = arith.mulf %327, %328 : vector<8x8xf32>
    %330 = arith.addf %329, %19 : vector<8x8xf32>
    %cst_150 = arith.constant dense<0xFF800000> : vector<8xf32>
    %331 = vector.multi_reduction <maximumf>, %330, %cst_150 [1] : vector<8x8xf32> to vector<8xf32>
    %332 = vector.shape_cast %331 : vector<8xf32> to vector<8x1xf32>
    %333 = vector.broadcast %332 : vector<8x1xf32> to vector<8x8xf32>
    %334 = arith.subf %330, %333 : vector<8x8xf32>
    %335 = math.exp %334 : vector<8x8xf32>
    %cst_151 = arith.constant dense<0.000000e+00> : vector<8xf32>
    %336 = vector.multi_reduction <add>, %335, %cst_151 [1] : vector<8x8xf32> to vector<8xf32>
    %337 = vector.shape_cast %336 : vector<8xf32> to vector<8x1xf32>
    %338 = vector.broadcast %337 : vector<8x1xf32> to vector<8x8xf32>
    %339 = arith.divf %335, %338 : vector<8x8xf32>
    %cst_152 = arith.constant dense<0.000000e+00> : vector<8x8xf32>
    %340 = tpu.matmul %339, %326, %cst_152 {dimension_numbers = #tpu.dot_dimension_numbers<[1], [0], [0], [1], [0, 0, 1, 1], [], []>} : vector<8x8xf32>, vector<8x8xf32>, vector<8x8xf32> -> vector<8x8xf32>
    %341 = vector.extract_strided_slice %319 {offsets = [0, 8], sizes = [8, 8], strides = [1, 1]} : vector<8x32xf32> to vector<8x8xf32>
    %342 = vector.extract_strided_slice %317 {offsets = [0, 8], sizes = [8, 8], strides = [1, 1]} : vector<8x32xf32> to vector<8x8xf32>
    %343 = vector.extract_strided_slice %318 {offsets = [0, 8], sizes = [8, 8], strides = [1, 1]} : vector<8x32xf32> to vector<8x8xf32>
    %cst_153 = arith.constant dense<0.000000e+00> : vector<8x8xf32>
    %344 = tpu.matmul %341, %342, %cst_153 {dimension_numbers = #tpu.dot_dimension_numbers<[1], [1], [0], [0], [0, 0, 1, 0], [], []>} : vector<8x8xf32>, vector<8x8xf32>, vector<8x8xf32> -> vector<8x8xf32>
    %cst_154 = arith.constant 0.353553385 : f32
    %345 = vector.broadcast %cst_154 : f32 to vector<8x8xf32>
    %346 = arith.mulf %344, %345 : vector<8x8xf32>
    %347 = arith.addf %346, %19 : vector<8x8xf32>
    %cst_155 = arith.constant dense<0xFF800000> : vector<8xf32>
    %348 = vector.multi_reduction <maximumf>, %347, %cst_155 [1] : vector<8x8xf32> to vector<8xf32>
    %349 = vector.shape_cast %348 : vector<8xf32> to vector<8x1xf32>
    %350 = vector.broadcast %349 : vector<8x1xf32> to vector<8x8xf32>
    %351 = arith.subf %347, %350 : vector<8x8xf32>
    %352 = math.exp %351 : vector<8x8xf32>
    %cst_156 = arith.constant dense<0.000000e+00> : vector<8xf32>
    %353 = vector.multi_reduction <add>, %352, %cst_156 [1] : vector<8x8xf32> to vector<8xf32>
    %354 = vector.shape_cast %353 : vector<8xf32> to vector<8x1xf32>
    %355 = vector.broadcast %354 : vector<8x1xf32> to vector<8x8xf32>
    %356 = arith.divf %352, %355 : vector<8x8xf32>
    %cst_157 = arith.constant dense<0.000000e+00> : vector<8x8xf32>
    %357 = tpu.matmul %356, %343, %cst_157 {dimension_numbers = #tpu.dot_dimension_numbers<[1], [0], [0], [1], [0, 0, 1, 1], [], []>} : vector<8x8xf32>, vector<8x8xf32>, vector<8x8xf32> -> vector<8x8xf32>
    %358 = vector.extract_strided_slice %319 {offsets = [0, 16], sizes = [8, 8], strides = [1, 1]} : vector<8x32xf32> to vector<8x8xf32>
    %359 = vector.extract_strided_slice %317 {offsets = [0, 16], sizes = [8, 8], strides = [1, 1]} : vector<8x32xf32> to vector<8x8xf32>
    %360 = vector.extract_strided_slice %318 {offsets = [0, 16], sizes = [8, 8], strides = [1, 1]} : vector<8x32xf32> to vector<8x8xf32>
    %cst_158 = arith.constant dense<0.000000e+00> : vector<8x8xf32>
    %361 = tpu.matmul %358, %359, %cst_158 {dimension_numbers = #tpu.dot_dimension_numbers<[1], [1], [0], [0], [0, 0, 1, 0], [], []>} : vector<8x8xf32>, vector<8x8xf32>, vector<8x8xf32> -> vector<8x8xf32>
    %cst_159 = arith.constant 0.353553385 : f32
    %362 = vector.broadcast %cst_159 : f32 to vector<8x8xf32>
    %363 = arith.mulf %361, %362 : vector<8x8xf32>
    %364 = arith.addf %363, %19 : vector<8x8xf32>
    %cst_160 = arith.constant dense<0xFF800000> : vector<8xf32>
    %365 = vector.multi_reduction <maximumf>, %364, %cst_160 [1] : vector<8x8xf32> to vector<8xf32>
    %366 = vector.shape_cast %365 : vector<8xf32> to vector<8x1xf32>
    %367 = vector.broadcast %366 : vector<8x1xf32> to vector<8x8xf32>
    %368 = arith.subf %364, %367 : vector<8x8xf32>
    %369 = math.exp %368 : vector<8x8xf32>
    %cst_161 = arith.constant dense<0.000000e+00> : vector<8xf32>
    %370 = vector.multi_reduction <add>, %369, %cst_161 [1] : vector<8x8xf32> to vector<8xf32>
    %371 = vector.shape_cast %370 : vector<8xf32> to vector<8x1xf32>
    %372 = vector.broadcast %371 : vector<8x1xf32> to vector<8x8xf32>
    %373 = arith.divf %369, %372 : vector<8x8xf32>
    %cst_162 = arith.constant dense<0.000000e+00> : vector<8x8xf32>
    %374 = tpu.matmul %373, %360, %cst_162 {dimension_numbers = #tpu.dot_dimension_numbers<[1], [0], [0], [1], [0, 0, 1, 1], [], []>} : vector<8x8xf32>, vector<8x8xf32>, vector<8x8xf32> -> vector<8x8xf32>
    %375 = vector.extract_strided_slice %319 {offsets = [0, 24], sizes = [8, 8], strides = [1, 1]} : vector<8x32xf32> to vector<8x8xf32>
    %376 = vector.extract_strided_slice %317 {offsets = [0, 24], sizes = [8, 8], strides = [1, 1]} : vector<8x32xf32> to vector<8x8xf32>
    %377 = vector.extract_strided_slice %318 {offsets = [0, 24], sizes = [8, 8], strides = [1, 1]} : vector<8x32xf32> to vector<8x8xf32>
    %cst_163 = arith.constant dense<0.000000e+00> : vector<8x8xf32>
    %378 = tpu.matmul %375, %376, %cst_163 {dimension_numbers = #tpu.dot_dimension_numbers<[1], [1], [0], [0], [0, 0, 1, 0], [], []>} : vector<8x8xf32>, vector<8x8xf32>, vector<8x8xf32> -> vector<8x8xf32>
    %cst_164 = arith.constant 0.353553385 : f32
    %379 = vector.broadcast %cst_164 : f32 to vector<8x8xf32>
    %380 = arith.mulf %378, %379 : vector<8x8xf32>
    %381 = arith.addf %380, %19 : vector<8x8xf32>
    %cst_165 = arith.constant dense<0xFF800000> : vector<8xf32>
    %382 = vector.multi_reduction <maximumf>, %381, %cst_165 [1] : vector<8x8xf32> to vector<8xf32>
    %383 = vector.shape_cast %382 : vector<8xf32> to vector<8x1xf32>
    %384 = vector.broadcast %383 : vector<8x1xf32> to vector<8x8xf32>
    %385 = arith.subf %381, %384 : vector<8x8xf32>
    %386 = math.exp %385 : vector<8x8xf32>
    %cst_166 = arith.constant dense<0.000000e+00> : vector<8xf32>
    %387 = vector.multi_reduction <add>, %386, %cst_166 [1] : vector<8x8xf32> to vector<8xf32>
    %388 = vector.shape_cast %387 : vector<8xf32> to vector<8x1xf32>
    %389 = vector.broadcast %388 : vector<8x1xf32> to vector<8x8xf32>
    %390 = arith.divf %386, %389 : vector<8x8xf32>
    %cst_167 = arith.constant dense<0.000000e+00> : vector<8x8xf32>
    %391 = tpu.matmul %390, %377, %cst_167 {dimension_numbers = #tpu.dot_dimension_numbers<[1], [0], [0], [1], [0, 0, 1, 1], [], []>} : vector<8x8xf32>, vector<8x8xf32>, vector<8x8xf32> -> vector<8x8xf32>
    %392 = tpu.concatenate %340, %357, %374, %391 in 1 : vector<8x8xf32>, vector<8x8xf32>, vector<8x8xf32>, vector<8x8xf32> -> vector<8x32xf32>
    %393 = tpu.concatenate %339, %356, %373, %390 in 1 : vector<8x8xf32>, vector<8x8xf32>, vector<8x8xf32>, vector<8x8xf32> -> vector<8x32xf32>
    %cst_168 = arith.constant dense<0.000000e+00> : vector<8x32xf32>
    %394 = tpu.matmul %392, %321, %cst_168 {dimension_numbers = #tpu.dot_dimension_numbers<[1], [0], [0], [1], [0, 0, 1, 1], [], []>} : vector<8x32xf32>, vector<32x32xf32>, vector<8x32xf32> -> vector<8x32xf32>
    %395 = vector.broadcast %323 : vector<1x32xf32> to vector<8x32xf32>
    %396 = arith.addf %394, %395 : vector<8x32xf32>
    %397 = vector.broadcast %9 : vector<8x1xf32> to vector<8x32xf32>
    %398 = arith.mulf %396, %397 : vector<8x32xf32>
    %c0_169 = arith.constant 0 : index
    %c0_170 = arith.constant 0 : index
    %c0_171 = arith.constant 0 : index
    %399 = vector.load %arg23[%c0_169, %c0_170, %c0_171] : memref<1x8x32xf32, #tpu.memory_space<vmem>>, vector<1x8x32xf32>
    %400 = vector.shape_cast %399 : vector<1x8x32xf32> to vector<8x32xf32>
    %401 = vector.shape_cast %393 : vector<8x32xf32> to vector<1x8x32xf32>
    tpu.vector_store %arg23[%c0_169, %c0_170, %c0_171], %401 {strides = array<i32>} : memref<1x8x32xf32, #tpu.memory_space<vmem>>, vector<1x8x32xf32>,
    %402 = arith.addf %305, %398 : vector<8x32xf32>
    %403 = vector.extract_strided_slice %307 {offsets = [0, 0], sizes = [1, 32], strides = [1, 1]} : vector<3x32xf32> to vector<1x32xf32>
    %404 = vector.extract_strided_slice %309 {offsets = [0, 0], sizes = [1, 32], strides = [1, 1]} : vector<3x32xf32> to vector<1x32xf32>
    %cst_172 = arith.constant dense<0.000000e+00> : vector<8xf32>
    %405 = vector.multi_reduction <add>, %402, %cst_172 [1] : vector<8x32xf32> to vector<8xf32>
    %406 = vector.shape_cast %405 : vector<8xf32> to vector<8x1xf32>
    %cst_173 = arith.constant 3.200000e+01 : f32
    %407 = vector.broadcast %cst_173 : f32 to vector<8x1xf32>
    %408 = arith.divf %406, %407 : vector<8x1xf32>
    %409 = vector.broadcast %408 : vector<8x1xf32> to vector<8x32xf32>
    %410 = arith.subf %402, %409 : vector<8x32xf32>
    %411 = arith.mulf %410, %410 : vector<8x32xf32>
    %cst_174 = arith.constant dense<0.000000e+00> : vector<8xf32>
    %412 = vector.multi_reduction <add>, %411, %cst_174 [1] : vector<8x32xf32> to vector<8xf32>
    %413 = vector.shape_cast %412 : vector<8xf32> to vector<8x1xf32>
    %cst_175 = arith.constant 3.200000e+01 : f32
    %414 = vector.broadcast %cst_175 : f32 to vector<8x1xf32>
    %415 = arith.divf %413, %414 : vector<8x1xf32>
    %416 = vector.broadcast %408 : vector<8x1xf32> to vector<8x32xf32>
    %417 = arith.subf %402, %416 : vector<8x32xf32>
    %cst_176 = arith.constant 9.99999974E-6 : f32
    %418 = vector.broadcast %cst_176 : f32 to vector<8x1xf32>
    %419 = arith.addf %415, %418 : vector<8x1xf32>
    %420 = math.rsqrt %419 : vector<8x1xf32>
    %421 = vector.broadcast %420 : vector<8x1xf32> to vector<8x32xf32>
    %422 = arith.mulf %417, %421 : vector<8x32xf32>
    %423 = vector.broadcast %403 : vector<1x32xf32> to vector<8x32xf32>
    %424 = arith.mulf %422, %423 : vector<8x32xf32>
    %425 = vector.broadcast %404 : vector<1x32xf32> to vector<8x32xf32>
    %426 = arith.addf %424, %425 : vector<8x32xf32>
    %c1_177 = arith.constant 1 : index
    %c0_178 = arith.constant 0 : index
    %c0_179 = arith.constant 0 : index
    %427 = vector.load %arg12[%c1_177, %c0_178, %c0_179] : memref<2x32x64xf32, #tpu.memory_space<vmem>>, vector<1x32x64xf32>
    %428 = vector.shape_cast %427 : vector<1x32x64xf32> to vector<32x64xf32>
    %cst_180 = arith.constant dense<0.000000e+00> : vector<10x64xf32>
    %429 = tpu.matmul %3, %428, %cst_180 {dimension_numbers = #tpu.dot_dimension_numbers<[1], [0], [0], [1], [0, 0, 1, 1], [], []>} : vector<10x32xf32>, vector<32x64xf32>, vector<10x64xf32> -> vector<10x64xf32>
    %c1_181 = arith.constant 1 : index
    %c0_182 = arith.constant 0 : index
    %c0_183 = arith.constant 0 : index
    %430 = vector.load %arg13[%c1_181, %c0_182, %c0_183] : memref<2x1x64xf32, #tpu.memory_space<vmem>>, vector<1x1x64xf32>
    %431 = vector.shape_cast %430 : vector<1x1x64xf32> to vector<1x64xf32>
    %432 = vector.broadcast %431 : vector<1x64xf32> to vector<10x64xf32>
    %433 = arith.addf %429, %432 : vector<10x64xf32>
    %434 = vector.extract_strided_slice %433 {offsets = [0, 0], sizes = [10, 32], strides = [1, 1]} : vector<10x64xf32> to vector<10x32xf32>
    %435 = vector.extract_strided_slice %433 {offsets = [0, 32], sizes = [10, 32], strides = [1, 1]} : vector<10x64xf32> to vector<10x32xf32>
    %c1_184 = arith.constant 1 : index
    %c0_185 = arith.constant 0 : index
    %c0_186 = arith.constant 0 : index
    %436 = vector.load %arg14[%c1_184, %c0_185, %c0_186] : memref<2x32x32xf32, #tpu.memory_space<vmem>>, vector<1x32x32xf32>
    %437 = vector.shape_cast %436 : vector<1x32x32xf32> to vector<32x32xf32>
    %cst_187 = arith.constant dense<0.000000e+00> : vector<8x32xf32>
    %438 = tpu.matmul %426, %437, %cst_187 {dimension_numbers = #tpu.dot_dimension_numbers<[1], [0], [0], [1], [0, 0, 1, 1], [], []>} : vector<8x32xf32>, vector<32x32xf32>, vector<8x32xf32> -> vector<8x32xf32>
    %c1_188 = arith.constant 1 : index
    %c0_189 = arith.constant 0 : index
    %c0_190 = arith.constant 0 : index
    %439 = vector.load %arg15[%c1_188, %c0_189, %c0_190] : memref<2x1x32xf32, #tpu.memory_space<vmem>>, vector<1x1x32xf32>
    %440 = vector.shape_cast %439 : vector<1x1x32xf32> to vector<1x32xf32>
    %441 = vector.broadcast %440 : vector<1x32xf32> to vector<8x32xf32>
    %442 = arith.addf %438, %441 : vector<8x32xf32>
    %c1_191 = arith.constant 1 : index
    %c0_192 = arith.constant 0 : index
    %c0_193 = arith.constant 0 : index
    %443 = vector.load %arg16[%c1_191, %c0_192, %c0_193] : memref<2x32x32xf32, #tpu.memory_space<vmem>>, vector<1x32x32xf32>
    %444 = vector.shape_cast %443 : vector<1x32x32xf32> to vector<32x32xf32>
    %c1_194 = arith.constant 1 : index
    %c0_195 = arith.constant 0 : index
    %c0_196 = arith.constant 0 : index
    %445 = vector.load %arg17[%c1_194, %c0_195, %c0_196] : memref<2x1x32xf32, #tpu.memory_space<vmem>>, vector<1x1x32xf32>
    %446 = vector.shape_cast %445 : vector<1x1x32xf32> to vector<1x32xf32>
    %447 = vector.extract_strided_slice %442 {offsets = [0, 0], sizes = [8, 8], strides = [1, 1]} : vector<8x32xf32> to vector<8x8xf32>
    %448 = vector.extract_strided_slice %434 {offsets = [0, 0], sizes = [10, 8], strides = [1, 1]} : vector<10x32xf32> to vector<10x8xf32>
    %449 = vector.extract_strided_slice %435 {offsets = [0, 0], sizes = [10, 8], strides = [1, 1]} : vector<10x32xf32> to vector<10x8xf32>
    %cst_197 = arith.constant dense<0.000000e+00> : vector<8x10xf32>
    %450 = tpu.matmul %447, %448, %cst_197 {dimension_numbers = #tpu.dot_dimension_numbers<[1], [1], [0], [0], [0, 0, 1, 0], [], []>} : vector<8x8xf32>, vector<10x8xf32>, vector<8x10xf32> -> vector<8x10xf32>
    %cst_198 = arith.constant 0.353553385 : f32
    %451 = vector.broadcast %cst_198 : f32 to vector<8x10xf32>
    %452 = arith.mulf %450, %451 : vector<8x10xf32>
    %453 = vector.broadcast %24 : vector<1x10xf32> to vector<8x10xf32>
    %454 = arith.addf %452, %453 : vector<8x10xf32>
    %cst_199 = arith.constant dense<0xFF800000> : vector<8xf32>
    %455 = vector.multi_reduction <maximumf>, %454, %cst_199 [1] : vector<8x10xf32> to vector<8xf32>
    %456 = vector.shape_cast %455 : vector<8xf32> to vector<8x1xf32>
    %457 = vector.broadcast %456 : vector<8x1xf32> to vector<8x10xf32>
    %458 = arith.subf %454, %457 : vector<8x10xf32>
    %459 = math.exp %458 : vector<8x10xf32>
    %cst_200 = arith.constant dense<0.000000e+00> : vector<8xf32>
    %460 = vector.multi_reduction <add>, %459, %cst_200 [1] : vector<8x10xf32> to vector<8xf32>
    %461 = vector.shape_cast %460 : vector<8xf32> to vector<8x1xf32>
    %462 = vector.broadcast %461 : vector<8x1xf32> to vector<8x10xf32>
    %463 = arith.divf %459, %462 : vector<8x10xf32>
    %cst_201 = arith.constant dense<0.000000e+00> : vector<8x8xf32>
    %464 = tpu.matmul %463, %449, %cst_201 {dimension_numbers = #tpu.dot_dimension_numbers<[1], [0], [0], [1], [0, 0, 1, 1], [], []>} : vector<8x10xf32>, vector<10x8xf32>, vector<8x8xf32> -> vector<8x8xf32>
    %465 = vector.extract_strided_slice %442 {offsets = [0, 8], sizes = [8, 8], strides = [1, 1]} : vector<8x32xf32> to vector<8x8xf32>
    %466 = vector.extract_strided_slice %434 {offsets = [0, 8], sizes = [10, 8], strides = [1, 1]} : vector<10x32xf32> to vector<10x8xf32>
    %467 = vector.extract_strided_slice %435 {offsets = [0, 8], sizes = [10, 8], strides = [1, 1]} : vector<10x32xf32> to vector<10x8xf32>
    %cst_202 = arith.constant dense<0.000000e+00> : vector<8x10xf32>
    %468 = tpu.matmul %465, %466, %cst_202 {dimension_numbers = #tpu.dot_dimension_numbers<[1], [1], [0], [0], [0, 0, 1, 0], [], []>} : vector<8x8xf32>, vector<10x8xf32>, vector<8x10xf32> -> vector<8x10xf32>
    %cst_203 = arith.constant 0.353553385 : f32
    %469 = vector.broadcast %cst_203 : f32 to vector<8x10xf32>
    %470 = arith.mulf %468, %469 : vector<8x10xf32>
    %471 = vector.broadcast %24 : vector<1x10xf32> to vector<8x10xf32>
    %472 = arith.addf %470, %471 : vector<8x10xf32>
    %cst_204 = arith.constant dense<0xFF800000> : vector<8xf32>
    %473 = vector.multi_reduction <maximumf>, %472, %cst_204 [1] : vector<8x10xf32> to vector<8xf32>
    %474 = vector.shape_cast %473 : vector<8xf32> to vector<8x1xf32>
    %475 = vector.broadcast %474 : vector<8x1xf32> to vector<8x10xf32>
    %476 = arith.subf %472, %475 : vector<8x10xf32>
    %477 = math.exp %476 : vector<8x10xf32>
    %cst_205 = arith.constant dense<0.000000e+00> : vector<8xf32>
    %478 = vector.multi_reduction <add>, %477, %cst_205 [1] : vector<8x10xf32> to vector<8xf32>
    %479 = vector.shape_cast %478 : vector<8xf32> to vector<8x1xf32>
    %480 = vector.broadcast %479 : vector<8x1xf32> to vector<8x10xf32>
    %481 = arith.divf %477, %480 : vector<8x10xf32>
    %cst_206 = arith.constant dense<0.000000e+00> : vector<8x8xf32>
    %482 = tpu.matmul %481, %467, %cst_206 {dimension_numbers = #tpu.dot_dimension_numbers<[1], [0], [0], [1], [0, 0, 1, 1], [], []>} : vector<8x10xf32>, vector<10x8xf32>, vector<8x8xf32> -> vector<8x8xf32>
    %483 = vector.extract_strided_slice %442 {offsets = [0, 16], sizes = [8, 8], strides = [1, 1]} : vector<8x32xf32> to vector<8x8xf32>
    %484 = vector.extract_strided_slice %434 {offsets = [0, 16], sizes = [10, 8], strides = [1, 1]} : vector<10x32xf32> to vector<10x8xf32>
    %485 = vector.extract_strided_slice %435 {offsets = [0, 16], sizes = [10, 8], strides = [1, 1]} : vector<10x32xf32> to vector<10x8xf32>
    %cst_207 = arith.constant dense<0.000000e+00> : vector<8x10xf32>
    %486 = tpu.matmul %483, %484, %cst_207 {dimension_numbers = #tpu.dot_dimension_numbers<[1], [1], [0], [0], [0, 0, 1, 0], [], []>} : vector<8x8xf32>, vector<10x8xf32>, vector<8x10xf32> -> vector<8x10xf32>
    %cst_208 = arith.constant 0.353553385 : f32
    %487 = vector.broadcast %cst_208 : f32 to vector<8x10xf32>
    %488 = arith.mulf %486, %487 : vector<8x10xf32>
    %489 = vector.broadcast %24 : vector<1x10xf32> to vector<8x10xf32>
    %490 = arith.addf %488, %489 : vector<8x10xf32>
    %cst_209 = arith.constant dense<0xFF800000> : vector<8xf32>
    %491 = vector.multi_reduction <maximumf>, %490, %cst_209 [1] : vector<8x10xf32> to vector<8xf32>
    %492 = vector.shape_cast %491 : vector<8xf32> to vector<8x1xf32>
    %493 = vector.broadcast %492 : vector<8x1xf32> to vector<8x10xf32>
    %494 = arith.subf %490, %493 : vector<8x10xf32>
    %495 = math.exp %494 : vector<8x10xf32>
    %cst_210 = arith.constant dense<0.000000e+00> : vector<8xf32>
    %496 = vector.multi_reduction <add>, %495, %cst_210 [1] : vector<8x10xf32> to vector<8xf32>
    %497 = vector.shape_cast %496 : vector<8xf32> to vector<8x1xf32>
    %498 = vector.broadcast %497 : vector<8x1xf32> to vector<8x10xf32>
    %499 = arith.divf %495, %498 : vector<8x10xf32>
    %cst_211 = arith.constant dense<0.000000e+00> : vector<8x8xf32>
    %500 = tpu.matmul %499, %485, %cst_211 {dimension_numbers = #tpu.dot_dimension_numbers<[1], [0], [0], [1], [0, 0, 1, 1], [], []>} : vector<8x10xf32>, vector<10x8xf32>, vector<8x8xf32> -> vector<8x8xf32>
    %501 = vector.extract_strided_slice %442 {offsets = [0, 24], sizes = [8, 8], strides = [1, 1]} : vector<8x32xf32> to vector<8x8xf32>
    %502 = vector.extract_strided_slice %434 {offsets = [0, 24], sizes = [10, 8], strides = [1, 1]} : vector<10x32xf32> to vector<10x8xf32>
    %503 = vector.extract_strided_slice %435 {offsets = [0, 24], sizes = [10, 8], strides = [1, 1]} : vector<10x32xf32> to vector<10x8xf32>
    %cst_212 = arith.constant dense<0.000000e+00> : vector<8x10xf32>
    %504 = tpu.matmul %501, %502, %cst_212 {dimension_numbers = #tpu.dot_dimension_numbers<[1], [1], [0], [0], [0, 0, 1, 0], [], []>} : vector<8x8xf32>, vector<10x8xf32>, vector<8x10xf32> -> vector<8x10xf32>
    %cst_213 = arith.constant 0.353553385 : f32
    %505 = vector.broadcast %cst_213 : f32 to vector<8x10xf32>
    %506 = arith.mulf %504, %505 : vector<8x10xf32>
    %507 = vector.broadcast %24 : vector<1x10xf32> to vector<8x10xf32>
    %508 = arith.addf %506, %507 : vector<8x10xf32>
    %cst_214 = arith.constant dense<0xFF800000> : vector<8xf32>
    %509 = vector.multi_reduction <maximumf>, %508, %cst_214 [1] : vector<8x10xf32> to vector<8xf32>
    %510 = vector.shape_cast %509 : vector<8xf32> to vector<8x1xf32>
    %511 = vector.broadcast %510 : vector<8x1xf32> to vector<8x10xf32>
    %512 = arith.subf %508, %511 : vector<8x10xf32>
    %513 = math.exp %512 : vector<8x10xf32>
    %cst_215 = arith.constant dense<0.000000e+00> : vector<8xf32>
    %514 = vector.multi_reduction <add>, %513, %cst_215 [1] : vector<8x10xf32> to vector<8xf32>
    %515 = vector.shape_cast %514 : vector<8xf32> to vector<8x1xf32>
    %516 = vector.broadcast %515 : vector<8x1xf32> to vector<8x10xf32>
    %517 = arith.divf %513, %516 : vector<8x10xf32>
    %cst_216 = arith.constant dense<0.000000e+00> : vector<8x8xf32>
    %518 = tpu.matmul %517, %503, %cst_216 {dimension_numbers = #tpu.dot_dimension_numbers<[1], [0], [0], [1], [0, 0, 1, 1], [], []>} : vector<8x10xf32>, vector<10x8xf32>, vector<8x8xf32> -> vector<8x8xf32>
    %519 = tpu.concatenate %464, %482, %500, %518 in 1 : vector<8x8xf32>, vector<8x8xf32>, vector<8x8xf32>, vector<8x8xf32> -> vector<8x32xf32>
    %520 = tpu.concatenate %463, %481, %499, %517 in 1 : vector<8x10xf32>, vector<8x10xf32>, vector<8x10xf32>, vector<8x10xf32> -> vector<8x40xf32>
    %cst_217 = arith.constant dense<0.000000e+00> : vector<8x32xf32>
    %521 = tpu.matmul %519, %444, %cst_217 {dimension_numbers = #tpu.dot_dimension_numbers<[1], [0], [0], [1], [0, 0, 1, 1], [], []>} : vector<8x32xf32>, vector<32x32xf32>, vector<8x32xf32> -> vector<8x32xf32>
    %522 = vector.broadcast %446 : vector<1x32xf32> to vector<8x32xf32>
    %523 = arith.addf %521, %522 : vector<8x32xf32>
    %524 = vector.broadcast %9 : vector<8x1xf32> to vector<8x32xf32>
    %525 = arith.mulf %523, %524 : vector<8x32xf32>
    %c0_218 = arith.constant 0 : index
    %c0_219 = arith.constant 0 : index
    %c0_220 = arith.constant 0 : index
    %526 = vector.load %arg24[%c0_218, %c0_219, %c0_220] : memref<1x8x40xf32, #tpu.memory_space<vmem>>, vector<1x8x40xf32>
    %527 = vector.shape_cast %526 : vector<1x8x40xf32> to vector<8x40xf32>
    %528 = vector.shape_cast %520 : vector<8x40xf32> to vector<1x8x40xf32>
    tpu.vector_store %arg24[%c0_218, %c0_219, %c0_220], %528 {strides = array<i32>} : memref<1x8x40xf32, #tpu.memory_space<vmem>>, vector<1x8x40xf32>,
    %529 = arith.addf %426, %525 : vector<8x32xf32>
    %530 = vector.extract_strided_slice %307 {offsets = [1, 0], sizes = [1, 32], strides = [1, 1]} : vector<3x32xf32> to vector<1x32xf32>
    %531 = vector.extract_strided_slice %309 {offsets = [1, 0], sizes = [1, 32], strides = [1, 1]} : vector<3x32xf32> to vector<1x32xf32>
    %cst_221 = arith.constant dense<0.000000e+00> : vector<8xf32>
    %532 = vector.multi_reduction <add>, %529, %cst_221 [1] : vector<8x32xf32> to vector<8xf32>
    %533 = vector.shape_cast %532 : vector<8xf32> to vector<8x1xf32>
    %cst_222 = arith.constant 3.200000e+01 : f32
    %534 = vector.broadcast %cst_222 : f32 to vector<8x1xf32>
    %535 = arith.divf %533, %534 : vector<8x1xf32>
    %536 = vector.broadcast %535 : vector<8x1xf32> to vector<8x32xf32>
    %537 = arith.subf %529, %536 : vector<8x32xf32>
    %538 = arith.mulf %537, %537 : vector<8x32xf32>
    %cst_223 = arith.constant dense<0.000000e+00> : vector<8xf32>
    %539 = vector.multi_reduction <add>, %538, %cst_223 [1] : vector<8x32xf32> to vector<8xf32>
    %540 = vector.shape_cast %539 : vector<8xf32> to vector<8x1xf32>
    %cst_224 = arith.constant 3.200000e+01 : f32
    %541 = vector.broadcast %cst_224 : f32 to vector<8x1xf32>
    %542 = arith.divf %540, %541 : vector<8x1xf32>
    %543 = vector.broadcast %535 : vector<8x1xf32> to vector<8x32xf32>
    %544 = arith.subf %529, %543 : vector<8x32xf32>
    %cst_225 = arith.constant 9.99999974E-6 : f32
    %545 = vector.broadcast %cst_225 : f32 to vector<8x1xf32>
    %546 = arith.addf %542, %545 : vector<8x1xf32>
    %547 = math.rsqrt %546 : vector<8x1xf32>
    %548 = vector.broadcast %547 : vector<8x1xf32> to vector<8x32xf32>
    %549 = arith.mulf %544, %548 : vector<8x32xf32>
    %550 = vector.broadcast %530 : vector<1x32xf32> to vector<8x32xf32>
    %551 = arith.mulf %549, %550 : vector<8x32xf32>
    %552 = vector.broadcast %531 : vector<1x32xf32> to vector<8x32xf32>
    %553 = arith.addf %551, %552 : vector<8x32xf32>
    %c1_226 = arith.constant 1 : index
    %c0_227 = arith.constant 0 : index
    %c0_228 = arith.constant 0 : index
    %554 = vector.load %arg18[%c1_226, %c0_227, %c0_228] : memref<2x32x64xf32, #tpu.memory_space<vmem>>, vector<1x32x64xf32>
    %555 = vector.shape_cast %554 : vector<1x32x64xf32> to vector<32x64xf32>
    %cst_229 = arith.constant dense<0.000000e+00> : vector<8x64xf32>
    %556 = tpu.matmul %553, %555, %cst_229 {dimension_numbers = #tpu.dot_dimension_numbers<[1], [0], [0], [1], [0, 0, 1, 1], [], []>} : vector<8x32xf32>, vector<32x64xf32>, vector<8x64xf32> -> vector<8x64xf32>
    %c1_230 = arith.constant 1 : index
    %c0_231 = arith.constant 0 : index
    %c0_232 = arith.constant 0 : index
    %557 = vector.load %arg19[%c1_230, %c0_231, %c0_232] : memref<2x1x64xf32, #tpu.memory_space<vmem>>, vector<1x1x64xf32>
    %558 = vector.shape_cast %557 : vector<1x1x64xf32> to vector<1x64xf32>
    %559 = vector.broadcast %558 : vector<1x64xf32> to vector<8x64xf32>
    %560 = arith.addf %556, %559 : vector<8x64xf32>
    %cst_233 = arith.constant 0.000000e+00 : f32
    %561 = vector.broadcast %cst_233 : f32 to vector<8x64xf32>
    %562 = arith.maximumf %560, %561 : vector<8x64xf32>
    %c1_234 = arith.constant 1 : index
    %c0_235 = arith.constant 0 : index
    %c0_236 = arith.constant 0 : index
    %563 = vector.load %arg20[%c1_234, %c0_235, %c0_236] : memref<2x64x32xf32, #tpu.memory_space<vmem>>, vector<1x64x32xf32>
    %564 = vector.shape_cast %563 : vector<1x64x32xf32> to vector<64x32xf32>
    %cst_237 = arith.constant dense<0.000000e+00> : vector<8x32xf32>
    %565 = tpu.matmul %562, %564, %cst_237 {dimension_numbers = #tpu.dot_dimension_numbers<[1], [0], [0], [1], [0, 0, 1, 1], [], []>} : vector<8x64xf32>, vector<64x32xf32>, vector<8x32xf32> -> vector<8x32xf32>
    %c1_238 = arith.constant 1 : index
    %c0_239 = arith.constant 0 : index
    %c0_240 = arith.constant 0 : index
    %566 = vector.load %arg21[%c1_238, %c0_239, %c0_240] : memref<2x1x32xf32, #tpu.memory_space<vmem>>, vector<1x1x32xf32>
    %567 = vector.shape_cast %566 : vector<1x1x32xf32> to vector<1x32xf32>
    %568 = vector.broadcast %567 : vector<1x32xf32> to vector<8x32xf32>
    %569 = arith.addf %565, %568 : vector<8x32xf32>
    %570 = arith.addf %553, %569 : vector<8x32xf32>
    %571 = vector.extract_strided_slice %307 {offsets = [2, 0], sizes = [1, 32], strides = [1, 1]} : vector<3x32xf32> to vector<1x32xf32>
    %572 = vector.extract_strided_slice %309 {offsets = [2, 0], sizes = [1, 32], strides = [1, 1]} : vector<3x32xf32> to vector<1x32xf32>
    %cst_241 = arith.constant dense<0.000000e+00> : vector<8xf32>
    %573 = vector.multi_reduction <add>, %570, %cst_241 [1] : vector<8x32xf32> to vector<8xf32>
    %574 = vector.shape_cast %573 : vector<8xf32> to vector<8x1xf32>
    %cst_242 = arith.constant 3.200000e+01 : f32
    %575 = vector.broadcast %cst_242 : f32 to vector<8x1xf32>
    %576 = arith.divf %574, %575 : vector<8x1xf32>
    %577 = vector.broadcast %576 : vector<8x1xf32> to vector<8x32xf32>
    %578 = arith.subf %570, %577 : vector<8x32xf32>
    %579 = arith.mulf %578, %578 : vector<8x32xf32>
    %cst_243 = arith.constant dense<0.000000e+00> : vector<8xf32>
    %580 = vector.multi_reduction <add>, %579, %cst_243 [1] : vector<8x32xf32> to vector<8xf32>
    %581 = vector.shape_cast %580 : vector<8xf32> to vector<8x1xf32>
    %cst_244 = arith.constant 3.200000e+01 : f32
    %582 = vector.broadcast %cst_244 : f32 to vector<8x1xf32>
    %583 = arith.divf %581, %582 : vector<8x1xf32>
    %584 = vector.broadcast %576 : vector<8x1xf32> to vector<8x32xf32>
    %585 = arith.subf %570, %584 : vector<8x32xf32>
    %cst_245 = arith.constant 9.99999974E-6 : f32
    %586 = vector.broadcast %cst_245 : f32 to vector<8x1xf32>
    %587 = arith.addf %583, %586 : vector<8x1xf32>
    %588 = math.rsqrt %587 : vector<8x1xf32>
    %589 = vector.broadcast %588 : vector<8x1xf32> to vector<8x32xf32>
    %590 = arith.mulf %585, %589 : vector<8x32xf32>
    %591 = vector.broadcast %571 : vector<1x32xf32> to vector<8x32xf32>
    %592 = arith.mulf %590, %591 : vector<8x32xf32>
    %593 = vector.broadcast %572 : vector<1x32xf32> to vector<8x32xf32>
    %594 = arith.addf %592, %593 : vector<8x32xf32>
    %c0_246 = arith.constant 0 : index
    %c0_247 = arith.constant 0 : index
    %c0_248 = arith.constant 0 : index
    %595 = vector.load %arg22[%c0_246, %c0_247, %c0_248] : memref<1x8x32xf32, #tpu.memory_space<vmem>>, vector<1x8x32xf32>
    %596 = vector.shape_cast %595 : vector<1x8x32xf32> to vector<8x32xf32>
    %597 = vector.shape_cast %594 : vector<8x32xf32> to vector<1x8x32xf32>
    tpu.vector_store %arg22[%c0_246, %c0_247, %c0_248], %597 {strides = array<i32>} : memref<1x8x32xf32, #tpu.memory_space<vmem>>, vector<1x8x32xf32>,
    return
  }
  func.func @transform_0(%arg0: i32) -> (i32, i32, i32) {
    %c0_i32 = arith.constant 0 : i32
    %c0_i32_0 = arith.constant 0 : i32
    %c0_i32_1 = arith.constant 0 : i32
    return %arg0, %c0_i32, %c0_i32_0 : i32, i32, i32
  }
  func.func @transform_1(%arg0: i32) -> (i32, i32, i32) {
    %c0_i32 = arith.constant 0 : i32
    %c0_i32_0 = arith.constant 0 : i32
    %c0_i32_1 = arith.constant 0 : i32
    return %arg0, %c0_i32, %c0_i32_0 : i32, i32, i32
  }
  func.func @transform_2(%arg0: i32) -> (i32, i32, i32) {
    %c0_i32 = arith.constant 0 : i32
    %c0_i32_0 = arith.constant 0 : i32
    %c0_i32_1 = arith.constant 0 : i32
    return %arg0, %c0_i32, %c0_i32_0 : i32, i32, i32
  }
  func.func @transform_3(%arg0: i32) -> (i32, i32, i32) {
    %c0_i32 = arith.constant 0 : i32
    %c0_i32_0 = arith.constant 0 : i32
    %c0_i32_1 = arith.constant 0 : i32
    return %arg0, %c0_i32, %c0_i32_0 : i32, i32, i32
  }
  func.func @transform_4(%arg0: i32) -> (i32, i32, i32) {
    %c0_i32 = arith.constant 0 : i32
    %c0_i32_0 = arith.constant 0 : i32
    %c0_i32_1 = arith.constant 0 : i32
    return %arg0, %c0_i32, %c0_i32_0 : i32, i32, i32
  }
  func.func @transform_5(%arg0: i32) -> (i32, i32, i32) {
    %c0_i32 = arith.constant 0 : i32
    %c0_i32_0 = arith.constant 0 : i32
    %c0_i32_1 = arith.constant 0 : i32
    %c0_i32_2 = arith.constant 0 : i32
    return %c0_i32, %c0_i32_0, %c0_i32_1 : i32, i32, i32
  }
  func.func @transform_6(%arg0: i32) -> (i32, i32, i32) {
    %c0_i32 = arith.constant 0 : i32
    %c0_i32_0 = arith.constant 0 : i32
    %c0_i32_1 = arith.constant 0 : i32
    %c0_i32_2 = arith.constant 0 : i32
    return %c0_i32, %c0_i32_0, %c0_i32_1 : i32, i32, i32
  }
  func.func @transform_7(%arg0: i32) -> (i32, i32, i32) {
    %c0_i32 = arith.constant 0 : i32
    %c0_i32_0 = arith.constant 0 : i32
    %c0_i32_1 = arith.constant 0 : i32
    %c0_i32_2 = arith.constant 0 : i32
    return %c0_i32, %c0_i32_0, %c0_i32_1 : i32, i32, i32
  }
  func.func @transform_8(%arg0: i32) -> (i32, i32, i32) {
    %c0_i32 = arith.constant 0 : i32
    %c0_i32_0 = arith.constant 0 : i32
    %c0_i32_1 = arith.constant 0 : i32
    %c0_i32_2 = arith.constant 0 : i32
    return %c0_i32, %c0_i32_0, %c0_i32_1 : i32, i32, i32
  }
  func.func @transform_9(%arg0: i32) -> (i32, i32, i32) {
    %c0_i32 = arith.constant 0 : i32
    %c0_i32_0 = arith.constant 0 : i32
    %c0_i32_1 = arith.constant 0 : i32
    %c0_i32_2 = arith.constant 0 : i32
    return %c0_i32, %c0_i32_0, %c0_i32_1 : i32, i32, i32
  }
  func.func @transform_10(%arg0: i32) -> (i32, i32, i32) {
    %c0_i32 = arith.constant 0 : i32
    %c0_i32_0 = arith.constant 0 : i32
    %c0_i32_1 = arith.constant 0 : i32
    %c0_i32_2 = arith.constant 0 : i32
    return %c0_i32, %c0_i32_0, %c0_i32_1 : i32, i32, i32
  }
  func.func @transform_11(%arg0: i32) -> (i32, i32, i32) {
    %c0_i32 = arith.constant 0 : i32
    %c0_i32_0 = arith.constant 0 : i32
    %c0_i32_1 = arith.constant 0 : i32
    %c0_i32_2 = arith.constant 0 : i32
    return %c0_i32, %c0_i32_0, %c0_i32_1 : i32, i32, i32
  }
  func.func @transform_12(%arg0: i32) -> (i32, i32, i32) {
    %c0_i32 = arith.constant 0 : i32
    %c0_i32_0 = arith.constant 0 : i32
    %c0_i32_1 = arith.constant 0 : i32
    %c0_i32_2 = arith.constant 0 : i32
    return %c0_i32, %c0_i32_0, %c0_i32_1 : i32, i32, i32
  }
  func.func @transform_13(%arg0: i32) -> (i32, i32, i32) {
    %c0_i32 = arith.constant 0 : i32
    %c0_i32_0 = arith.constant 0 : i32
    %c0_i32_1 = arith.constant 0 : i32
    %c0_i32_2 = arith.constant 0 : i32
    return %c0_i32, %c0_i32_0, %c0_i32_1 : i32, i32, i32
  }
  func.func @transform_14(%arg0: i32) -> (i32, i32, i32) {
    %c0_i32 = arith.constant 0 : i32
    %c0_i32_0 = arith.constant 0 : i32
    %c0_i32_1 = arith.constant 0 : i32
    %c0_i32_2 = arith.constant 0 : i32
    return %c0_i32, %c0_i32_0, %c0_i32_1 : i32, i32, i32
  }
  func.func @transform_15(%arg0: i32) -> (i32, i32, i32) {
    %c0_i32 = arith.constant 0 : i32
    %c0_i32_0 = arith.constant 0 : i32
    %c0_i32_1 = arith.constant 0 : i32
    %c0_i32_2 = arith.constant 0 : i32
    return %c0_i32, %c0_i32_0, %c0_i32_1 : i32, i32, i32
  }
  func.func @transform_16(%arg0: i32) -> (i32, i32, i32) {
    %c0_i32 = arith.constant 0 : i32
    %c0_i32_0 = arith.constant 0 : i32
    %c0_i32_1 = arith.constant 0 : i32
    %c0_i32_2 = arith.constant 0 : i32
    return %c0_i32, %c0_i32_0, %c0_i32_1 : i32, i32, i32
  }
  func.func @transform_17(%arg0: i32) -> (i32, i32, i32) {
    %c0_i32 = arith.constant 0 : i32
    %c0_i32_0 = arith.constant 0 : i32
    %c0_i32_1 = arith.constant 0 : i32
    %c0_i32_2 = arith.constant 0 : i32
    return %c0_i32, %c0_i32_0, %c0_i32_1 : i32, i32, i32
  }
  func.func @transform_18(%arg0: i32) -> (i32, i32, i32) {
    %c0_i32 = arith.constant 0 : i32
    %c0_i32_0 = arith.constant 0 : i32
    %c0_i32_1 = arith.constant 0 : i32
    %c0_i32_2 = arith.constant 0 : i32
    return %c0_i32, %c0_i32_0, %c0_i32_1 : i32, i32, i32
  }
  func.func @transform_19(%arg0: i32) -> (i32, i32, i32) {
    %c0_i32 = arith.constant 0 : i32
    %c0_i32_0 = arith.constant 0 : i32
    %c0_i32_1 = arith.constant 0 : i32
    %c0_i32_2 = arith.constant 0 : i32
    return %c0_i32, %c0_i32_0, %c0_i32_1 : i32, i32, i32
  }
  func.func @transform_20(%arg0: i32) -> (i32, i32, i32) {
    %c0_i32 = arith.constant 0 : i32
    %c0_i32_0 = arith.constant 0 : i32
    %c0_i32_1 = arith.constant 0 : i32
    %c0_i32_2 = arith.constant 0 : i32
    return %c0_i32, %c0_i32_0, %c0_i32_1 : i32, i32, i32
  }
  func.func @transform_21(%arg0: i32) -> (i32, i32, i32) {
    %c0_i32 = arith.constant 0 : i32
    %c0_i32_0 = arith.constant 0 : i32
    %c0_i32_1 = arith.constant 0 : i32
    return %arg0, %c0_i32, %c0_i32_0 : i32, i32, i32
  }
  func.func @transform_22(%arg0: i32) -> (i32, i32, i32) {
    %c0_i32 = arith.constant 0 : i32
    %c0_i32_0 = arith.constant 0 : i32
    %c0_i32_1 = arith.constant 0 : i32
    return %arg0, %c0_i32, %c0_i32_0 : i32, i32, i32
  }
  func.func @transform_23(%arg0: i32) -> (i32, i32, i32) {
    %c0_i32 = arith.constant 0 : i32
    %c0_i32_0 = arith.constant 0 : i32
    %c0_i32_1 = arith.constant 0 : i32
    return %arg0, %c0_i32, %c0_i32_0 : i32, i32, i32
  }
}

</mosaic_0001>

<llo_original>
// kernel: self_att_decoder_forward.1
$region0: #{self_att_decoder_forward.1}
  #allocation0 [shape = 'u32[]', space=smem, size = 0x4, offset = 0x4, fixed_abs, tag = 'smem constant byte address 0x4 - core index']
  #allocation1 [shape = 'u32[72,128]{1,0:T(1,128)}', space=vmem, size = 0x9000, scoped, tag = 'internal scratch']
  %s0 = inlined_call_operand.vmem [shape: f32[2,8,32], index: 0, kind: input, shape index: {}]
  %s1 = inlined_call_operand.vmem [shape: f32[2,10,32], index: 1, kind: input, shape index: {}]
  %s2 = inlined_call_operand.vmem [shape: f32[2,1,8], index: 2, kind: input, shape index: {}]
  %s3 = inlined_call_operand.vmem [shape: f32[2,1,10], index: 3, kind: input, shape index: {}]
  %s4 = inlined_call_operand.vmem [shape: f32[2,8,1], index: 4, kind: input, shape index: {}]
  %s5 = inlined_call_operand.vmem [shape: f32[2,3,32], index: 5, kind: input, shape index: {}]
  %s6 = inlined_call_operand.vmem [shape: f32[2,3,32], index: 6, kind: input, shape index: {}]
  %s7 = inlined_call_operand.vmem [shape: f32[2,32,96], index: 7, kind: input, shape index: {}]
  %s8 = inlined_call_operand.vmem [shape: f32[2,1,96], index: 8, kind: input, shape index: {}]
  %s9 = inlined_call_operand.vmem [shape: f32[2,32,32], index: 9, kind: input, shape index: {}]
  %s10 = inlined_call_operand.vmem [shape: f32[2,1,32], index: 10, kind: input, shape index: {}]
  %s11 = inlined_call_operand.vmem [shape: f32[2,32,64], index: 11, kind: input, shape index: {}]
  %s12 = inlined_call_operand.vmem [shape: f32[2,1,64], index: 12, kind: input, shape index: {}]
  %s13 = inlined_call_operand.vmem [shape: f32[2,32,32], index: 13, kind: input, shape index: {}]
  %s14 = inlined_call_operand.vmem [shape: f32[2,1,32], index: 14, kind: input, shape index: {}]
  %s15 = inlined_call_operand.vmem [shape: f32[2,32,32], index: 15, kind: input, shape index: {}]
  %s16 = inlined_call_operand.vmem [shape: f32[2,1,32], index: 16, kind: input, shape index: {}]
  %s17 = inlined_call_operand.vmem [shape: f32[2,32,64], index: 17, kind: input, shape index: {}]
  %s18 = inlined_call_operand.vmem [shape: f32[2,1,64], index: 18, kind: input, shape index: {}]
  %s19 = inlined_call_operand.vmem [shape: f32[2,64,32], index: 19, kind: input, shape index: {}]
  %s20 = inlined_call_operand.vmem [shape: f32[2,1,32], index: 20, kind: input, shape index: {}]
  %s21 = inlined_call_operand.hbm [shape: f32[2,8,32], index: 21, kind: output, shape index: {0}]
  %s22 = inlined_call_operand.vmem [shape: f32[2,8,32], index: 22, kind: output, shape index: {1}]
  %s23 = inlined_call_operand.vmem [shape: f32[2,8,40], index: 23, kind: output, shape index: {2}]
  %24 = xla_tuple %s21, %s22, %s23
  %s25 = sld [smem:[#allocation0]]
  $region133: #{self_att_decoder_forward.1} parent=0
    _
  %s27 = ssub.s32 1, %s25
  %s28 = scalar_select 0, %s27, %s25
  $region1: #{self_att_decoder_forward.1} parent=0
    #allocation2 [shape = 'u8[8192]{0}', space=vmem, size = 0x2000, scoped, tag = 'output window, operand 0']
    #allocation3 [shape = 's32[2]{0}', space=sflag, size = 0x8, scoped, tag = 'scoped memory for self_att_decoder_forward.1']
    %29 = vsyncpa [#allocation3], 0
    %s30 = scalar_lea.sflag [#allocation3], 1
    %31 = vsyncpa %s30, 0
    loop: start=0, step=1, limit=4
    $region2: #{self_att_decoder_forward.1} parent=1 // loop_pre_header
      _
    $region3: #{self_att_decoder_forward.1} parent=1 // loop_header
      %s33 = sphi 0, %s37
      %p34 = scmp.ge.s32.totalorder %s33, 4
      %s43 = sphi 0, %s45
      %s46 = sphi 0, %s43
      %s47 = sphi 0, %s46
      %s63 = sphi 0, %s47
      %s69 = sphi 0, %s71
      %s72 = sphi 0, %s69
      %s73 = sphi 0, %s72
      %s89 = sphi 0, %s73
      %s95 = sphi 0, %s97
      %s98 = sphi 0, %s95
      %s99 = sphi 0, %s98
      %s115 = sphi 0, %s99
      %s121 = sphi 0, %s123
      %s124 = sphi 0, %s121
      %s125 = sphi 0, %s124
      %s141 = sphi 0, %s125
      %s147 = sphi 0, %s149
      %s150 = sphi 0, %s147
      %s151 = sphi 0, %s150
      %s167 = sphi 0, %s151
      %s171 = sphi 0, %s171
      %s173 = sphi 0, %s171
      %s174 = sphi 0, %s173
      %s188 = sphi 0, %s174
      %s192 = sphi 0, %s192
      %s194 = sphi 0, %s192
      %s195 = sphi 0, %s194
      %s209 = sphi 0, %s195
      %s213 = sphi 0, %s213
      %s215 = sphi 0, %s213
      %s216 = sphi 0, %s215
      %s230 = sphi 0, %s216
      %s234 = sphi 0, %s234
      %s236 = sphi 0, %s234
      %s237 = sphi 0, %s236
      %s251 = sphi 0, %s237
      %s255 = sphi 0, %s255
      %s257 = sphi 0, %s255
      %s258 = sphi 0, %s257
      %s272 = sphi 0, %s258
      %s276 = sphi 0, %s276
      %s278 = sphi 0, %s276
      %s279 = sphi 0, %s278
      %s293 = sphi 0, %s279
      %s297 = sphi 0, %s297
      %s299 = sphi 0, %s297
      %s300 = sphi 0, %s299
      %s314 = sphi 0, %s300
      %s318 = sphi 0, %s318
      %s320 = sphi 0, %s318
      %s321 = sphi 0, %s320
      %s335 = sphi 0, %s321
      %s339 = sphi 0, %s339
      %s341 = sphi 0, %s339
      %s342 = sphi 0, %s341
      %s356 = sphi 0, %s342
      %s360 = sphi 0, %s360
      %s362 = sphi 0, %s360
      %s363 = sphi 0, %s362
      %s377 = sphi 0, %s363
      %s381 = sphi 0, %s381
      %s383 = sphi 0, %s381
      %s384 = sphi 0, %s383
      %s398 = sphi 0, %s384
      %s402 = sphi 0, %s402
      %s404 = sphi 0, %s402
      %s405 = sphi 0, %s404
      %s419 = sphi 0, %s405
      %s423 = sphi 0, %s423
      %s425 = sphi 0, %s423
      %s426 = sphi 0, %s425
      %s440 = sphi 0, %s426
      %s444 = sphi 0, %s444
      %s446 = sphi 0, %s444
      %s447 = sphi 0, %s446
      %s461 = sphi 0, %s447
      %s465 = sphi 0, %s465
      %s467 = sphi 0, %s465
      %s468 = sphi 0, %s467
      %s482 = sphi 0, %s468
      %s486 = sphi 0, %s486
      %s488 = sphi 0, %s486
      %s489 = sphi 0, %s488
      %s503 = sphi 0, %s489
      %s509 = sphi 0, %s511
      %s512 = sphi 0, %s509
      %s513 = sphi 0, %s512
      %s529 = sphi 0, %s513
      %s535 = sphi 0, %s537
      %s538 = sphi 0, %s535
      %s539 = sphi 0, %s538
      %s555 = sphi 0, %s539
      %s561 = sphi 0, %s563
      %s564 = sphi 0, %s561
      %s565 = sphi 0, %s564
      %s581 = sphi 0, %s565
    $region4: #{self_att_decoder_forward.1} parent=1 // loop_header_branch
      %36 = sbr.rel (%p34) target = $region8
    $region5: #{self_att_decoder_forward.1} parent=1 // loop_body
      %s38 = ssub.s32 %s33, 1
      %s39 = ssub.s32 %s33, 2
      %s40 = sadd.s32 %s33, 1
      %s41 = ssub.s32 %s33, %s40
      %p42 = scmp.eq.s32.totalorder %s41, 0
      %s44 = sadd.s32 %s43, 1
      %s45 = scalar_select %p42, %s43, %s44
      %p48 = pneg %p42
      %p49 = scmp.eq.s32.totalorder %s33, 1
      %p50 = por %p48, %p49
      %p51 = scmp.ne.s32.totalorder %s43, %s46
      %p52 = scmp.eq.s32.totalorder %s33, 0
      %p53 = por %p51, %p52
      %p54 = scmp.ne.s32.totalorder %s43, %s46
      %p55 = scmp.eq.s32.totalorder %s38, 1
      %p56 = por %p54, %p55
      %p57 = scmp.ne.s32.totalorder %s46, %s47
      %p58 = scmp.eq.s32.totalorder %s38, 0
      %p59 = por %p57, %p58
      %p60 = scmp.ne.s32.totalorder %s46, %s47
      %p61 = scmp.eq.s32.totalorder %s39, 1
      %p62 = por %p60, %p61
      %p64 = scmp.ne.s32.totalorder %s47, %s63
      %p65 = scmp.eq.s32.totalorder %s39, 0
      %p66 = por %p64, %p65
      %s67 = ssub.s32 %s33, %s40
      %p68 = scmp.eq.s32.totalorder %s67, 0
      %s70 = sadd.s32 %s69, 1
      %s71 = scalar_select %p68, %s69, %s70
      %p74 = pneg %p68
      %p75 = scmp.eq.s32.totalorder %s33, 1
      %p76 = por %p74, %p75
      %p77 = scmp.ne.s32.totalorder %s69, %s72
      %p78 = scmp.eq.s32.totalorder %s33, 0
      %p79 = por %p77, %p78
      %p80 = scmp.ne.s32.totalorder %s69, %s72
      %p81 = scmp.eq.s32.totalorder %s38, 1
      %p82 = por %p80, %p81
      %p83 = scmp.ne.s32.totalorder %s72, %s73
      %p84 = scmp.eq.s32.totalorder %s38, 0
      %p85 = por %p83, %p84
      %p86 = scmp.ne.s32.totalorder %s72, %s73
      %p87 = scmp.eq.s32.totalorder %s39, 1
      %p88 = por %p86, %p87
      %p90 = scmp.ne.s32.totalorder %s73, %s89
      %p91 = scmp.eq.s32.totalorder %s39, 0
      %p92 = por %p90, %p91
      %s93 = ssub.s32 %s33, %s40
      %p94 = scmp.eq.s32.totalorder %s93, 0
      %s96 = sadd.s32 %s95, 1
      %s97 = scalar_select %p94, %s95, %s96
      %p100 = pneg %p94
      %p101 = scmp.eq.s32.totalorder %s33, 1
      %p102 = por %p100, %p101
      %p103 = scmp.ne.s32.totalorder %s95, %s98
      %p104 = scmp.eq.s32.totalorder %s33, 0
      %p105 = por %p103, %p104
      %p106 = scmp.ne.s32.totalorder %s95, %s98
      %p107 = scmp.eq.s32.totalorder %s38, 1
      %p108 = por %p106, %p107
      %p109 = scmp.ne.s32.totalorder %s98, %s99
      %p110 = scmp.eq.s32.totalorder %s38, 0
      %p111 = por %p109, %p110
      %p112 = scmp.ne.s32.totalorder %s98, %s99
      %p113 = scmp.eq.s32.totalorder %s39, 1
      %p114 = por %p112, %p113
      %p116 = scmp.ne.s32.totalorder %s99, %s115
      %p117 = scmp.eq.s32.totalorder %s39, 0
      %p118 = por %p116, %p117
      %s119 = ssub.s32 %s33, %s40
      %p120 = scmp.eq.s32.totalorder %s119, 0
      %s122 = sadd.s32 %s121, 1
      %s123 = scalar_select %p120, %s121, %s122
      %p126 = pneg %p120
      %p127 = scmp.eq.s32.totalorder %s33, 1
      %p128 = por %p126, %p127
      %p129 = scmp.ne.s32.totalorder %s121, %s124
      %p130 = scmp.eq.s32.totalorder %s33, 0
      %p131 = por %p129, %p130
      %p132 = scmp.ne.s32.totalorder %s121, %s124
      %p133 = scmp.eq.s32.totalorder %s38, 1
      %p134 = por %p132, %p133
      %p135 = scmp.ne.s32.totalorder %s124, %s125
      %p136 = scmp.eq.s32.totalorder %s38, 0
      %p137 = por %p135, %p136
      %p138 = scmp.ne.s32.totalorder %s124, %s125
      %p139 = scmp.eq.s32.totalorder %s39, 1
      %p140 = por %p138, %p139
      %p142 = scmp.ne.s32.totalorder %s125, %s141
      %p143 = scmp.eq.s32.totalorder %s39, 0
      %p144 = por %p142, %p143
      %s145 = ssub.s32 %s33, %s40
      %p146 = scmp.eq.s32.totalorder %s145, 0
      %s148 = sadd.s32 %s147, 1
      %s149 = scalar_select %p146, %s147, %s148
      %p152 = pneg %p146
      %p153 = scmp.eq.s32.totalorder %s33, 1
      %p154 = por %p152, %p153
      %p155 = scmp.ne.s32.totalorder %s147, %s150
      %p156 = scmp.eq.s32.totalorder %s33, 0
      %p157 = por %p155, %p156
      %p158 = scmp.ne.s32.totalorder %s147, %s150
      %p159 = scmp.eq.s32.totalorder %s38, 1
      %p160 = por %p158, %p159
      %p161 = scmp.ne.s32.totalorder %s150, %s151
      %p162 = scmp.eq.s32.totalorder %s38, 0
      %p163 = por %p161, %p162
      %p164 = scmp.ne.s32.totalorder %s150, %s151
      %p165 = scmp.eq.s32.totalorder %s39, 1
      %p166 = por %p164, %p165
      %p168 = scmp.ne.s32.totalorder %s151, %s167
      %p169 = scmp.eq.s32.totalorder %s39, 0
      %p170 = por %p168, %p169
      %s172 = sadd.s32 %s171, 1
      %p175 = scmp.eq.s32.totalorder %s33, 1
      %p176 = scmp.ne.s32.totalorder %s171, %s173
      %p177 = scmp.eq.s32.totalorder %s33, 0
      %p178 = por %p176, %p177
      %p179 = scmp.ne.s32.totalorder %s171, %s173
      %p180 = scmp.eq.s32.totalorder %s38, 1
      %p181 = por %p179, %p180
      %p182 = scmp.ne.s32.totalorder %s173, %s174
      %p183 = scmp.eq.s32.totalorder %s38, 0
      %p184 = por %p182, %p183
      %p185 = scmp.ne.s32.totalorder %s173, %s174
      %p186 = scmp.eq.s32.totalorder %s39, 1
      %p187 = por %p185, %p186
      %p189 = scmp.ne.s32.totalorder %s174, %s188
      %p190 = scmp.eq.s32.totalorder %s39, 0
      %p191 = por %p189, %p190
      %s193 = sadd.s32 %s192, 1
      %p196 = scmp.eq.s32.totalorder %s33, 1
      %p197 = scmp.ne.s32.totalorder %s192, %s194
      %p198 = scmp.eq.s32.totalorder %s33, 0
      %p199 = por %p197, %p198
      %p200 = scmp.ne.s32.totalorder %s192, %s194
      %p201 = scmp.eq.s32.totalorder %s38, 1
      %p202 = por %p200, %p201
      %p203 = scmp.ne.s32.totalorder %s194, %s195
      %p204 = scmp.eq.s32.totalorder %s38, 0
      %p205 = por %p203, %p204
      %p206 = scmp.ne.s32.totalorder %s194, %s195
      %p207 = scmp.eq.s32.totalorder %s39, 1
      %p208 = por %p206, %p207
      %p210 = scmp.ne.s32.totalorder %s195, %s209
      %p211 = scmp.eq.s32.totalorder %s39, 0
      %p212 = por %p210, %p211
      %s214 = sadd.s32 %s213, 1
      %p217 = scmp.eq.s32.totalorder %s33, 1
      %p218 = scmp.ne.s32.totalorder %s213, %s215
      %p219 = scmp.eq.s32.totalorder %s33, 0
      %p220 = por %p218, %p219
      %p221 = scmp.ne.s32.totalorder %s213, %s215
      %p222 = scmp.eq.s32.totalorder %s38, 1
      %p223 = por %p221, %p222
      %p224 = scmp.ne.s32.totalorder %s215, %s216
      %p225 = scmp.eq.s32.totalorder %s38, 0
      %p226 = por %p224, %p225
      %p227 = scmp.ne.s32.totalorder %s215, %s216
      %p228 = scmp.eq.s32.totalorder %s39, 1
      %p229 = por %p227, %p228
      %p231 = scmp.ne.s32.totalorder %s216, %s230
      %p232 = scmp.eq.s32.totalorder %s39, 0
      %p233 = por %p231, %p232
      %s235 = sadd.s32 %s234, 1
      %p238 = scmp.eq.s32.totalorder %s33, 1
      %p239 = scmp.ne.s32.totalorder %s234, %s236
      %p240 = scmp.eq.s32.totalorder %s33, 0
      %p241 = por %p239, %p240
      %p242 = scmp.ne.s32.totalorder %s234, %s236
      %p243 = scmp.eq.s32.totalorder %s38, 1
      %p244 = por %p242, %p243
      %p245 = scmp.ne.s32.totalorder %s236, %s237
      %p246 = scmp.eq.s32.totalorder %s38, 0
      %p247 = por %p245, %p246
      %p248 = scmp.ne.s32.totalorder %s236, %s237
      %p249 = scmp.eq.s32.totalorder %s39, 1
      %p250 = por %p248, %p249
      %p252 = scmp.ne.s32.totalorder %s237, %s251
      %p253 = scmp.eq.s32.totalorder %s39, 0
      %p254 = por %p252, %p253
      %s256 = sadd.s32 %s255, 1
      %p259 = scmp.eq.s32.totalorder %s33, 1
      %p260 = scmp.ne.s32.totalorder %s255, %s257
      %p261 = scmp.eq.s32.totalorder %s33, 0
      %p262 = por %p260, %p261
      %p263 = scmp.ne.s32.totalorder %s255, %s257
      %p264 = scmp.eq.s32.totalorder %s38, 1
      %p265 = por %p263, %p264
      %p266 = scmp.ne.s32.totalorder %s257, %s258
      %p267 = scmp.eq.s32.totalorder %s38, 0
      %p268 = por %p266, %p267
      %p269 = scmp.ne.s32.totalorder %s257, %s258
      %p270 = scmp.eq.s32.totalorder %s39, 1
      %p271 = por %p269, %p270
      %p273 = scmp.ne.s32.totalorder %s258, %s272
      %p274 = scmp.eq.s32.totalorder %s39, 0
      %p275 = por %p273, %p274
      %s277 = sadd.s32 %s276, 1
      %p280 = scmp.eq.s32.totalorder %s33, 1
      %p281 = scmp.ne.s32.totalorder %s276, %s278
      %p282 = scmp.eq.s32.totalorder %s33, 0
      %p283 = por %p281, %p282
      %p284 = scmp.ne.s32.totalorder %s276, %s278
      %p285 = scmp.eq.s32.totalorder %s38, 1
      %p286 = por %p284, %p285
      %p287 = scmp.ne.s32.totalorder %s278, %s279
      %p288 = scmp.eq.s32.totalorder %s38, 0
      %p289 = por %p287, %p288
      %p290 = scmp.ne.s32.totalorder %s278, %s279
      %p291 = scmp.eq.s32.totalorder %s39, 1
      %p292 = por %p290, %p291
      %p294 = scmp.ne.s32.totalorder %s279, %s293
      %p295 = scmp.eq.s32.totalorder %s39, 0
      %p296 = por %p294, %p295
      %s298 = sadd.s32 %s297, 1
      %p301 = scmp.eq.s32.totalorder %s33, 1
      %p302 = scmp.ne.s32.totalorder %s297, %s299
      %p303 = scmp.eq.s32.totalorder %s33, 0
      %p304 = por %p302, %p303
      %p305 = scmp.ne.s32.totalorder %s297, %s299
      %p306 = scmp.eq.s32.totalorder %s38, 1
      %p307 = por %p305, %p306
      %p308 = scmp.ne.s32.totalorder %s299, %s300
      %p309 = scmp.eq.s32.totalorder %s38, 0
      %p310 = por %p308, %p309
      %p311 = scmp.ne.s32.totalorder %s299, %s300
      %p312 = scmp.eq.s32.totalorder %s39, 1
      %p313 = por %p311, %p312
      %p315 = scmp.ne.s32.totalorder %s300, %s314
      %p316 = scmp.eq.s32.totalorder %s39, 0
      %p317 = por %p315, %p316
      %s319 = sadd.s32 %s318, 1
      %p322 = scmp.eq.s32.totalorder %s33, 1
      %p323 = scmp.ne.s32.totalorder %s318, %s320
      %p324 = scmp.eq.s32.totalorder %s33, 0
      %p325 = por %p323, %p324
      %p326 = scmp.ne.s32.totalorder %s318, %s320
      %p327 = scmp.eq.s32.totalorder %s38, 1
      %p328 = por %p326, %p327
      %p329 = scmp.ne.s32.totalorder %s320, %s321
      %p330 = scmp.eq.s32.totalorder %s38, 0
      %p331 = por %p329, %p330
      %p332 = scmp.ne.s32.totalorder %s320, %s321
      %p333 = scmp.eq.s32.totalorder %s39, 1
      %p334 = por %p332, %p333
      %p336 = scmp.ne.s32.totalorder %s321, %s335
      %p337 = scmp.eq.s32.totalorder %s39, 0
      %p338 = por %p336, %p337
      %s340 = sadd.s32 %s339, 1
      %p343 = scmp.eq.s32.totalorder %s33, 1
      %p344 = scmp.ne.s32.totalorder %s339, %s341
      %p345 = scmp.eq.s32.totalorder %s33, 0
      %p346 = por %p344, %p345
      %p347 = scmp.ne.s32.totalorder %s339, %s341
      %p348 = scmp.eq.s32.totalorder %s38, 1
      %p349 = por %p347, %p348
      %p350 = scmp.ne.s32.totalorder %s341, %s342
      %p351 = scmp.eq.s32.totalorder %s38, 0
      %p352 = por %p350, %p351
      %p353 = scmp.ne.s32.totalorder %s341, %s342
      %p354 = scmp.eq.s32.totalorder %s39, 1
      %p355 = por %p353, %p354
      %p357 = scmp.ne.s32.totalorder %s342, %s356
      %p358 = scmp.eq.s32.totalorder %s39, 0
      %p359 = por %p357, %p358
      %s361 = sadd.s32 %s360, 1
      %p364 = scmp.eq.s32.totalorder %s33, 1
      %p365 = scmp.ne.s32.totalorder %s360, %s362
      %p366 = scmp.eq.s32.totalorder %s33, 0
      %p367 = por %p365, %p366
      %p368 = scmp.ne.s32.totalorder %s360, %s362
      %p369 = scmp.eq.s32.totalorder %s38, 1
      %p370 = por %p368, %p369
      %p371 = scmp.ne.s32.totalorder %s362, %s363
      %p372 = scmp.eq.s32.totalorder %s38, 0
      %p373 = por %p371, %p372
      %p374 = scmp.ne.s32.totalorder %s362, %s363
      %p375 = scmp.eq.s32.totalorder %s39, 1
      %p376 = por %p374, %p375
      %p378 = scmp.ne.s32.totalorder %s363, %s377
      %p379 = scmp.eq.s32.totalorder %s39, 0
      %p380 = por %p378, %p379
      %s382 = sadd.s32 %s381, 1
      %p385 = scmp.eq.s32.totalorder %s33, 1
      %p386 = scmp.ne.s32.totalorder %s381, %s383
      %p387 = scmp.eq.s32.totalorder %s33, 0
      %p388 = por %p386, %p387
      %p389 = scmp.ne.s32.totalorder %s381, %s383
      %p390 = scmp.eq.s32.totalorder %s38, 1
      %p391 = por %p389, %p390
      %p392 = scmp.ne.s32.totalorder %s383, %s384
      %p393 = scmp.eq.s32.totalorder %s38, 0
      %p394 = por %p392, %p393
      %p395 = scmp.ne.s32.totalorder %s383, %s384
      %p396 = scmp.eq.s32.totalorder %s39, 1
      %p397 = por %p395, %p396
      %p399 = scmp.ne.s32.totalorder %s384, %s398
      %p400 = scmp.eq.s32.totalorder %s39, 0
      %p401 = por %p399, %p400
      %s403 = sadd.s32 %s402, 1
      %p406 = scmp.eq.s32.totalorder %s33, 1
      %p407 = scmp.ne.s32.totalorder %s402, %s404
      %p408 = scmp.eq.s32.totalorder %s33, 0
      %p409 = por %p407, %p408
      %p410 = scmp.ne.s32.totalorder %s402, %s404
      %p411 = scmp.eq.s32.totalorder %s38, 1
      %p412 = por %p410, %p411
      %p413 = scmp.ne.s32.totalorder %s404, %s405
      %p414 = scmp.eq.s32.totalorder %s38, 0
      %p415 = por %p413, %p414
      %p416 = scmp.ne.s32.totalorder %s404, %s405
      %p417 = scmp.eq.s32.totalorder %s39, 1
      %p418 = por %p416, %p417
      %p420 = scmp.ne.s32.totalorder %s405, %s419
      %p421 = scmp.eq.s32.totalorder %s39, 0
      %p422 = por %p420, %p421
      %s424 = sadd.s32 %s423, 1
      %p427 = scmp.eq.s32.totalorder %s33, 1
      %p428 = scmp.ne.s32.totalorder %s423, %s425
      %p429 = scmp.eq.s32.totalorder %s33, 0
      %p430 = por %p428, %p429
      %p431 = scmp.ne.s32.totalorder %s423, %s425
      %p432 = scmp.eq.s32.totalorder %s38, 1
      %p433 = por %p431, %p432
      %p434 = scmp.ne.s32.totalorder %s425, %s426
      %p435 = scmp.eq.s32.totalorder %s38, 0
      %p436 = por %p434, %p435
      %p437 = scmp.ne.s32.totalorder %s425, %s426
      %p438 = scmp.eq.s32.totalorder %s39, 1
      %p439 = por %p437, %p438
      %p441 = scmp.ne.s32.totalorder %s426, %s440
      %p442 = scmp.eq.s32.totalorder %s39, 0
      %p443 = por %p441, %p442
      %s445 = sadd.s32 %s444, 1
      %p448 = scmp.eq.s32.totalorder %s33, 1
      %p449 = scmp.ne.s32.totalorder %s444, %s446
      %p450 = scmp.eq.s32.totalorder %s33, 0
      %p451 = por %p449, %p450
      %p452 = scmp.ne.s32.totalorder %s444, %s446
      %p453 = scmp.eq.s32.totalorder %s38, 1
      %p454 = por %p452, %p453
      %p455 = scmp.ne.s32.totalorder %s446, %s447
      %p456 = scmp.eq.s32.totalorder %s38, 0
      %p457 = por %p455, %p456
      %p458 = scmp.ne.s32.totalorder %s446, %s447
      %p459 = scmp.eq.s32.totalorder %s39, 1
      %p460 = por %p458, %p459
      %p462 = scmp.ne.s32.totalorder %s447, %s461
      %p463 = scmp.eq.s32.totalorder %s39, 0
      %p464 = por %p462, %p463
      %s466 = sadd.s32 %s465, 1
      %p469 = scmp.eq.s32.totalorder %s33, 1
      %p470 = scmp.ne.s32.totalorder %s465, %s467
      %p471 = scmp.eq.s32.totalorder %s33, 0
      %p472 = por %p470, %p471
      %p473 = scmp.ne.s32.totalorder %s465, %s467
      %p474 = scmp.eq.s32.totalorder %s38, 1
      %p475 = por %p473, %p474
      %p476 = scmp.ne.s32.totalorder %s467, %s468
      %p477 = scmp.eq.s32.totalorder %s38, 0
      %p478 = por %p476, %p477
      %p479 = scmp.ne.s32.totalorder %s467, %s468
      %p480 = scmp.eq.s32.totalorder %s39, 1
      %p481 = por %p479, %p480
      %p483 = scmp.ne.s32.totalorder %s468, %s482
      %p484 = scmp.eq.s32.totalorder %s39, 0
      %p485 = por %p483, %p484
      %s487 = sadd.s32 %s486, 1
      %p490 = scmp.eq.s32.totalorder %s33, 1
      %p491 = scmp.ne.s32.totalorder %s486, %s488
      %p492 = scmp.eq.s32.totalorder %s33, 0
      %p493 = por %p491, %p492
      %p494 = scmp.ne.s32.totalorder %s486, %s488
      %p495 = scmp.eq.s32.totalorder %s38, 1
      %p496 = por %p494, %p495
      %p497 = scmp.ne.s32.totalorder %s488, %s489
      %p498 = scmp.eq.s32.totalorder %s38, 0
      %p499 = por %p497, %p498
      %p500 = scmp.ne.s32.totalorder %s488, %s489
      %p501 = scmp.eq.s32.totalorder %s39, 1
      %p502 = por %p500, %p501
      %p504 = scmp.ne.s32.totalorder %s489, %s503
      %p505 = scmp.eq.s32.totalorder %s39, 0
      %p506 = por %p504, %p505
      %s507 = ssub.s32 %s33, %s40
      %p508 = scmp.eq.s32.totalorder %s507, 0
      %s510 = sadd.s32 %s509, 1
      %s511 = scalar_select %p508, %s509, %s510
      %p514 = pneg %p508
      %p515 = scmp.eq.s32.totalorder %s33, 1
      %p516 = por %p514, %p515
      %p517 = scmp.ne.s32.totalorder %s509, %s512
      %p518 = scmp.eq.s32.totalorder %s33, 0
      %p519 = por %p517, %p518
      %p520 = scmp.ne.s32.totalorder %s509, %s512
      %p521 = scmp.eq.s32.totalorder %s38, 1
      %p522 = por %p520, %p521
      %p523 = scmp.ne.s32.totalorder %s512, %s513
      %p524 = scmp.eq.s32.totalorder %s38, 0
      %p525 = por %p523, %p524
      %p526 = scmp.ne.s32.totalorder %s512, %s513
      %p527 = scmp.eq.s32.totalorder %s39, 1
      %p528 = por %p526, %p527
      %p530 = scmp.ne.s32.totalorder %s513, %s529
      %p531 = scmp.eq.s32.totalorder %s39, 0
      %p532 = por %p530, %p531
      %s533 = ssub.s32 %s33, %s40
      %p534 = scmp.eq.s32.totalorder %s533, 0
      %s536 = sadd.s32 %s535, 1
      %s537 = scalar_select %p534, %s535, %s536
      %p540 = pneg %p534
      %p541 = scmp.eq.s32.totalorder %s33, 1
      %p542 = por %p540, %p541
      %p543 = scmp.ne.s32.totalorder %s535, %s538
      %p544 = scmp.eq.s32.totalorder %s33, 0
      %p545 = por %p543, %p544
      %p546 = scmp.ne.s32.totalorder %s535, %s538
      %p547 = scmp.eq.s32.totalorder %s38, 1
      %p548 = por %p546, %p547
      %p549 = scmp.ne.s32.totalorder %s538, %s539
      %p550 = scmp.eq.s32.totalorder %s38, 0
      %p551 = por %p549, %p550
      %p552 = scmp.ne.s32.totalorder %s538, %s539
      %p553 = scmp.eq.s32.totalorder %s39, 1
      %p554 = por %p552, %p553
      %p556 = scmp.ne.s32.totalorder %s539, %s555
      %p557 = scmp.eq.s32.totalorder %s39, 0
      %p558 = por %p556, %p557
      %s559 = ssub.s32 %s33, %s40
      %p560 = scmp.eq.s32.totalorder %s559, 0
      %s562 = sadd.s32 %s561, 1
      %s563 = scalar_select %p560, %s561, %s562
      %p566 = pneg %p560
      %p567 = scmp.eq.s32.totalorder %s33, 1
      %p568 = por %p566, %p567
      %p569 = scmp.ne.s32.totalorder %s561, %s564
      %p570 = scmp.eq.s32.totalorder %s33, 0
      %p571 = por %p569, %p570
      %p572 = scmp.ne.s32.totalorder %s561, %s564
      %p573 = scmp.eq.s32.totalorder %s38, 1
      %p574 = por %p572, %p573
      %p575 = scmp.ne.s32.totalorder %s564, %s565
      %p576 = scmp.eq.s32.totalorder %s38, 0
      %p577 = por %p575, %p576
      %p578 = scmp.ne.s32.totalorder %s564, %s565
      %p579 = scmp.eq.s32.totalorder %s39, 1
      %p580 = por %p578, %p579
      %p582 = scmp.ne.s32.totalorder %s565, %s581
      %p583 = scmp.eq.s32.totalorder %s39, 0
      %p584 = por %p582, %p583
      %p585 = scmp.le.s32.totalorder 1, %s33
      %p586 = scmp.lt.s32.totalorder %s33, 3
      %p587 = pnand %p585, %p586
      %p588 = pneg %p587
      // Predicated region
      $region9: #{self_att_decoder_forward.1} parent=5 // pred_check
        _
      $region10: #{self_att_decoder_forward.1} parent=5 // pred_check_branch
        %590 = sbr.rel (%p587) target = $region12
      $region11: #{self_att_decoder_forward.1} parent=5 // pred_region
        %s591 = ssub.s32 %s33, 1
        // Predicated region
        $region13: #{self_att_decoder_forward.1} parent=11 // pred_check
          %p592 = pneg %p184
        $region14: #{self_att_decoder_forward.1} parent=11 // pred_check_branch
          %594 = sbr.rel (%p592) target = $region16
        $region15: #{self_att_decoder_forward.1} parent=11 // pred_region
          _
        $region16: #{self_att_decoder_forward.1} parent=11 // pred_fallthru
          _
        // Predicated region
        $region17: #{self_att_decoder_forward.1} parent=11 // pred_check
          %p595 = pneg %p205
        $region18: #{self_att_decoder_forward.1} parent=11 // pred_check_branch
          %597 = sbr.rel (%p595) target = $region20
        $region19: #{self_att_decoder_forward.1} parent=11 // pred_region
          _
        $region20: #{self_att_decoder_forward.1} parent=11 // pred_fallthru
          _
        // Predicated region
        $region21: #{self_att_decoder_forward.1} parent=11 // pred_check
          %p598 = pneg %p226
        $region22: #{self_att_decoder_forward.1} parent=11 // pred_check_branch
          %600 = sbr.rel (%p598) target = $region24
        $region23: #{self_att_decoder_forward.1} parent=11 // pred_region
          _
        $region24: #{self_att_decoder_forward.1} parent=11 // pred_fallthru
          _
        // Predicated region
        $region25: #{self_att_decoder_forward.1} parent=11 // pred_check
          %p601 = pneg %p247
        $region26: #{self_att_decoder_forward.1} parent=11 // pred_check_branch
          %603 = sbr.rel (%p601) target = $region28
        $region27: #{self_att_decoder_forward.1} parent=11 // pred_region
          _
        $region28: #{self_att_decoder_forward.1} parent=11 // pred_fallthru
          _
        // Predicated region
        $region29: #{self_att_decoder_forward.1} parent=11 // pred_check
          %p604 = pneg %p268
        $region30: #{self_att_decoder_forward.1} parent=11 // pred_check_branch
          %606 = sbr.rel (%p604) target = $region32
        $region31: #{self_att_decoder_forward.1} parent=11 // pred_region
          _
        $region32: #{self_att_decoder_forward.1} parent=11 // pred_fallthru
          _
        // Predicated region
        $region33: #{self_att_decoder_forward.1} parent=11 // pred_check
          %p607 = pneg %p289
        $region34: #{self_att_decoder_forward.1} parent=11 // pred_check_branch
          %609 = sbr.rel (%p607) target = $region36
        $region35: #{self_att_decoder_forward.1} parent=11 // pred_region
          _
        $region36: #{self_att_decoder_forward.1} parent=11 // pred_fallthru
          _
        // Predicated region
        $region37: #{self_att_decoder_forward.1} parent=11 // pred_check
          %p610 = pneg %p310
        $region38: #{self_att_decoder_forward.1} parent=11 // pred_check_branch
          %612 = sbr.rel (%p610) target = $region40
        $region39: #{self_att_decoder_forward.1} parent=11 // pred_region
          _
        $region40: #{self_att_decoder_forward.1} parent=11 // pred_fallthru
          _
        // Predicated region
        $region41: #{self_att_decoder_forward.1} parent=11 // pred_check
          %p613 = pneg %p331
        $region42: #{self_att_decoder_forward.1} parent=11 // pred_check_branch
          %615 = sbr.rel (%p613) target = $region44
        $region43: #{self_att_decoder_forward.1} parent=11 // pred_region
          _
        $region44: #{self_att_decoder_forward.1} parent=11 // pred_fallthru
          _
        // Predicated region
        $region45: #{self_att_decoder_forward.1} parent=11 // pred_check
          %p616 = pneg %p352
        $region46: #{self_att_decoder_forward.1} parent=11 // pred_check_branch
          %618 = sbr.rel (%p616) target = $region48
        $region47: #{self_att_decoder_forward.1} parent=11 // pred_region
          _
        $region48: #{self_att_decoder_forward.1} parent=11 // pred_fallthru
          _
        // Predicated region
        $region49: #{self_att_decoder_forward.1} parent=11 // pred_check
          %p619 = pneg %p373
        $region50: #{self_att_decoder_forward.1} parent=11 // pred_check_branch
          %621 = sbr.rel (%p619) target = $region52
        $region51: #{self_att_decoder_forward.1} parent=11 // pred_region
          _
        $region52: #{self_att_decoder_forward.1} parent=11 // pred_fallthru
          _
        // Predicated region
        $region53: #{self_att_decoder_forward.1} parent=11 // pred_check
          %p622 = pneg %p394
        $region54: #{self_att_decoder_forward.1} parent=11 // pred_check_branch
          %624 = sbr.rel (%p622) target = $region56
        $region55: #{self_att_decoder_forward.1} parent=11 // pred_region
          _
        $region56: #{self_att_decoder_forward.1} parent=11 // pred_fallthru
          _
        // Predicated region
        $region57: #{self_att_decoder_forward.1} parent=11 // pred_check
          %p625 = pneg %p415
        $region58: #{self_att_decoder_forward.1} parent=11 // pred_check_branch
          %627 = sbr.rel (%p625) target = $region60
        $region59: #{self_att_decoder_forward.1} parent=11 // pred_region
          _
        $region60: #{self_att_decoder_forward.1} parent=11 // pred_fallthru
          _
        // Predicated region
        $region61: #{self_att_decoder_forward.1} parent=11 // pred_check
          %p628 = pneg %p436
        $region62: #{self_att_decoder_forward.1} parent=11 // pred_check_branch
          %630 = sbr.rel (%p628) target = $region64
        $region63: #{self_att_decoder_forward.1} parent=11 // pred_region
          _
        $region64: #{self_att_decoder_forward.1} parent=11 // pred_fallthru
          _
        // Predicated region
        $region65: #{self_att_decoder_forward.1} parent=11 // pred_check
          %p631 = pneg %p457
        $region66: #{self_att_decoder_forward.1} parent=11 // pred_check_branch
          %633 = sbr.rel (%p631) target = $region68
        $region67: #{self_att_decoder_forward.1} parent=11 // pred_region
          _
        $region68: #{self_att_decoder_forward.1} parent=11 // pred_fallthru
          _
        // Predicated region
        $region69: #{self_att_decoder_forward.1} parent=11 // pred_check
          %p634 = pneg %p478
        $region70: #{self_att_decoder_forward.1} parent=11 // pred_check_branch
          %636 = sbr.rel (%p634) target = $region72
        $region71: #{self_att_decoder_forward.1} parent=11 // pred_region
          _
        $region72: #{self_att_decoder_forward.1} parent=11 // pred_fallthru
          _
        // Predicated region
        $region73: #{self_att_decoder_forward.1} parent=11 // pred_check
          %p637 = pneg %p499
        $region74: #{self_att_decoder_forward.1} parent=11 // pred_check_branch
          %639 = sbr.rel (%p637) target = $region76
        $region75: #{self_att_decoder_forward.1} parent=11 // pred_region
          _
        $region76: #{self_att_decoder_forward.1} parent=11 // pred_fallthru
          _
      $region12: #{self_att_decoder_forward.1} parent=5 // pred_fallthru
        _
      %p640 = scmp.lt.s32.totalorder %s33, 2
      // Predicated region
      $region77: #{self_att_decoder_forward.1} parent=5 // pred_check
        %p641 = pneg %p640
      $region78: #{self_att_decoder_forward.1} parent=5 // pred_check_branch
        %643 = sbr.rel (%p641) target = $region80
      $region79: #{self_att_decoder_forward.1} parent=5 // pred_region
        // Predicated region
        $region81: #{self_att_decoder_forward.1} parent=79 // pred_check
          %p644 = pneg %p53
        $region82: #{self_att_decoder_forward.1} parent=79 // pred_check_branch
          %646 = sbr.rel (%p644) target = $region84
        $region83: #{self_att_decoder_forward.1} parent=79 // pred_region
          %p647 = scmp.lt.s32.totalorder %s33, 1
          %s648 = scalar_select %p647, %s33, 1
          %s649 = smul.addr %s648, 8
          %s650 = scalar_lea.vmem %s0, %s649
        $region84: #{self_att_decoder_forward.1} parent=79 // pred_fallthru
          _
        // Predicated region
        $region85: #{self_att_decoder_forward.1} parent=79 // pred_check
          %p651 = pneg %p79
        $region86: #{self_att_decoder_forward.1} parent=79 // pred_check_branch
          %653 = sbr.rel (%p651) target = $region88
        $region87: #{self_att_decoder_forward.1} parent=79 // pred_region
          %p654 = scmp.lt.s32.totalorder %s33, 1
          %s655 = scalar_select %p654, %s33, 1
          %s656 = smul.addr %s655, 2
          %s657 = smul.addr %s656, 8
          %s658 = scalar_lea.vmem %s1, %s657
        $region88: #{self_att_decoder_forward.1} parent=79 // pred_fallthru
          _
        // Predicated region
        $region89: #{self_att_decoder_forward.1} parent=79 // pred_check
          %p659 = pneg %p105
        $region90: #{self_att_decoder_forward.1} parent=79 // pred_check_branch
          %661 = sbr.rel (%p659) target = $region92
        $region91: #{self_att_decoder_forward.1} parent=79 // pred_region
          %p662 = scmp.lt.s32.totalorder %s33, 1
          %s663 = scalar_select %p662, %s33, 1
          %s664 = scalar_lea.vmem %s2, %s663
        $region92: #{self_att_decoder_forward.1} parent=79 // pred_fallthru
          _
        // Predicated region
        $region93: #{self_att_decoder_forward.1} parent=79 // pred_check
          %p665 = pneg %p131
        $region94: #{self_att_decoder_forward.1} parent=79 // pred_check_branch
          %667 = sbr.rel (%p665) target = $region96
        $region95: #{self_att_decoder_forward.1} parent=79 // pred_region
          %p668 = scmp.lt.s32.totalorder %s33, 1
          %s669 = scalar_select %p668, %s33, 1
          %s670 = scalar_lea.vmem %s3, %s669
        $region96: #{self_att_decoder_forward.1} parent=79 // pred_fallthru
          _
        // Predicated region
        $region97: #{self_att_decoder_forward.1} parent=79 // pred_check
          %p671 = pneg %p157
        $region98: #{self_att_decoder_forward.1} parent=79 // pred_check_branch
          %673 = sbr.rel (%p671) target = $region100
        $region99: #{self_att_decoder_forward.1} parent=79 // pred_region
          %p674 = scmp.lt.s32.totalorder %s33, 1
          %s675 = scalar_select %p674, %s33, 1
          %s676 = smul.addr %s675, 8
          %s677 = scalar_lea.vmem %s4, %s676
        $region100: #{self_att_decoder_forward.1} parent=79 // pred_fallthru
          _
      $region80: #{self_att_decoder_forward.1} parent=5 // pred_fallthru
        _
      %p678 = scmp.le.s32.totalorder 1, %s33
      %p679 = scmp.lt.s32.totalorder %s33, 3
      %p680 = pnand %p678, %p679
      %p681 = pneg %p680
      // Predicated region
      $region101: #{self_att_decoder_forward.1} parent=5 // pred_check
        _
      $region102: #{self_att_decoder_forward.1} parent=5 // pred_check_branch
        %683 = sbr.rel (%p680) target = $region104
      $region103: #{self_att_decoder_forward.1} parent=5 // pred_region
        %s684 = ssub.s32 %s33, 1
        %p685 = scmp.lt.s32.totalorder %s38, 1
        %s686 = scalar_select %p685, %s38, 1
        %s687 = smul.addr %s686, 8
        %s688 = scalar_lea.vmem %s0, %s687
        %p689 = pneg %p59
        %p690 = pneg %p56
        %p691 = scmp.lt.s32.totalorder %s38, 1
        %s692 = scalar_select %p691, %s38, 1
        %s693 = smul.addr %s692, 2
        %s694 = smul.addr %s693, 8
        %s695 = scalar_lea.vmem %s1, %s694
        %p696 = pneg %p85
        %p697 = pneg %p82
        %p698 = scmp.lt.s32.totalorder %s38, 1
        %s699 = scalar_select %p698, %s38, 1
        %s700 = scalar_lea.vmem %s2, %s699
        %p701 = pneg %p111
        %p702 = pneg %p108
        %p703 = scmp.lt.s32.totalorder %s38, 1
        %s704 = scalar_select %p703, %s38, 1
        %s705 = scalar_lea.vmem %s3, %s704
        %p706 = pneg %p137
        %p707 = pneg %p134
        %p708 = scmp.lt.s32.totalorder %s38, 1
        %s709 = scalar_select %p708, %s38, 1
        %s710 = smul.addr %s709, 8
        %s711 = scalar_lea.vmem %s4, %s710
        %p712 = pneg %p163
        %p713 = pneg %p160
        %p714 = pneg %p184
        %p715 = pneg %p181
        %p716 = pneg %p205
        %p717 = pneg %p202
        %p718 = pneg %p226
        %p719 = pneg %p223
        %p720 = pneg %p247
        %p721 = pneg %p244
        %p722 = pneg %p268
        %p723 = pneg %p265
        %p724 = pneg %p289
        %p725 = pneg %p286
        %p726 = pneg %p310
        %p727 = pneg %p307
        %p728 = pneg %p331
        %p729 = pneg %p328
        %p730 = pneg %p352
        %p731 = pneg %p349
        %p732 = pneg %p373
        %p733 = pneg %p370
        %p734 = pneg %p394
        %p735 = pneg %p391
        %p736 = pneg %p415
        %p737 = pneg %p412
        %p738 = pneg %p436
        %p739 = pneg %p433
        %p740 = pneg %p457
        %p741 = pneg %p454
        %p742 = pneg %p478
        %p743 = pneg %p475
        %p744 = pneg %p499
        %p745 = pneg %p496
        %p746 = pneg %p525
        %p747 = pneg %p522
        %s748 = sand.u32 %s512, 1
        %s749 = scalar_lea.sflag [#allocation3], %s748
        %s750 = sand.u32 %s512, 1
        %s751 = smul.addr %s750, 8
        %s752 = scalar_lea.vmem [#allocation2], %s751
        %p753 = pneg %p551
        %p754 = pneg %p548
        %p755 = scmp.lt.s32.totalorder %s38, 1
        %s756 = scalar_select %p755, %s38, 1
        %s757 = smul.addr %s756, 8
        %s758 = scalar_lea.vmem %s22, %s757
        %p759 = pneg %p577
        %p760 = pneg %p574
        %p761 = scmp.lt.s32.totalorder %s38, 1
        %s762 = scalar_select %p761, %s38, 1
        %s763 = smul.addr %s762, 8
        %s764 = scalar_lea.vmem %s23, %s763
        %p765 = scmp.lt.s32.totalorder %s38, 1
        %s766 = scalar_select %p765, %s38, 1
        %s767 = smul.addr %s766, 8
        %s768 = scalar_lea.vmem %s0, %s767
        %p769 = scmp.lt.s32.totalorder %s38, 1
        %s770 = scalar_select %p769, %s38, 1
        %s771 = smul.addr %s770, 2
        %s772 = smul.addr %s771, 8
        %s773 = scalar_lea.vmem %s1, %s772
        %p774 = scmp.lt.s32.totalorder %s38, 1
        %s775 = scalar_select %p774, %s38, 1
        %s776 = scalar_lea.vmem %s2, %s775
        %p777 = scmp.lt.s32.totalorder %s38, 1
        %s778 = scalar_select %p777, %s38, 1
        %s779 = scalar_lea.vmem %s3, %s778
        %p780 = scmp.lt.s32.totalorder %s38, 1
        %s781 = scalar_select %p780, %s38, 1
        %s782 = smul.addr %s781, 8
        %s783 = scalar_lea.vmem %s4, %s782
        %p784 = scmp.lt.s32.totalorder %s38, 1
        %s785 = scalar_select %p784, %s38, 1
        %s786 = smul.addr %s785, 8
        %s787 = scalar_lea.vmem %s22, %s786
        %p788 = scmp.lt.s32.totalorder %s38, 1
        %s789 = scalar_select %p788, %s38, 1
        %s790 = smul.addr %s789, 8
        %s791 = scalar_lea.vmem %s23, %s790
        %v792 = vld [vmem:[%s768] sm:$0xff]
        %v793 = vld [vmem:[%s773] sm:$0xff]
        %v794 = vld [vmem:[%s773 + $0x8] sm:$0x3]
        %v795 = vld [vmem:[%s776] sm:$0x1]
        %v796 = vld [vmem:[%s779] sm:$0x1]
        %v797 = vld [vmem:[%s783] sm:$0xff]
        %v798 = vlaneseq
        %v799 = vshrl.u32 %v798, 7
        %v800 = vlaneseq
        %v801 = vand.u32 %v800, 127
        %vm802 = vcmp.gt.s32.totalorder %v801, %v799
        %vm803 = vcmp.gt.f32.partialorder %v795, 0.0
        %v804 = vsel %vm803, 1, 0
        %v805 = vperm.slane %v804, 0
        %vm806 = vcmp.eq.s32.totalorder %v805, 1
        %vm807 = vmor %vm802, %vm806
        %v808 = vsel %vm807, -1e+09, 0.0
        %vm809 = vcmp.gt.f32.partialorder %v796, 0.0
        %v810 = vsel %vm809, -1e+09, 0.0
        %v811 = vld [vmem:[%s5] sm:$0x7]
        %v812 = vld [vmem:[%s6] sm:$0x7]
        %v813 = vld [vmem:[%s7] sm:$0xff]
        %v814 = vld [vmem:[%s7 + $0x8] sm:$0xff]
        %v815 = vld [vmem:[%s7 + $0x10] sm:$0xff]
        %v816 = vld [vmem:[%s7 + $0x18] sm:$0xff]
        %v817 = vld [vmem:[%s8] sm:$0x1]
        %v819 = vperm.slane %v817, 0
        %vm821 = vcmask 261120
        %v823 = vsel %vm821, %v792, 0
        %825 = vmatpush.msra.mxu0 0.0
        %826 = vmatpush.msra.mxu0 0.0
        %827 = vmatpush.msra.mxu0 0.0
        %828 = vmatpush.msra.mxu0 0.0
        %829 = vmatpush.msra.mxu0 0.0
        %830 = vmatpush.msra.mxu0 0.0
        %831 = vmatpush.msra.mxu0 0.0
        %832 = vmatpush.msra.mxu0 0.0
        %833 = vmatpush.msra.mxu0 0.0
        %834 = vmatpush.msra.mxu0 0.0
        %835 = vmatpush.msra.mxu0 0.0
        %836 = vmatpush.msra.mxu0 0.0
        %837 = vmatpush.msra.mxu0 %v816
        %838 = vmatpush.msra.mxu0 %v815
        %839 = vmatpush.msra.mxu0 %v814
        %840 = vmatpush.msra.mxu0 %v813
        %841 = vmatmul.f32.gmra.mxu0 %v823
        %v842 = vpop.f32.mrf.mxu0
        %v843 = vadd.f32 %v819, %v842
        %844 = vdwg.mxu0
        %v845 = vld [vmem:[%s9] sm:$0xff]
        %v846 = vld [vmem:[%s9 + $0x8] sm:$0xff]
        %v847 = vld [vmem:[%s9 + $0x10] sm:$0xff]
        %v848 = vld [vmem:[%s9 + $0x18] sm:$0xff]
        %v849 = vld [vmem:[%s10] sm:$0x1]
        %851 = vrot.lane.b32.xlu0 %v843, 64
        %v852 = vpop.permute.xlu0 %851
        %vm853 = vcmask 64512
        %v854 = vsel %vm853, %v852, 0
        %v856 = vsel %vm853, %v843, 0
        %858 = vmatpush.xpose.msra.mxu0 0.0
        %859 = vmatpush.xpose.msra.mxu0 0.0
        %860 = vmatpush.xpose.msra.mxu0 0.0
        %861 = vmatpush.xpose.msra.mxu0 0.0
        %862 = vmatpush.xpose.msra.mxu0 0.0
        %863 = vmatpush.xpose.msra.mxu0 0.0
        %864 = vmatpush.xpose.msra.mxu0 0.0
        %865 = vmatpush.xpose.msra.mxu0 0.0
        %866 = vmatpush.xpose.msra.mxu0 0.0
        %867 = vmatpush.xpose.msra.mxu0 0.0
        %868 = vmatpush.xpose.msra.mxu0 0.0
        %869 = vmatpush.xpose.msra.mxu0 0.0
        %870 = vmatpush.xpose.msra.mxu0 0.0
        %871 = vmatpush.xpose.msra.mxu0 0.0
        %872 = vmatpush.xpose.msra.mxu0 0.0
        %873 = vmatpush.xpose.msra.mxu0 %v856
        %874 = vmatmul.f32.gmra.mxu0 %v854
        %v875 = vpop.f32.mrf.mxu0
        %v876 = vadd.f32 0.0, %v875
        %877 = vdwg.mxu0
        %v878 = vmul.f32 %v876, 0.35355338
        %v879 = vadd.f32 %v878, %v808
        %v880 = vsel %vm853, %v879, -inf
        %881 = vmax.xlane.f32.xlu0 %v880
        %v882 = vpop.xlane.xlu0 %881
        %v883 = vsub.f32 %v879, %v882
        %v884 = vmul.f32 %v883, 1.442695
        %v885 = vpow.pop %v884
        %v886 = vsel %vm853, %v885, 0.0
        %887 = vadd.xlane.f32.xlu0 %v886
        %v888 = vpop.xlane.xlu0 %887
        %v889 = vrcp.pop %v888
        %v890 = vmul.f32 %v888, %v889
        %v891 = vsub.f32 1.0, %v890
        %v892 = vmul.f32 %v889, %v891
        %v893 = vadd.f32 %v889, %v892
        %vm894 = vweird.f32 %v888
        %vm895 = vweird.f32 %v889
        %vm896 = vmor %vm894, %vm895
        %v897 = vsel %vm896, %v889, %v893
        %v898 = vand.u32 2147483647, %v888
        %vm899 = vcmp.eq.f32.partialorder %v898, 8.507059e+37
        %v900 = vand.u32 %v888, 2147483648
        %v901 = vor.u32 1.1754944e-38, %v900
        %v902 = vsel %vm899, %v901, %v897
        %v903 = vmul.f32 %v885, %v902
        %904 = vrot.lane.b32.xlu0 %v843, 96
        %v905 = vpop.permute.xlu0 %904
        %v908 = vsel %vm853, %v903, 0
        %910 = vmatpush.msra.mxu0 0.0
        %911 = vmatpush.msra.mxu0 0.0
        %912 = vmatpush.msra.mxu0 0.0
        %913 = vmatpush.msra.mxu0 0.0
        %914 = vmatpush.msra.mxu0 0.0
        %915 = vmatpush.msra.mxu0 0.0
        %916 = vmatpush.msra.mxu0 0.0
        %917 = vmatpush.msra.mxu0 0.0
        %918 = vmatpush.msra.mxu0 0.0
        %919 = vmatpush.msra.mxu0 0.0
        %920 = vmatpush.msra.mxu0 0.0
        %921 = vmatpush.msra.mxu0 0.0
        %922 = vmatpush.msra.mxu0 0.0
        %923 = vmatpush.msra.mxu0 0.0
        %924 = vmatpush.msra.mxu0 0.0
        %925 = vmatpush.msra.mxu0 %v905
        %926 = vmatmul.f32.gmra.mxu0 %v908
        %v927 = vpop.f32.mrf.mxu0
        %v928 = vadd.f32 0.0, %v927
        %929 = vdwg.mxu0
        %930 = vrot.lane.b32.xlu0 %v843, 56
        %v931 = vpop.permute.xlu0 %930
        %932 = vrot.lane.b32.xlu0 %v843, 120
        %v933 = vpop.permute.xlu0 %932
        %v934 = vsel %vm853, %v931, 0
        %v936 = vsel %vm853, %v933, 0
        %938 = vmatpush.xpose.msra.mxu0 0.0
        %939 = vmatpush.xpose.msra.mxu0 0.0
        %940 = vmatpush.xpose.msra.mxu0 0.0
        %941 = vmatpush.xpose.msra.mxu0 0.0
        %942 = vmatpush.xpose.msra.mxu0 0.0
        %943 = vmatpush.xpose.msra.mxu0 0.0
        %944 = vmatpush.xpose.msra.mxu0 0.0
        %945 = vmatpush.xpose.msra.mxu0 0.0
        %946 = vmatpush.xpose.msra.mxu0 0.0
        %947 = vmatpush.xpose.msra.mxu0 0.0
        %948 = vmatpush.xpose.msra.mxu0 0.0
        %949 = vmatpush.xpose.msra.mxu0 0.0
        %950 = vmatpush.xpose.msra.mxu0 0.0
        %951 = vmatpush.xpose.msra.mxu0 0.0
        %952 = vmatpush.xpose.msra.mxu0 0.0
        %953 = vmatpush.xpose.msra.mxu0 %v936
        %954 = vmatmul.f32.gmra.mxu0 %v934
        %v955 = vpop.f32.mrf.mxu0
        %v956 = vadd.f32 0.0, %v955
        %957 = vdwg.mxu0
        %v958 = vmul.f32 %v956, 0.35355338
        %v959 = vadd.f32 %v958, %v808
        %v960 = vsel %vm853, %v959, -inf
        %961 = vmax.xlane.f32.xlu0 %v960
        %v962 = vpop.xlane.xlu0 %961
        %v963 = vsub.f32 %v959, %v962
        %v964 = vmul.f32 %v963, 1.442695
        %v965 = vpow.pop %v964
        %v966 = vsel %vm853, %v965, 0.0
        %967 = vadd.xlane.f32.xlu0 %v966
        %v968 = vpop.xlane.xlu0 %967
        %v969 = vrcp.pop %v968
        %v970 = vmul.f32 %v968, %v969
        %v971 = vsub.f32 1.0, %v970
        %v972 = vmul.f32 %v969, %v971
        %v973 = vadd.f32 %v969, %v972
        %vm974 = vweird.f32 %v968
        %vm975 = vweird.f32 %v969
        %vm976 = vmor %vm974, %vm975
        %v977 = vsel %vm976, %v969, %v973
        %v978 = vand.u32 2147483647, %v968
        %vm979 = vcmp.eq.f32.partialorder %v978, 8.507059e+37
        %v980 = vand.u32 %v968, 2147483648
        %v981 = vor.u32 1.1754944e-38, %v980
        %v982 = vsel %vm979, %v981, %v977
        %v983 = vmul.f32 %v965, %v982
        %984 = vrot.lane.b32.xlu0 %v843, 88
        %v985 = vpop.permute.xlu0 %984
        %v988 = vsel %vm853, %v983, 0
        %990 = vmatpush.msra.mxu0 0.0
        %991 = vmatpush.msra.mxu0 0.0
        %992 = vmatpush.msra.mxu0 0.0
        %993 = vmatpush.msra.mxu0 0.0
        %994 = vmatpush.msra.mxu0 0.0
        %995 = vmatpush.msra.mxu0 0.0
        %996 = vmatpush.msra.mxu0 0.0
        %997 = vmatpush.msra.mxu0 0.0
        %998 = vmatpush.msra.mxu0 0.0
        %999 = vmatpush.msra.mxu0 0.0
        %1000 = vmatpush.msra.mxu0 0.0
        %1001 = vmatpush.msra.mxu0 0.0
        %1002 = vmatpush.msra.mxu0 0.0
        %1003 = vmatpush.msra.mxu0 0.0
        %1004 = vmatpush.msra.mxu0 0.0
        %1005 = vmatpush.msra.mxu0 %v985
        %1006 = vmatmul.f32.gmra.mxu0 %v988
        %v1007 = vpop.f32.mrf.mxu0
        %v1008 = vadd.f32 0.0, %v1007
        %1009 = vdwg.mxu0
        %1010 = vrot.lane.b32.xlu0 %v843, 48
        %v1011 = vpop.permute.xlu0 %1010
        %1012 = vrot.lane.b32.xlu0 %v843, 112
        %v1013 = vpop.permute.xlu0 %1012
        %v1014 = vsel %vm853, %v1011, 0
        %v1016 = vsel %vm853, %v1013, 0
        %1018 = vmatpush.xpose.msra.mxu0 0.0
        %1019 = vmatpush.xpose.msra.mxu0 0.0
        %1020 = vmatpush.xpose.msra.mxu0 0.0
        %1021 = vmatpush.xpose.msra.mxu0 0.0
        %1022 = vmatpush.xpose.msra.mxu0 0.0
        %1023 = vmatpush.xpose.msra.mxu0 0.0
        %1024 = vmatpush.xpose.msra.mxu0 0.0
        %1025 = vmatpush.xpose.msra.mxu0 0.0
        %1026 = vmatpush.xpose.msra.mxu0 0.0
        %1027 = vmatpush.xpose.msra.mxu0 0.0
        %1028 = vmatpush.xpose.msra.mxu0 0.0
        %1029 = vmatpush.xpose.msra.mxu0 0.0
        %1030 = vmatpush.xpose.msra.mxu0 0.0
        %1031 = vmatpush.xpose.msra.mxu0 0.0
        %1032 = vmatpush.xpose.msra.mxu0 0.0
        %1033 = vmatpush.xpose.msra.mxu0 %v1016
        %1034 = vmatmul.f32.gmra.mxu0 %v1014
        %v1035 = vpop.f32.mrf.mxu0
        %v1036 = vadd.f32 0.0, %v1035
        %1037 = vdwg.mxu0
        %v1038 = vmul.f32 %v1036, 0.35355338
        %v1039 = vadd.f32 %v1038, %v808
        %v1040 = vsel %vm853, %v1039, -inf
        %1041 = vmax.xlane.f32.xlu0 %v1040
        %v1042 = vpop.xlane.xlu0 %1041
        %v1043 = vsub.f32 %v1039, %v1042
        %v1044 = vmul.f32 %v1043, 1.442695
        %v1045 = vpow.pop %v1044
        %v1046 = vsel %vm853, %v1045, 0.0
        %1047 = vadd.xlane.f32.xlu0 %v1046
        %v1048 = vpop.xlane.xlu0 %1047
        %v1049 = vrcp.pop %v1048
        %v1050 = vmul.f32 %v1048, %v1049
        %v1051 = vsub.f32 1.0, %v1050
        %v1052 = vmul.f32 %v1049, %v1051
        %v1053 = vadd.f32 %v1049, %v1052
        %vm1054 = vweird.f32 %v1048
        %vm1055 = vweird.f32 %v1049
        %vm1056 = vmor %vm1054, %vm1055
        %v1057 = vsel %vm1056, %v1049, %v1053
        %v1058 = vand.u32 2147483647, %v1048
        %vm1059 = vcmp.eq.f32.partialorder %v1058, 8.507059e+37
        %v1060 = vand.u32 %v1048, 2147483648
        %v1061 = vor.u32 1.1754944e-38, %v1060
        %v1062 = vsel %vm1059, %v1061, %v1057
        %v1063 = vmul.f32 %v1045, %v1062
        %1064 = vrot.lane.b32.xlu0 %v843, 80
        %v1065 = vpop.permute.xlu0 %1064
        %v1068 = vsel %vm853, %v1063, 0
        %1070 = vmatpush.msra.mxu0 0.0
        %1071 = vmatpush.msra.mxu0 0.0
        %1072 = vmatpush.msra.mxu0 0.0
        %1073 = vmatpush.msra.mxu0 0.0
        %1074 = vmatpush.msra.mxu0 0.0
        %1075 = vmatpush.msra.mxu0 0.0
        %1076 = vmatpush.msra.mxu0 0.0
        %1077 = vmatpush.msra.mxu0 0.0
        %1078 = vmatpush.msra.mxu0 0.0
        %1079 = vmatpush.msra.mxu0 0.0
        %1080 = vmatpush.msra.mxu0 0.0
        %1081 = vmatpush.msra.mxu0 0.0
        %1082 = vmatpush.msra.mxu0 0.0
        %1083 = vmatpush.msra.mxu0 0.0
        %1084 = vmatpush.msra.mxu0 0.0
        %1085 = vmatpush.msra.mxu0 %v1065
        %1086 = vmatmul.f32.gmra.mxu0 %v1068
        %v1087 = vpop.f32.mrf.mxu0
        %v1088 = vadd.f32 0.0, %v1087
        %1089 = vdwg.mxu0
        %1090 = vrot.lane.b32.xlu0 %v843, 40
        %v1091 = vpop.permute.xlu0 %1090
        %1092 = vrot.lane.b32.xlu0 %v843, 104
        %v1093 = vpop.permute.xlu0 %1092
        %v1094 = vsel %vm853, %v1091, 0
        %v1096 = vsel %vm853, %v1093, 0
        %1098 = vmatpush.xpose.msra.mxu0 0.0
        %1099 = vmatpush.xpose.msra.mxu0 0.0
        %1100 = vmatpush.xpose.msra.mxu0 0.0
        %1101 = vmatpush.xpose.msra.mxu0 0.0
        %1102 = vmatpush.xpose.msra.mxu0 0.0
        %1103 = vmatpush.xpose.msra.mxu0 0.0
        %1104 = vmatpush.xpose.msra.mxu0 0.0
        %1105 = vmatpush.xpose.msra.mxu0 0.0
        %1106 = vmatpush.xpose.msra.mxu0 0.0
        %1107 = vmatpush.xpose.msra.mxu0 0.0
        %1108 = vmatpush.xpose.msra.mxu0 0.0
        %1109 = vmatpush.xpose.msra.mxu0 0.0
        %1110 = vmatpush.xpose.msra.mxu0 0.0
        %1111 = vmatpush.xpose.msra.mxu0 0.0
        %1112 = vmatpush.xpose.msra.mxu0 0.0
        %1113 = vmatpush.xpose.msra.mxu0 %v1096
        %1114 = vmatmul.f32.gmra.mxu0 %v1094
        %v1115 = vpop.f32.mrf.mxu0
        %v1116 = vadd.f32 0.0, %v1115
        %1117 = vdwg.mxu0
        %v1118 = vmul.f32 %v1116, 0.35355338
        %v1119 = vadd.f32 %v1118, %v808
        %v1120 = vsel %vm853, %v1119, -inf
        %1121 = vmax.xlane.f32.xlu0 %v1120
        %v1122 = vpop.xlane.xlu0 %1121
        %v1123 = vsub.f32 %v1119, %v1122
        %v1124 = vmul.f32 %v1123, 1.442695
        %v1125 = vpow.pop %v1124
        %v1126 = vsel %vm853, %v1125, 0.0
        %1127 = vadd.xlane.f32.xlu0 %v1126
        %v1128 = vpop.xlane.xlu0 %1127
        %v1129 = vrcp.pop %v1128
        %v1130 = vmul.f32 %v1128, %v1129
        %v1131 = vsub.f32 1.0, %v1130
        %v1132 = vmul.f32 %v1129, %v1131
        %v1133 = vadd.f32 %v1129, %v1132
        %vm1134 = vweird.f32 %v1128
        %vm1135 = vweird.f32 %v1129
        %vm1136 = vmor %vm1134, %vm1135
        %v1137 = vsel %vm1136, %v1129, %v1133
        %v1138 = vand.u32 2147483647, %v1128
        %vm1139 = vcmp.eq.f32.partialorder %v1138, 8.507059e+37
        %v1140 = vand.u32 %v1128, 2147483648
        %v1141 = vor.u32 1.1754944e-38, %v1140
        %v1142 = vsel %vm1139, %v1141, %v1137
        %v1143 = vmul.f32 %v1125, %v1142
        %1144 = vrot.lane.b32.xlu0 %v843, 72
        %v1145 = vpop.permute.xlu0 %1144
        %v1148 = vsel %vm853, %v1143, 0
        %1150 = vmatpush.msra.mxu0 0.0
        %1151 = vmatpush.msra.mxu0 0.0
        %1152 = vmatpush.msra.mxu0 0.0
        %1153 = vmatpush.msra.mxu0 0.0
        %1154 = vmatpush.msra.mxu0 0.0
        %1155 = vmatpush.msra.mxu0 0.0
        %1156 = vmatpush.msra.mxu0 0.0
        %1157 = vmatpush.msra.mxu0 0.0
        %1158 = vmatpush.msra.mxu0 0.0
        %1159 = vmatpush.msra.mxu0 0.0
        %1160 = vmatpush.msra.mxu0 0.0
        %1161 = vmatpush.msra.mxu0 0.0
        %1162 = vmatpush.msra.mxu0 0.0
        %1163 = vmatpush.msra.mxu0 0.0
        %1164 = vmatpush.msra.mxu0 0.0
        %1165 = vmatpush.msra.mxu0 %v1145
        %1166 = vmatmul.f32.gmra.mxu0 %v1148
        %v1167 = vpop.f32.mrf.mxu0
        %v1168 = vadd.f32 0.0, %v1167
        %1169 = vdwg.mxu0
        %1171 = vrot.lane.b32.xlu0 %v1008, 8
        %v1172 = vpop.permute.xlu0 %1171
        %1175 = vrot.lane.b32.xlu0 %v1088, 16
        %v1176 = vpop.permute.xlu0 %1175
        %1179 = vrot.lane.b32.xlu0 %v1168, 24
        %v1180 = vpop.permute.xlu0 %1179
        %v1182 = vsel %vm853, %v928, %v1172
        %vm1183 = vcmask 130048
        %v1184 = vsel %vm1183, %v1182, %v1176
        %vm1185 = vcmask 195584
        %v1186 = vsel %vm1185, %v1184, %v1180
        %v1188 = vperm.slane %v849, 0
        %v1191 = vsel %vm821, %v1186, 0
        %1193 = vmatpush.msra.mxu0 0.0
        %1194 = vmatpush.msra.mxu0 0.0
        %1195 = vmatpush.msra.mxu0 0.0
        %1196 = vmatpush.msra.mxu0 0.0
        %1197 = vmatpush.msra.mxu0 0.0
        %1198 = vmatpush.msra.mxu0 0.0
        %1199 = vmatpush.msra.mxu0 0.0
        %1200 = vmatpush.msra.mxu0 0.0
        %1201 = vmatpush.msra.mxu0 0.0
        %1202 = vmatpush.msra.mxu0 0.0
        %1203 = vmatpush.msra.mxu0 0.0
        %1204 = vmatpush.msra.mxu0 0.0
        %1205 = vmatpush.msra.mxu0 %v848
        %1206 = vmatpush.msra.mxu0 %v847
        %1207 = vmatpush.msra.mxu0 %v846
        %1208 = vmatpush.msra.mxu0 %v845
        %1209 = vmatmul.f32.gmra.mxu0 %v1191
        %v1210 = vpop.f32.mrf.mxu0
        %v1211 = vadd.f32 %v1188, %v1210
        %1212 = vdwg.mxu0
        %1214 = vset.pattern.permute.xlu0 0
        %1215 = vperm.xlu0 %1214, %v797
        %v1216 = vpop.permute.xlu0 %1215
        %v1218 = vmul.f32 %v1211, %v1216
        %v1219 = vadd.f32 %v792, %v1218
        %v1220 = vsel %vm821, %v1219, 0.0
        %1221 = vadd.xlane.f32.xlu0 %v1220
        %v1222 = vpop.xlane.xlu0 %1221
        %v1223 = vrcp.pop 32.0
        %v1224 = vmul.f32 32.0, %v1223
        %v1225 = vsub.f32 1.0, %v1224
        %v1226 = vmul.f32 %v1223, %v1225
        %v1227 = vadd.f32 %v1223, %v1226
        %vm1228 = vweird.f32 %v1223
        %v1229 = vsel %vm1228, %v1223, %v1227
        %v1230 = vmul.f32 %v1222, %v1229
        %v1231 = vsub.f32 %v1219, %v1230
        %v1232 = vmul.f32 %v1231, %v1231
        %v1233 = vsel %vm821, %v1232, 0.0
        %1234 = vadd.xlane.f32.xlu0 %v1233
        %v1235 = vpop.xlane.xlu0 %1234
        %v1236 = vmul.f32 %v1235, %v1229
        %v1237 = vadd.f32 %v1236, 1e-05
        %v1238 = vrsqrt.pop %v1237
        %v1239 = vmul.f32 %v1238, %v1237
        %v1240 = vmul.f32 %v1239, %v1238
        %v1241 = vmul.f32 0.5, %v1240
        %v1242 = vsub.f32 1.5, %v1241
        %v1243 = vmul.f32 %v1238, %v1242
        %vm1244 = vweird.f32 %v1237
        %vm1245 = vweird.f32 %v1238
        %vm1246 = vmor %vm1244, %vm1245
        %v1247 = vsel %vm1246, %v1238, %v1243
        %v1248 = vmul.f32 %v1231, %v1247
        %v1249 = vperm.slane %v811, 0
        %v1250 = vmul.f32 %v1248, %v1249
        %v1251 = vperm.slane %v812, 0
        %v1252 = vadd.f32 %v1250, %v1251
        %v1253 = vld [vmem:[%s11] sm:$0xff]
        %v1254 = vld [vmem:[%s11 + $0x8] sm:$0xff]
        %v1255 = vld [vmem:[%s11 + $0x10] sm:$0xff]
        %v1256 = vld [vmem:[%s11 + $0x18] sm:$0xff]
        %v1257 = vld [vmem:[%s12] sm:$0x1]
        %v1259 = vperm.slane %v1257, 0
        %v1262 = vsel %vm821, %v793, 0
        %v1265 = vsel %vm821, %v794, 0
        %1267 = vmatpush.msra.mxu0 0.0
        %1268 = vmatpush.msra.mxu0 0.0
        %1269 = vmatpush.msra.mxu0 0.0
        %1270 = vmatpush.msra.mxu0 0.0
        %1271 = vmatpush.msra.mxu0 0.0
        %1272 = vmatpush.msra.mxu0 0.0
        %1273 = vmatpush.msra.mxu0 0.0
        %1274 = vmatpush.msra.mxu0 0.0
        %1275 = vmatpush.msra.mxu0 0.0
        %1276 = vmatpush.msra.mxu0 0.0
        %1277 = vmatpush.msra.mxu0 0.0
        %1278 = vmatpush.msra.mxu0 0.0
        %1279 = vmatpush.msra.mxu0 %v1256
        %1280 = vmatpush.msra.mxu0 %v1255
        %1281 = vmatpush.msra.mxu0 %v1254
        %1282 = vmatpush.msra.mxu0 %v1253
        %1283 = vmatmul.f32.gmra.mxu0 %v1262
        %v1284 = vpop.f32.mrf.mxu0
        %v1285 = vadd.f32 %v1259, %v1284
        %1286 = vmatmul.f32.gmra.mxu0 %v1265
        %v1287 = vpop.f32.mrf.mxu0
        %v1288 = vadd.f32 %v1259, %v1287
        %1289 = vdwg.mxu0
        %v1290 = vld [vmem:[%s13] sm:$0xff]
        %v1291 = vld [vmem:[%s13 + $0x8] sm:$0xff]
        %v1292 = vld [vmem:[%s13 + $0x10] sm:$0xff]
        %v1293 = vld [vmem:[%s13 + $0x18] sm:$0xff]
        %v1294 = vld [vmem:[%s14] sm:$0x1]
        %v1296 = vperm.slane %v1294, 0
        %v1299 = vsel %vm821, %v1252, 0
        %1301 = vmatpush.msra.mxu0 0.0
        %1302 = vmatpush.msra.mxu0 0.0
        %1303 = vmatpush.msra.mxu0 0.0
        %1304 = vmatpush.msra.mxu0 0.0
        %1305 = vmatpush.msra.mxu0 0.0
        %1306 = vmatpush.msra.mxu0 0.0
        %1307 = vmatpush.msra.mxu0 0.0
        %1308 = vmatpush.msra.mxu0 0.0
        %1309 = vmatpush.msra.mxu0 0.0
        %1310 = vmatpush.msra.mxu0 0.0
        %1311 = vmatpush.msra.mxu0 0.0
        %1312 = vmatpush.msra.mxu0 0.0
        %1313 = vmatpush.msra.mxu0 %v1293
        %1314 = vmatpush.msra.mxu0 %v1292
        %1315 = vmatpush.msra.mxu0 %v1291
        %1316 = vmatpush.msra.mxu0 %v1290
        %1317 = vmatmul.f32.gmra.mxu0 %v1299
        %v1318 = vpop.f32.mrf.mxu0
        %v1319 = vadd.f32 %v1296, %v1318
        %1320 = vdwg.mxu0
        %v1321 = vld [vmem:[%s15] sm:$0xff]
        %v1322 = vld [vmem:[%s15 + $0x8] sm:$0xff]
        %v1323 = vld [vmem:[%s15 + $0x10] sm:$0xff]
        %v1324 = vld [vmem:[%s15 + $0x18] sm:$0xff]
        %v1325 = vld [vmem:[%s16] sm:$0x1]
        %v1327 = vsel %vm853, %v1319, 0
        %v1330 = vsel %vm853, %v1285, 0
        %v1333 = vsel %vm853, %v1288, 0
        %1335 = vmatpush.xpose.msra.mxu0 0.0
        %1336 = vmatpush.xpose.msra.mxu0 0.0
        %1337 = vmatpush.xpose.msra.mxu0 0.0
        %1338 = vmatpush.xpose.msra.mxu0 0.0
        %1339 = vmatpush.xpose.msra.mxu0 0.0
        %1340 = vmatpush.xpose.msra.mxu0 0.0
        %1341 = vmatpush.xpose.msra.mxu0 0.0
        %1342 = vmatpush.xpose.msra.mxu0 0.0
        %1343 = vmatpush.xpose.msra.mxu0 0.0
        %1344 = vmatpush.xpose.msra.mxu0 0.0
        %1345 = vmatpush.xpose.msra.mxu0 0.0
        %1346 = vmatpush.xpose.msra.mxu0 0.0
        %1347 = vmatpush.xpose.msra.mxu0 0.0
        %1348 = vmatpush.xpose.msra.mxu0 0.0
        %1349 = vmatpush.xpose.msra.mxu0 %v1333
        %1350 = vmatpush.xpose.msra.mxu0 %v1330
        %1351 = vmatmul.f32.gmra.mxu0 %v1327
        %v1352 = vpop.f32.mrf.mxu0
        %v1353 = vadd.f32 0.0, %v1352
        %1354 = vdwg.mxu0
        %v1355 = vmul.f32 %v1353, 0.35355338
        %v1357 = vperm.slane %v810, 0
        %v1359 = vadd.f32 %v1355, %v1357
        %vm1360 = vcmask 80896
        %v1361 = vsel %vm1360, %v1359, -inf
        %1362 = vmax.xlane.f32.xlu0 %v1361
        %v1363 = vpop.xlane.xlu0 %1362
        %v1364 = vsub.f32 %v1359, %v1363
        %v1365 = vmul.f32 %v1364, 1.442695
        %v1366 = vpow.pop %v1365
        %v1367 = vsel %vm1360, %v1366, 0.0
        %1368 = vadd.xlane.f32.xlu0 %v1367
        %v1369 = vpop.xlane.xlu0 %1368
        %v1370 = vrcp.pop %v1369
        %v1371 = vmul.f32 %v1369, %v1370
        %v1372 = vsub.f32 1.0, %v1371
        %v1373 = vmul.f32 %v1370, %v1372
        %v1374 = vadd.f32 %v1370, %v1373
        %vm1375 = vweird.f32 %v1369
        %vm1376 = vweird.f32 %v1370
        %vm1377 = vmor %vm1375, %vm1376
        %v1378 = vsel %vm1377, %v1370, %v1374
        %v1379 = vand.u32 2147483647, %v1369
        %vm1380 = vcmp.eq.f32.partialorder %v1379, 8.507059e+37
        %v1381 = vand.u32 %v1369, 2147483648
        %v1382 = vor.u32 1.1754944e-38, %v1381
        %v1383 = vsel %vm1380, %v1382, %v1378
        %v1384 = vmul.f32 %v1366, %v1383
        %1385 = vrot.lane.b32.xlu0 %v1285, 96
        %v1386 = vpop.permute.xlu0 %1385
        %1387 = vrot.lane.b32.xlu0 %v1288, 96
        %v1388 = vpop.permute.xlu0 %1387
        %v1391 = vsel %vm1360, %v1384, 0
        %vm1393 = vcmask 1041408
        %v1394 = vsel %vm1393, %v1388, 0
        %1396 = vmatpush.msra.mxu0 0.0
        %1397 = vmatpush.msra.mxu0 0.0
        %1398 = vmatpush.msra.mxu0 0.0
        %1399 = vmatpush.msra.mxu0 0.0
        %1400 = vmatpush.msra.mxu0 0.0
        %1401 = vmatpush.msra.mxu0 0.0
        %1402 = vmatpush.msra.mxu0 0.0
        %1403 = vmatpush.msra.mxu0 0.0
        %1404 = vmatpush.msra.mxu0 0.0
        %1405 = vmatpush.msra.mxu0 0.0
        %1406 = vmatpush.msra.mxu0 0.0
        %1407 = vmatpush.msra.mxu0 0.0
        %1408 = vmatpush.msra.mxu0 0.0
        %1409 = vmatpush.msra.mxu0 0.0
        %1410 = vmatpush.msra.mxu0 %v1394
        %1411 = vmatpush.msra.mxu0 %v1386
        %1412 = vmatmul.f32.gmra.mxu0 %v1391
        %v1413 = vpop.f32.mrf.mxu0
        %v1414 = vadd.f32 0.0, %v1413
        %1415 = vdwg.mxu0
        %1416 = vrot.lane.b32.xlu0 %v1319, 120
        %v1417 = vpop.permute.xlu0 %1416
        %1418 = vrot.lane.b32.xlu0 %v1285, 120
        %v1419 = vpop.permute.xlu0 %1418
        %1420 = vrot.lane.b32.xlu0 %v1288, 120
        %v1421 = vpop.permute.xlu0 %1420
        %v1422 = vsel %vm853, %v1417, 0
        %v1424 = vsel %vm853, %v1419, 0
        %v1426 = vsel %vm853, %v1421, 0
        %1428 = vmatpush.xpose.msra.mxu0 0.0
        %1429 = vmatpush.xpose.msra.mxu0 0.0
        %1430 = vmatpush.xpose.msra.mxu0 0.0
        %1431 = vmatpush.xpose.msra.mxu0 0.0
        %1432 = vmatpush.xpose.msra.mxu0 0.0
        %1433 = vmatpush.xpose.msra.mxu0 0.0
        %1434 = vmatpush.xpose.msra.mxu0 0.0
        %1435 = vmatpush.xpose.msra.mxu0 0.0
        %1436 = vmatpush.xpose.msra.mxu0 0.0
        %1437 = vmatpush.xpose.msra.mxu0 0.0
        %1438 = vmatpush.xpose.msra.mxu0 0.0
        %1439 = vmatpush.xpose.msra.mxu0 0.0
        %1440 = vmatpush.xpose.msra.mxu0 0.0
        %1441 = vmatpush.xpose.msra.mxu0 0.0
        %1442 = vmatpush.xpose.msra.mxu0 %v1426
        %1443 = vmatpush.xpose.msra.mxu0 %v1424
        %1444 = vmatmul.f32.gmra.mxu0 %v1422
        %v1445 = vpop.f32.mrf.mxu0
        %v1446 = vadd.f32 0.0, %v1445
        %1447 = vdwg.mxu0
        %v1448 = vmul.f32 %v1446, 0.35355338
        %v1449 = vadd.f32 %v1448, %v1357
        %v1450 = vsel %vm1360, %v1449, -inf
        %1451 = vmax.xlane.f32.xlu0 %v1450
        %v1452 = vpop.xlane.xlu0 %1451
        %v1453 = vsub.f32 %v1449, %v1452
        %v1454 = vmul.f32 %v1453, 1.442695
        %v1455 = vpow.pop %v1454
        %v1456 = vsel %vm1360, %v1455, 0.0
        %1457 = vadd.xlane.f32.xlu0 %v1456
        %v1458 = vpop.xlane.xlu0 %1457
        %v1459 = vrcp.pop %v1458
        %v1460 = vmul.f32 %v1458, %v1459
        %v1461 = vsub.f32 1.0, %v1460
        %v1462 = vmul.f32 %v1459, %v1461
        %v1463 = vadd.f32 %v1459, %v1462
        %vm1464 = vweird.f32 %v1458
        %vm1465 = vweird.f32 %v1459
        %vm1466 = vmor %vm1464, %vm1465
        %v1467 = vsel %vm1466, %v1459, %v1463
        %v1468 = vand.u32 2147483647, %v1458
        %vm1469 = vcmp.eq.f32.partialorder %v1468, 8.507059e+37
        %v1470 = vand.u32 %v1458, 2147483648
        %v1471 = vor.u32 1.1754944e-38, %v1470
        %v1472 = vsel %vm1469, %v1471, %v1467
        %v1473 = vmul.f32 %v1455, %v1472
        %1474 = vrot.lane.b32.xlu0 %v1285, 88
        %v1475 = vpop.permute.xlu0 %1474
        %1476 = vrot.lane.b32.xlu0 %v1288, 88
        %v1477 = vpop.permute.xlu0 %1476
        %v1480 = vsel %vm1360, %v1473, 0
        %v1482 = vsel %vm1393, %v1477, 0
        %1484 = vmatpush.msra.mxu0 0.0
        %1485 = vmatpush.msra.mxu0 0.0
        %1486 = vmatpush.msra.mxu0 0.0
        %1487 = vmatpush.msra.mxu0 0.0
        %1488 = vmatpush.msra.mxu0 0.0
        %1489 = vmatpush.msra.mxu0 0.0
        %1490 = vmatpush.msra.mxu0 0.0
        %1491 = vmatpush.msra.mxu0 0.0
        %1492 = vmatpush.msra.mxu0 0.0
        %1493 = vmatpush.msra.mxu0 0.0
        %1494 = vmatpush.msra.mxu0 0.0
        %1495 = vmatpush.msra.mxu0 0.0
        %1496 = vmatpush.msra.mxu0 0.0
        %1497 = vmatpush.msra.mxu0 0.0
        %1498 = vmatpush.msra.mxu0 %v1482
        %1499 = vmatpush.msra.mxu0 %v1475
        %1500 = vmatmul.f32.gmra.mxu0 %v1480
        %v1501 = vpop.f32.mrf.mxu0
        %v1502 = vadd.f32 0.0, %v1501
        %1503 = vdwg.mxu0
        %1504 = vrot.lane.b32.xlu0 %v1319, 112
        %v1505 = vpop.permute.xlu0 %1504
        %1506 = vrot.lane.b32.xlu0 %v1285, 112
        %v1507 = vpop.permute.xlu0 %1506
        %1508 = vrot.lane.b32.xlu0 %v1288, 112
        %v1509 = vpop.permute.xlu0 %1508
        %v1510 = vsel %vm853, %v1505, 0
        %v1512 = vsel %vm853, %v1507, 0
        %v1514 = vsel %vm853, %v1509, 0
        %1516 = vmatpush.xpose.msra.mxu0 0.0
        %1517 = vmatpush.xpose.msra.mxu0 0.0
        %1518 = vmatpush.xpose.msra.mxu0 0.0
        %1519 = vmatpush.xpose.msra.mxu0 0.0
        %1520 = vmatpush.xpose.msra.mxu0 0.0
        %1521 = vmatpush.xpose.msra.mxu0 0.0
        %1522 = vmatpush.xpose.msra.mxu0 0.0
        %1523 = vmatpush.xpose.msra.mxu0 0.0
        %1524 = vmatpush.xpose.msra.mxu0 0.0
        %1525 = vmatpush.xpose.msra.mxu0 0.0
        %1526 = vmatpush.xpose.msra.mxu0 0.0
        %1527 = vmatpush.xpose.msra.mxu0 0.0
        %1528 = vmatpush.xpose.msra.mxu0 0.0
        %1529 = vmatpush.xpose.msra.mxu0 0.0
        %1530 = vmatpush.xpose.msra.mxu0 %v1514
        %1531 = vmatpush.xpose.msra.mxu0 %v1512
        %1532 = vmatmul.f32.gmra.mxu0 %v1510
        %v1533 = vpop.f32.mrf.mxu0
        %v1534 = vadd.f32 0.0, %v1533
        %1535 = vdwg.mxu0
        %v1536 = vmul.f32 %v1534, 0.35355338
        %v1537 = vadd.f32 %v1536, %v1357
        %v1538 = vsel %vm1360, %v1537, -inf
        %1539 = vmax.xlane.f32.xlu0 %v1538
        %v1540 = vpop.xlane.xlu0 %1539
        %v1541 = vsub.f32 %v1537, %v1540
        %v1542 = vmul.f32 %v1541, 1.442695
        %v1543 = vpow.pop %v1542
        %v1544 = vsel %vm1360, %v1543, 0.0
        %1545 = vadd.xlane.f32.xlu0 %v1544
        %v1546 = vpop.xlane.xlu0 %1545
        %v1547 = vrcp.pop %v1546
        %v1548 = vmul.f32 %v1546, %v1547
        %v1549 = vsub.f32 1.0, %v1548
        %v1550 = vmul.f32 %v1547, %v1549
        %v1551 = vadd.f32 %v1547, %v1550
        %vm1552 = vweird.f32 %v1546
        %vm1553 = vweird.f32 %v1547
        %vm1554 = vmor %vm1552, %vm1553
        %v1555 = vsel %vm1554, %v1547, %v1551
        %v1556 = vand.u32 2147483647, %v1546
        %vm1557 = vcmp.eq.f32.partialorder %v1556, 8.507059e+37
        %v1558 = vand.u32 %v1546, 2147483648
        %v1559 = vor.u32 1.1754944e-38, %v1558
        %v1560 = vsel %vm1557, %v1559, %v1555
        %v1561 = vmul.f32 %v1543, %v1560
        %1562 = vrot.lane.b32.xlu0 %v1285, 80
        %v1563 = vpop.permute.xlu0 %1562
        %1564 = vrot.lane.b32.xlu0 %v1288, 80
        %v1565 = vpop.permute.xlu0 %1564
        %v1568 = vsel %vm1360, %v1561, 0
        %v1570 = vsel %vm1393, %v1565, 0
        %1572 = vmatpush.msra.mxu0 0.0
        %1573 = vmatpush.msra.mxu0 0.0
        %1574 = vmatpush.msra.mxu0 0.0
        %1575 = vmatpush.msra.mxu0 0.0
        %1576 = vmatpush.msra.mxu0 0.0
        %1577 = vmatpush.msra.mxu0 0.0
        %1578 = vmatpush.msra.mxu0 0.0
        %1579 = vmatpush.msra.mxu0 0.0
        %1580 = vmatpush.msra.mxu0 0.0
        %1581 = vmatpush.msra.mxu0 0.0
        %1582 = vmatpush.msra.mxu0 0.0
        %1583 = vmatpush.msra.mxu0 0.0
        %1584 = vmatpush.msra.mxu0 0.0
        %1585 = vmatpush.msra.mxu0 0.0
        %1586 = vmatpush.msra.mxu0 %v1570
        %1587 = vmatpush.msra.mxu0 %v1563
        %1588 = vmatmul.f32.gmra.mxu0 %v1568
        %v1589 = vpop.f32.mrf.mxu0
        %v1590 = vadd.f32 0.0, %v1589
        %1591 = vdwg.mxu0
        %1592 = vrot.lane.b32.xlu0 %v1319, 104
        %v1593 = vpop.permute.xlu0 %1592
        %1594 = vrot.lane.b32.xlu0 %v1285, 104
        %v1595 = vpop.permute.xlu0 %1594
        %1596 = vrot.lane.b32.xlu0 %v1288, 104
        %v1597 = vpop.permute.xlu0 %1596
        %v1598 = vsel %vm853, %v1593, 0
        %v1600 = vsel %vm853, %v1595, 0
        %v1602 = vsel %vm853, %v1597, 0
        %1604 = vmatpush.xpose.msra.mxu0 0.0
        %1605 = vmatpush.xpose.msra.mxu0 0.0
        %1606 = vmatpush.xpose.msra.mxu0 0.0
        %1607 = vmatpush.xpose.msra.mxu0 0.0
        %1608 = vmatpush.xpose.msra.mxu0 0.0
        %1609 = vmatpush.xpose.msra.mxu0 0.0
        %1610 = vmatpush.xpose.msra.mxu0 0.0
        %1611 = vmatpush.xpose.msra.mxu0 0.0
        %1612 = vmatpush.xpose.msra.mxu0 0.0
        %1613 = vmatpush.xpose.msra.mxu0 0.0
        %1614 = vmatpush.xpose.msra.mxu0 0.0
        %1615 = vmatpush.xpose.msra.mxu0 0.0
        %1616 = vmatpush.xpose.msra.mxu0 0.0
        %1617 = vmatpush.xpose.msra.mxu0 0.0
        %1618 = vmatpush.xpose.msra.mxu0 %v1602
        %1619 = vmatpush.xpose.msra.mxu0 %v1600
        %1620 = vmatmul.f32.gmra.mxu0 %v1598
        %v1621 = vpop.f32.mrf.mxu0
        %v1622 = vadd.f32 0.0, %v1621
        %1623 = vdwg.mxu0
        %v1624 = vmul.f32 %v1622, 0.35355338
        %v1625 = vadd.f32 %v1624, %v1357
        %v1626 = vsel %vm1360, %v1625, -inf
        %1627 = vmax.xlane.f32.xlu0 %v1626
        %v1628 = vpop.xlane.xlu0 %1627
        %v1629 = vsub.f32 %v1625, %v1628
        %v1630 = vmul.f32 %v1629, 1.442695
        %v1631 = vpow.pop %v1630
        %v1632 = vsel %vm1360, %v1631, 0.0
        %1633 = vadd.xlane.f32.xlu0 %v1632
        %v1634 = vpop.xlane.xlu0 %1633
        %v1635 = vrcp.pop %v1634
        %v1636 = vmul.f32 %v1634, %v1635
        %v1637 = vsub.f32 1.0, %v1636
        %v1638 = vmul.f32 %v1635, %v1637
        %v1639 = vadd.f32 %v1635, %v1638
        %vm1640 = vweird.f32 %v1634
        %vm1641 = vweird.f32 %v1635
        %vm1642 = vmor %vm1640, %vm1641
        %v1643 = vsel %vm1642, %v1635, %v1639
        %v1644 = vand.u32 2147483647, %v1634
        %vm1645 = vcmp.eq.f32.partialorder %v1644, 8.507059e+37
        %v1646 = vand.u32 %v1634, 2147483648
        %v1647 = vor.u32 1.1754944e-38, %v1646
        %v1648 = vsel %vm1645, %v1647, %v1643
        %v1649 = vmul.f32 %v1631, %v1648
        %1650 = vrot.lane.b32.xlu0 %v1285, 72
        %v1651 = vpop.permute.xlu0 %1650
        %1652 = vrot.lane.b32.xlu0 %v1288, 72
        %v1653 = vpop.permute.xlu0 %1652
        %v1656 = vsel %vm1360, %v1649, 0
        %v1658 = vsel %vm1393, %v1653, 0
        %1660 = vmatpush.msra.mxu0 0.0
        %1661 = vmatpush.msra.mxu0 0.0
        %1662 = vmatpush.msra.mxu0 0.0
        %1663 = vmatpush.msra.mxu0 0.0
        %1664 = vmatpush.msra.mxu0 0.0
        %1665 = vmatpush.msra.mxu0 0.0
        %1666 = vmatpush.msra.mxu0 0.0
        %1667 = vmatpush.msra.mxu0 0.0
        %1668 = vmatpush.msra.mxu0 0.0
        %1669 = vmatpush.msra.mxu0 0.0
        %1670 = vmatpush.msra.mxu0 0.0
        %1671 = vmatpush.msra.mxu0 0.0
        %1672 = vmatpush.msra.mxu0 0.0
        %1673 = vmatpush.msra.mxu0 0.0
        %1674 = vmatpush.msra.mxu0 %v1658
        %1675 = vmatpush.msra.mxu0 %v1651
        %1676 = vmatmul.f32.gmra.mxu0 %v1656
        %v1677 = vpop.f32.mrf.mxu0
        %v1678 = vadd.f32 0.0, %v1677
        %1679 = vdwg.mxu0
        %1681 = vrot.lane.b32.xlu0 %v1502, 8
        %v1682 = vpop.permute.xlu0 %1681
        %1685 = vrot.lane.b32.xlu0 %v1590, 16
        %v1686 = vpop.permute.xlu0 %1685
        %1689 = vrot.lane.b32.xlu0 %v1678, 24
        %v1690 = vpop.permute.xlu0 %1689
        %v1692 = vsel %vm853, %v1414, %v1682
        %v1693 = vsel %vm1183, %v1692, %v1686
        %v1694 = vsel %vm1185, %v1693, %v1690
        %v1696 = vperm.slane %v1325, 0
        %v1699 = vsel %vm821, %v1694, 0
        %1701 = vmatpush.msra.mxu0 0.0
        %1702 = vmatpush.msra.mxu0 0.0
        %1703 = vmatpush.msra.mxu0 0.0
        %1704 = vmatpush.msra.mxu0 0.0
        %1705 = vmatpush.msra.mxu0 0.0
        %1706 = vmatpush.msra.mxu0 0.0
        %1707 = vmatpush.msra.mxu0 0.0
        %1708 = vmatpush.msra.mxu0 0.0
        %1709 = vmatpush.msra.mxu0 0.0
        %1710 = vmatpush.msra.mxu0 0.0
        %1711 = vmatpush.msra.mxu0 0.0
        %1712 = vmatpush.msra.mxu0 0.0
        %1713 = vmatpush.msra.mxu0 %v1324
        %1714 = vmatpush.msra.mxu0 %v1323
        %1715 = vmatpush.msra.mxu0 %v1322
        %1716 = vmatpush.msra.mxu0 %v1321
        %1717 = vmatmul.f32.gmra.mxu0 %v1699
        %v1718 = vpop.f32.mrf.mxu0
        %v1719 = vadd.f32 %v1696, %v1718
        %1720 = vdwg.mxu0
        %v1721 = vmul.f32 %v1719, %v1216
        %v1722 = vadd.f32 %v1252, %v1721
        %v1723 = vsel %vm821, %v1722, 0.0
        %1724 = vadd.xlane.f32.xlu0 %v1723
        %v1725 = vpop.xlane.xlu0 %1724
        %v1726 = vmul.f32 %v1725, %v1229
        %v1727 = vsub.f32 %v1722, %v1726
        %v1728 = vmul.f32 %v1727, %v1727
        %v1729 = vsel %vm821, %v1728, 0.0
        %1730 = vadd.xlane.f32.xlu0 %v1729
        %v1731 = vpop.xlane.xlu0 %1730
        %v1732 = vmul.f32 %v1731, %v1229
        %v1733 = vadd.f32 %v1732, 1e-05
        %v1734 = vrsqrt.pop %v1733
        %v1735 = vmul.f32 %v1734, %v1733
        %v1736 = vmul.f32 %v1735, %v1734
        %v1737 = vmul.f32 0.5, %v1736
        %v1738 = vsub.f32 1.5, %v1737
        %v1739 = vmul.f32 %v1734, %v1738
        %vm1740 = vweird.f32 %v1733
        %vm1741 = vweird.f32 %v1734
        %vm1742 = vmor %vm1740, %vm1741
        %v1743 = vsel %vm1742, %v1734, %v1739
        %v1744 = vmul.f32 %v1727, %v1743
        %v1745 = vperm.slane %v811, 1
        %v1746 = vmul.f32 %v1744, %v1745
        %v1747 = vperm.slane %v812, 1
        %v1748 = vadd.f32 %v1746, %v1747
        %v1749 = vld [vmem:[%s17] sm:$0xff]
        %v1750 = vld [vmem:[%s17 + $0x8] sm:$0xff]
        %v1751 = vld [vmem:[%s17 + $0x10] sm:$0xff]
        %v1752 = vld [vmem:[%s17 + $0x18] sm:$0xff]
        %v1753 = vld [vmem:[%s18] sm:$0x1]
        %v1755 = vperm.slane %v1753, 0
        %v1758 = vsel %vm821, %v1748, 0
        %1760 = vmatpush.msra.mxu0 0.0
        %1761 = vmatpush.msra.mxu0 0.0
        %1762 = vmatpush.msra.mxu0 0.0
        %1763 = vmatpush.msra.mxu0 0.0
        %1764 = vmatpush.msra.mxu0 0.0
        %1765 = vmatpush.msra.mxu0 0.0
        %1766 = vmatpush.msra.mxu0 0.0
        %1767 = vmatpush.msra.mxu0 0.0
        %1768 = vmatpush.msra.mxu0 0.0
        %1769 = vmatpush.msra.mxu0 0.0
        %1770 = vmatpush.msra.mxu0 0.0
        %1771 = vmatpush.msra.mxu0 0.0
        %1772 = vmatpush.msra.mxu0 %v1752
        %1773 = vmatpush.msra.mxu0 %v1751
        %1774 = vmatpush.msra.mxu0 %v1750
        %1775 = vmatpush.msra.mxu0 %v1749
        %1776 = vmatmul.f32.gmra.mxu0 %v1758
        %v1777 = vpop.f32.mrf.mxu0
        %v1778 = vadd.f32 %v1755, %v1777
        %1779 = vdwg.mxu0
        %v1780 = vmax.f32 %v1778, 0.0
        %v1781 = vld [vmem:[%s19] sm:$0xff]
        %v1782 = vld [vmem:[%s19 + $0x8] sm:$0xff]
        %v1783 = vld [vmem:[%s19 + $0x10] sm:$0xff]
        %v1784 = vld [vmem:[%s19 + $0x18] sm:$0xff]
        %v1785 = vld [vmem:[%s19 + $0x20] sm:$0xff]
        %v1786 = vld [vmem:[%s19 + $0x28] sm:$0xff]
        %v1787 = vld [vmem:[%s19 + $0x30] sm:$0xff]
        %v1788 = vld [vmem:[%s19 + $0x38] sm:$0xff]
        %v1789 = vld [vmem:[%s20] sm:$0x1]
        %v1791 = vperm.slane %v1789, 0
        %vm1793 = vcmask 523264
        %v1795 = vsel %vm1793, %v1780, 0
        %1797 = vmatpush.msra.mxu0 0.0
        %1798 = vmatpush.msra.mxu0 0.0
        %1799 = vmatpush.msra.mxu0 0.0
        %1800 = vmatpush.msra.mxu0 0.0
        %1801 = vmatpush.msra.mxu0 0.0
        %1802 = vmatpush.msra.mxu0 0.0
        %1803 = vmatpush.msra.mxu0 0.0
        %1804 = vmatpush.msra.mxu0 0.0
        %1805 = vmatpush.msra.mxu0 %v1788
        %1806 = vmatpush.msra.mxu0 %v1787
        %1807 = vmatpush.msra.mxu0 %v1786
        %1808 = vmatpush.msra.mxu0 %v1785
        %1809 = vmatpush.msra.mxu0 %v1784
        %1810 = vmatpush.msra.mxu0 %v1783
        %1811 = vmatpush.msra.mxu0 %v1782
        %1812 = vmatpush.msra.mxu0 %v1781
        %1813 = vmatmul.f32.gmra.mxu0 %v1795
        %v1814 = vpop.f32.mrf.mxu0
        %v1815 = vadd.f32 %v1791, %v1814
        %1816 = vdwg.mxu0
        %v1817 = vadd.f32 %v1748, %v1815
        %v1818 = vsel %vm821, %v1817, 0.0
        %1819 = vadd.xlane.f32.xlu0 %v1818
        %v1820 = vpop.xlane.xlu0 %1819
        %v1821 = vmul.f32 %v1820, %v1229
        %v1822 = vsub.f32 %v1817, %v1821
        %v1823 = vmul.f32 %v1822, %v1822
        %v1824 = vsel %vm821, %v1823, 0.0
        %1825 = vadd.xlane.f32.xlu0 %v1824
        %v1826 = vpop.xlane.xlu0 %1825
        %v1827 = vmul.f32 %v1826, %v1229
        %v1828 = vadd.f32 %v1827, 1e-05
        %v1829 = vrsqrt.pop %v1828
        %v1830 = vmul.f32 %v1829, %v1828
        %v1831 = vmul.f32 %v1830, %v1829
        %v1832 = vmul.f32 0.5, %v1831
        %v1833 = vsub.f32 1.5, %v1832
        %v1834 = vmul.f32 %v1829, %v1833
        %vm1835 = vweird.f32 %v1828
        %vm1836 = vweird.f32 %v1829
        %vm1837 = vmor %vm1835, %vm1836
        %v1838 = vsel %vm1837, %v1829, %v1834
        %v1839 = vmul.f32 %v1822, %v1838
        %v1840 = vperm.slane %v811, 2
        %v1841 = vmul.f32 %v1839, %v1840
        %v1842 = vperm.slane %v812, 2
        %v1843 = vadd.f32 %v1841, %v1842
        %s1844 = scalar_lea.vmem %s5, 4
        %v1845 = vld [vmem:[%s1844] sm:$0x7]
        %s1846 = scalar_lea.vmem %s6, 4
        %v1847 = vld [vmem:[%s1846] sm:$0x7]
        %s1848 = scalar_lea.vmem %s7, 32
        %v1849 = vld [vmem:[%s1848] sm:$0xff]
        %v1850 = vld [vmem:[%s1848 + $0x8] sm:$0xff]
        %v1851 = vld [vmem:[%s1848 + $0x10] sm:$0xff]
        %v1852 = vld [vmem:[%s1848 + $0x18] sm:$0xff]
        %s1853 = scalar_lea.vmem %s8, 1
        %v1854 = vld [vmem:[%s1853] sm:$0x1]
        %v1856 = vperm.slane %v1854, 0
        %v1859 = vsel %vm821, %v1843, 0
        %1861 = vmatpush.msra.mxu0 0.0
        %1862 = vmatpush.msra.mxu0 0.0
        %1863 = vmatpush.msra.mxu0 0.0
        %1864 = vmatpush.msra.mxu0 0.0
        %1865 = vmatpush.msra.mxu0 0.0
        %1866 = vmatpush.msra.mxu0 0.0
        %1867 = vmatpush.msra.mxu0 0.0
        %1868 = vmatpush.msra.mxu0 0.0
        %1869 = vmatpush.msra.mxu0 0.0
        %1870 = vmatpush.msra.mxu0 0.0
        %1871 = vmatpush.msra.mxu0 0.0
        %1872 = vmatpush.msra.mxu0 0.0
        %1873 = vmatpush.msra.mxu0 %v1852
        %1874 = vmatpush.msra.mxu0 %v1851
        %1875 = vmatpush.msra.mxu0 %v1850
        %1876 = vmatpush.msra.mxu0 %v1849
        %1877 = vmatmul.f32.gmra.mxu0 %v1859
        %v1878 = vpop.f32.mrf.mxu0
        %v1879 = vadd.f32 %v1856, %v1878
        %1880 = vdwg.mxu0
        %s1881 = scalar_lea.vmem %s9, 32
        %v1882 = vld [vmem:[%s1881] sm:$0xff]
        %v1883 = vld [vmem:[%s1881 + $0x8] sm:$0xff]
        %v1884 = vld [vmem:[%s1881 + $0x10] sm:$0xff]
        %v1885 = vld [vmem:[%s1881 + $0x18] sm:$0xff]
        %s1886 = scalar_lea.vmem %s10, 1
        %v1887 = vld [vmem:[%s1886] sm:$0x1]
        %1889 = vrot.lane.b32.xlu0 %v1879, 64
        %v1890 = vpop.permute.xlu0 %1889
        %v1891 = vsel %vm853, %v1890, 0
        %v1893 = vsel %vm853, %v1879, 0
        %1895 = vmatpush.xpose.msra.mxu0 0.0
        %1896 = vmatpush.xpose.msra.mxu0 0.0
        %1897 = vmatpush.xpose.msra.mxu0 0.0
        %1898 = vmatpush.xpose.msra.mxu0 0.0
        %1899 = vmatpush.xpose.msra.mxu0 0.0
        %1900 = vmatpush.xpose.msra.mxu0 0.0
        %1901 = vmatpush.xpose.msra.mxu0 0.0
        %1902 = vmatpush.xpose.msra.mxu0 0.0
        %1903 = vmatpush.xpose.msra.mxu0 0.0
        %1904 = vmatpush.xpose.msra.mxu0 0.0
        %1905 = vmatpush.xpose.msra.mxu0 0.0
        %1906 = vmatpush.xpose.msra.mxu0 0.0
        %1907 = vmatpush.xpose.msra.mxu0 0.0
        %1908 = vmatpush.xpose.msra.mxu0 0.0
        %1909 = vmatpush.xpose.msra.mxu0 0.0
        %1910 = vmatpush.xpose.msra.mxu0 %v1893
        %1911 = vmatmul.f32.gmra.mxu0 %v1891
        %v1912 = vpop.f32.mrf.mxu0
        %v1913 = vadd.f32 0.0, %v1912
        %1914 = vdwg.mxu0
        %v1915 = vmul.f32 %v1913, 0.35355338
        %v1916 = vadd.f32 %v1915, %v808
        %v1917 = vsel %vm853, %v1916, -inf
        %1918 = vmax.xlane.f32.xlu0 %v1917
        %v1919 = vpop.xlane.xlu0 %1918
        %v1920 = vsub.f32 %v1916, %v1919
        %v1921 = vmul.f32 %v1920, 1.442695
        %v1922 = vpow.pop %v1921
        %v1923 = vsel %vm853, %v1922, 0.0
        %1924 = vadd.xlane.f32.xlu0 %v1923
        %v1925 = vpop.xlane.xlu0 %1924
        %v1926 = vrcp.pop %v1925
        %v1927 = vmul.f32 %v1925, %v1926
        %v1928 = vsub.f32 1.0, %v1927
        %v1929 = vmul.f32 %v1926, %v1928
        %v1930 = vadd.f32 %v1926, %v1929
        %vm1931 = vweird.f32 %v1925
        %vm1932 = vweird.f32 %v1926
        %vm1933 = vmor %vm1931, %vm1932
        %v1934 = vsel %vm1933, %v1926, %v1930
        %v1935 = vand.u32 2147483647, %v1925
        %vm1936 = vcmp.eq.f32.partialorder %v1935, 8.507059e+37
        %v1937 = vand.u32 %v1925, 2147483648
        %v1938 = vor.u32 1.1754944e-38, %v1937
        %v1939 = vsel %vm1936, %v1938, %v1934
        %v1940 = vmul.f32 %v1922, %v1939
        %1941 = vrot.lane.b32.xlu0 %v1879, 96
        %v1942 = vpop.permute.xlu0 %1941
        %v1945 = vsel %vm853, %v1940, 0
        %1947 = vmatpush.msra.mxu0 0.0
        %1948 = vmatpush.msra.mxu0 0.0
        %1949 = vmatpush.msra.mxu0 0.0
        %1950 = vmatpush.msra.mxu0 0.0
        %1951 = vmatpush.msra.mxu0 0.0
        %1952 = vmatpush.msra.mxu0 0.0
        %1953 = vmatpush.msra.mxu0 0.0
        %1954 = vmatpush.msra.mxu0 0.0
        %1955 = vmatpush.msra.mxu0 0.0
        %1956 = vmatpush.msra.mxu0 0.0
        %1957 = vmatpush.msra.mxu0 0.0
        %1958 = vmatpush.msra.mxu0 0.0
        %1959 = vmatpush.msra.mxu0 0.0
        %1960 = vmatpush.msra.mxu0 0.0
        %1961 = vmatpush.msra.mxu0 0.0
        %1962 = vmatpush.msra.mxu0 %v1942
        %1963 = vmatmul.f32.gmra.mxu0 %v1945
        %v1964 = vpop.f32.mrf.mxu0
        %v1965 = vadd.f32 0.0, %v1964
        %1966 = vdwg.mxu0
        %1967 = vrot.lane.b32.xlu0 %v1879, 56
        %v1968 = vpop.permute.xlu0 %1967
        %1969 = vrot.lane.b32.xlu0 %v1879, 120
        %v1970 = vpop.permute.xlu0 %1969
        %v1971 = vsel %vm853, %v1968, 0
        %v1973 = vsel %vm853, %v1970, 0
        %1975 = vmatpush.xpose.msra.mxu0 0.0
        %1976 = vmatpush.xpose.msra.mxu0 0.0
        %1977 = vmatpush.xpose.msra.mxu0 0.0
        %1978 = vmatpush.xpose.msra.mxu0 0.0
        %1979 = vmatpush.xpose.msra.mxu0 0.0
        %1980 = vmatpush.xpose.msra.mxu0 0.0
        %1981 = vmatpush.xpose.msra.mxu0 0.0
        %1982 = vmatpush.xpose.msra.mxu0 0.0
        %1983 = vmatpush.xpose.msra.mxu0 0.0
        %1984 = vmatpush.xpose.msra.mxu0 0.0
        %1985 = vmatpush.xpose.msra.mxu0 0.0
        %1986 = vmatpush.xpose.msra.mxu0 0.0
        %1987 = vmatpush.xpose.msra.mxu0 0.0
        %1988 = vmatpush.xpose.msra.mxu0 0.0
        %1989 = vmatpush.xpose.msra.mxu0 0.0
        %1990 = vmatpush.xpose.msra.mxu0 %v1973
        %1991 = vmatmul.f32.gmra.mxu0 %v1971
        %v1992 = vpop.f32.mrf.mxu0
        %v1993 = vadd.f32 0.0, %v1992
        %1994 = vdwg.mxu0
        %v1995 = vmul.f32 %v1993, 0.35355338
        %v1996 = vadd.f32 %v1995, %v808
        %v1997 = vsel %vm853, %v1996, -inf
        %1998 = vmax.xlane.f32.xlu0 %v1997
        %v1999 = vpop.xlane.xlu0 %1998
        %v2000 = vsub.f32 %v1996, %v1999
        %v2001 = vmul.f32 %v2000, 1.442695
        %v2002 = vpow.pop %v2001
        %v2003 = vsel %vm853, %v2002, 0.0
        %2004 = vadd.xlane.f32.xlu0 %v2003
        %v2005 = vpop.xlane.xlu0 %2004
        %v2006 = vrcp.pop %v2005
        %v2007 = vmul.f32 %v2005, %v2006
        %v2008 = vsub.f32 1.0, %v2007
        %v2009 = vmul.f32 %v2006, %v2008
        %v2010 = vadd.f32 %v2006, %v2009
        %vm2011 = vweird.f32 %v2005
        %vm2012 = vweird.f32 %v2006
        %vm2013 = vmor %vm2011, %vm2012
        %v2014 = vsel %vm2013, %v2006, %v2010
        %v2015 = vand.u32 2147483647, %v2005
        %vm2016 = vcmp.eq.f32.partialorder %v2015, 8.507059e+37
        %v2017 = vand.u32 %v2005, 2147483648
        %v2018 = vor.u32 1.1754944e-38, %v2017
        %v2019 = vsel %vm2016, %v2018, %v2014
        %v2020 = vmul.f32 %v2002, %v2019
        %2021 = vrot.lane.b32.xlu0 %v1879, 88
        %v2022 = vpop.permute.xlu0 %2021
        %v2025 = vsel %vm853, %v2020, 0
        %2027 = vmatpush.msra.mxu0 0.0
        %2028 = vmatpush.msra.mxu0 0.0
        %2029 = vmatpush.msra.mxu0 0.0
        %2030 = vmatpush.msra.mxu0 0.0
        %2031 = vmatpush.msra.mxu0 0.0
        %2032 = vmatpush.msra.mxu0 0.0
        %2033 = vmatpush.msra.mxu0 0.0
        %2034 = vmatpush.msra.mxu0 0.0
        %2035 = vmatpush.msra.mxu0 0.0
        %2036 = vmatpush.msra.mxu0 0.0
        %2037 = vmatpush.msra.mxu0 0.0
        %2038 = vmatpush.msra.mxu0 0.0
        %2039 = vmatpush.msra.mxu0 0.0
        %2040 = vmatpush.msra.mxu0 0.0
        %2041 = vmatpush.msra.mxu0 0.0
        %2042 = vmatpush.msra.mxu0 %v2022
        %2043 = vmatmul.f32.gmra.mxu0 %v2025
        %v2044 = vpop.f32.mrf.mxu0
        %v2045 = vadd.f32 0.0, %v2044
        %2046 = vdwg.mxu0
        %2047 = vrot.lane.b32.xlu0 %v1879, 48
        %v2048 = vpop.permute.xlu0 %2047
        %2049 = vrot.lane.b32.xlu0 %v1879, 112
        %v2050 = vpop.permute.xlu0 %2049
        %v2051 = vsel %vm853, %v2048, 0
        %v2053 = vsel %vm853, %v2050, 0
        %2055 = vmatpush.xpose.msra.mxu0 0.0
        %2056 = vmatpush.xpose.msra.mxu0 0.0
        %2057 = vmatpush.xpose.msra.mxu0 0.0
        %2058 = vmatpush.xpose.msra.mxu0 0.0
        %2059 = vmatpush.xpose.msra.mxu0 0.0
        %2060 = vmatpush.xpose.msra.mxu0 0.0
        %2061 = vmatpush.xpose.msra.mxu0 0.0
        %2062 = vmatpush.xpose.msra.mxu0 0.0
        %2063 = vmatpush.xpose.msra.mxu0 0.0
        %2064 = vmatpush.xpose.msra.mxu0 0.0
        %2065 = vmatpush.xpose.msra.mxu0 0.0
        %2066 = vmatpush.xpose.msra.mxu0 0.0
        %2067 = vmatpush.xpose.msra.mxu0 0.0
        %2068 = vmatpush.xpose.msra.mxu0 0.0
        %2069 = vmatpush.xpose.msra.mxu0 0.0
        %2070 = vmatpush.xpose.msra.mxu0 %v2053
        %2071 = vmatmul.f32.gmra.mxu0 %v2051
        %v2072 = vpop.f32.mrf.mxu0
        %v2073 = vadd.f32 0.0, %v2072
        %2074 = vdwg.mxu0
        %v2075 = vmul.f32 %v2073, 0.35355338
        %v2076 = vadd.f32 %v2075, %v808
        %v2077 = vsel %vm853, %v2076, -inf
        %2078 = vmax.xlane.f32.xlu0 %v2077
        %v2079 = vpop.xlane.xlu0 %2078
        %v2080 = vsub.f32 %v2076, %v2079
        %v2081 = vmul.f32 %v2080, 1.442695
        %v2082 = vpow.pop %v2081
        %v2083 = vsel %vm853, %v2082, 0.0
        %2084 = vadd.xlane.f32.xlu0 %v2083
        %v2085 = vpop.xlane.xlu0 %2084
        %v2086 = vrcp.pop %v2085
        %v2087 = vmul.f32 %v2085, %v2086
        %v2088 = vsub.f32 1.0, %v2087
        %v2089 = vmul.f32 %v2086, %v2088
        %v2090 = vadd.f32 %v2086, %v2089
        %vm2091 = vweird.f32 %v2085
        %vm2092 = vweird.f32 %v2086
        %vm2093 = vmor %vm2091, %vm2092
        %v2094 = vsel %vm2093, %v2086, %v2090
        %v2095 = vand.u32 2147483647, %v2085
        %vm2096 = vcmp.eq.f32.partialorder %v2095, 8.507059e+37
        %v2097 = vand.u32 %v2085, 2147483648
        %v2098 = vor.u32 1.1754944e-38, %v2097
        %v2099 = vsel %vm2096, %v2098, %v2094
        %v2100 = vmul.f32 %v2082, %v2099
        %2101 = vrot.lane.b32.xlu0 %v1879, 80
        %v2102 = vpop.permute.xlu0 %2101
        %v2105 = vsel %vm853, %v2100, 0
        %2107 = vmatpush.msra.mxu0 0.0
        %2108 = vmatpush.msra.mxu0 0.0
        %2109 = vmatpush.msra.mxu0 0.0
        %2110 = vmatpush.msra.mxu0 0.0
        %2111 = vmatpush.msra.mxu0 0.0
        %2112 = vmatpush.msra.mxu0 0.0
        %2113 = vmatpush.msra.mxu0 0.0
        %2114 = vmatpush.msra.mxu0 0.0
        %2115 = vmatpush.msra.mxu0 0.0
        %2116 = vmatpush.msra.mxu0 0.0
        %2117 = vmatpush.msra.mxu0 0.0
        %2118 = vmatpush.msra.mxu0 0.0
        %2119 = vmatpush.msra.mxu0 0.0
        %2120 = vmatpush.msra.mxu0 0.0
        %2121 = vmatpush.msra.mxu0 0.0
        %2122 = vmatpush.msra.mxu0 %v2102
        %2123 = vmatmul.f32.gmra.mxu0 %v2105
        %v2124 = vpop.f32.mrf.mxu0
        %v2125 = vadd.f32 0.0, %v2124
        %2126 = vdwg.mxu0
        %2127 = vrot.lane.b32.xlu0 %v1879, 40
        %v2128 = vpop.permute.xlu0 %2127
        %2129 = vrot.lane.b32.xlu0 %v1879, 104
        %v2130 = vpop.permute.xlu0 %2129
        %v2131 = vsel %vm853, %v2128, 0
        %v2133 = vsel %vm853, %v2130, 0
        %2135 = vmatpush.xpose.msra.mxu0 0.0
        %2136 = vmatpush.xpose.msra.mxu0 0.0
        %2137 = vmatpush.xpose.msra.mxu0 0.0
        %2138 = vmatpush.xpose.msra.mxu0 0.0
        %2139 = vmatpush.xpose.msra.mxu0 0.0
        %2140 = vmatpush.xpose.msra.mxu0 0.0
        %2141 = vmatpush.xpose.msra.mxu0 0.0
        %2142 = vmatpush.xpose.msra.mxu0 0.0
        %2143 = vmatpush.xpose.msra.mxu0 0.0
        %2144 = vmatpush.xpose.msra.mxu0 0.0
        %2145 = vmatpush.xpose.msra.mxu0 0.0
        %2146 = vmatpush.xpose.msra.mxu0 0.0
        %2147 = vmatpush.xpose.msra.mxu0 0.0
        %2148 = vmatpush.xpose.msra.mxu0 0.0
        %2149 = vmatpush.xpose.msra.mxu0 0.0
        %2150 = vmatpush.xpose.msra.mxu0 %v2133
        %2151 = vmatmul.f32.gmra.mxu0 %v2131
        %v2152 = vpop.f32.mrf.mxu0
        %v2153 = vadd.f32 0.0, %v2152
        %2154 = vdwg.mxu0
        %v2155 = vmul.f32 %v2153, 0.35355338
        %v2156 = vadd.f32 %v2155, %v808
        %v2157 = vsel %vm853, %v2156, -inf
        %2158 = vmax.xlane.f32.xlu0 %v2157
        %v2159 = vpop.xlane.xlu0 %2158
        %v2160 = vsub.f32 %v2156, %v2159
        %v2161 = vmul.f32 %v2160, 1.442695
        %v2162 = vpow.pop %v2161
        %v2163 = vsel %vm853, %v2162, 0.0
        %2164 = vadd.xlane.f32.xlu0 %v2163
        %v2165 = vpop.xlane.xlu0 %2164
        %v2166 = vrcp.pop %v2165
        %v2167 = vmul.f32 %v2165, %v2166
        %v2168 = vsub.f32 1.0, %v2167
        %v2169 = vmul.f32 %v2166, %v2168
        %v2170 = vadd.f32 %v2166, %v2169
        %vm2171 = vweird.f32 %v2165
        %vm2172 = vweird.f32 %v2166
        %vm2173 = vmor %vm2171, %vm2172
        %v2174 = vsel %vm2173, %v2166, %v2170
        %v2175 = vand.u32 2147483647, %v2165
        %vm2176 = vcmp.eq.f32.partialorder %v2175, 8.507059e+37
        %v2177 = vand.u32 %v2165, 2147483648
        %v2178 = vor.u32 1.1754944e-38, %v2177
        %v2179 = vsel %vm2176, %v2178, %v2174
        %v2180 = vmul.f32 %v2162, %v2179
        %2181 = vrot.lane.b32.xlu0 %v1879, 72
        %v2182 = vpop.permute.xlu0 %2181
        %v2185 = vsel %vm853, %v2180, 0
        %2187 = vmatpush.msra.mxu0 0.0
        %2188 = vmatpush.msra.mxu0 0.0
        %2189 = vmatpush.msra.mxu0 0.0
        %2190 = vmatpush.msra.mxu0 0.0
        %2191 = vmatpush.msra.mxu0 0.0
        %2192 = vmatpush.msra.mxu0 0.0
        %2193 = vmatpush.msra.mxu0 0.0
        %2194 = vmatpush.msra.mxu0 0.0
        %2195 = vmatpush.msra.mxu0 0.0
        %2196 = vmatpush.msra.mxu0 0.0
        %2197 = vmatpush.msra.mxu0 0.0
        %2198 = vmatpush.msra.mxu0 0.0
        %2199 = vmatpush.msra.mxu0 0.0
        %2200 = vmatpush.msra.mxu0 0.0
        %2201 = vmatpush.msra.mxu0 0.0
        %2202 = vmatpush.msra.mxu0 %v2182
        %2203 = vmatmul.f32.gmra.mxu0 %v2185
        %v2204 = vpop.f32.mrf.mxu0
        %v2205 = vadd.f32 0.0, %v2204
        %2206 = vdwg.mxu0
        %2208 = vrot.lane.b32.xlu0 %v2045, 8
        %v2209 = vpop.permute.xlu0 %2208
        %2212 = vrot.lane.b32.xlu0 %v2125, 16
        %v2213 = vpop.permute.xlu0 %2212
        %2216 = vrot.lane.b32.xlu0 %v2205, 24
        %v2217 = vpop.permute.xlu0 %2216
        %v2219 = vsel %vm853, %v1965, %v2209
        %v2220 = vsel %vm1183, %v2219, %v2213
        %v2221 = vsel %vm1185, %v2220, %v2217
        %2222 = vrot.lane.b32.xlu0 %v2020, 8
        %v2223 = vpop.permute.xlu0 %2222
        %2225 = vrot.lane.b32.xlu0 %v2100, 16
        %v2226 = vpop.permute.xlu0 %2225
        %2228 = vrot.lane.b32.xlu0 %v2180, 24
        %v2229 = vpop.permute.xlu0 %2228
        %v2231 = vsel %vm853, %v1940, %v2223
        %v2232 = vsel %vm1183, %v2231, %v2226
        %v2233 = vsel %vm1185, %v2232, %v2229
        %v2235 = vperm.slane %v1887, 0
        %v2238 = vsel %vm821, %v2221, 0
        %2240 = vmatpush.msra.mxu0 0.0
        %2241 = vmatpush.msra.mxu0 0.0
        %2242 = vmatpush.msra.mxu0 0.0
        %2243 = vmatpush.msra.mxu0 0.0
        %2244 = vmatpush.msra.mxu0 0.0
        %2245 = vmatpush.msra.mxu0 0.0
        %2246 = vmatpush.msra.mxu0 0.0
        %2247 = vmatpush.msra.mxu0 0.0
        %2248 = vmatpush.msra.mxu0 0.0
        %2249 = vmatpush.msra.mxu0 0.0
        %2250 = vmatpush.msra.mxu0 0.0
        %2251 = vmatpush.msra.mxu0 0.0
        %2252 = vmatpush.msra.mxu0 %v1885
        %2253 = vmatpush.msra.mxu0 %v1884
        %2254 = vmatpush.msra.mxu0 %v1883
        %2255 = vmatpush.msra.mxu0 %v1882
        %2256 = vmatmul.f32.gmra.mxu0 %v2238
        %v2257 = vpop.f32.mrf.mxu0
        %v2258 = vadd.f32 %v2235, %v2257
        %2259 = vdwg.mxu0
        %v2260 = vmul.f32 %v2258, %v1216
        %2261 = vst.msk [vmem:[%s787] sm:$0xff] %vm821, %v2233
        %v2262 = vadd.f32 %v1843, %v2260
        %v2263 = vsel %vm821, %v2262, 0.0
        %2264 = vadd.xlane.f32.xlu0 %v2263
        %v2265 = vpop.xlane.xlu0 %2264
        %v2266 = vmul.f32 %v2265, %v1229
        %v2267 = vsub.f32 %v2262, %v2266
        %v2268 = vmul.f32 %v2267, %v2267
        %v2269 = vsel %vm821, %v2268, 0.0
        %2270 = vadd.xlane.f32.xlu0 %v2269
        %v2271 = vpop.xlane.xlu0 %2270
        %v2272 = vmul.f32 %v2271, %v1229
        %v2273 = vadd.f32 %v2272, 1e-05
        %v2274 = vrsqrt.pop %v2273
        %v2275 = vmul.f32 %v2274, %v2273
        %v2276 = vmul.f32 %v2275, %v2274
        %v2277 = vmul.f32 0.5, %v2276
        %v2278 = vsub.f32 1.5, %v2277
        %v2279 = vmul.f32 %v2274, %v2278
        %vm2280 = vweird.f32 %v2273
        %vm2281 = vweird.f32 %v2274
        %vm2282 = vmor %vm2280, %vm2281
        %v2283 = vsel %vm2282, %v2274, %v2279
        %v2284 = vmul.f32 %v2267, %v2283
        %v2285 = vperm.slane %v1845, 0
        %v2286 = vmul.f32 %v2284, %v2285
        %v2287 = vperm.slane %v1847, 0
        %v2288 = vadd.f32 %v2286, %v2287
        %s2289 = scalar_lea.vmem %s11, 32
        %v2290 = vld [vmem:[%s2289] sm:$0xff]
        %v2291 = vld [vmem:[%s2289 + $0x8] sm:$0xff]
        %v2292 = vld [vmem:[%s2289 + $0x10] sm:$0xff]
        %v2293 = vld [vmem:[%s2289 + $0x18] sm:$0xff]
        %s2294 = scalar_lea.vmem %s12, 1
        %v2295 = vld [vmem:[%s2294] sm:$0x1]
        %v2297 = vperm.slane %v2295, 0
        %2299 = vmatpush.msra.mxu0 0.0
        %2300 = vmatpush.msra.mxu0 0.0
        %2301 = vmatpush.msra.mxu0 0.0
        %2302 = vmatpush.msra.mxu0 0.0
        %2303 = vmatpush.msra.mxu0 0.0
        %2304 = vmatpush.msra.mxu0 0.0
        %2305 = vmatpush.msra.mxu0 0.0
        %2306 = vmatpush.msra.mxu0 0.0
        %2307 = vmatpush.msra.mxu0 0.0
        %2308 = vmatpush.msra.mxu0 0.0
        %2309 = vmatpush.msra.mxu0 0.0
        %2310 = vmatpush.msra.mxu0 0.0
        %2311 = vmatpush.msra.mxu0 %v2293
        %2312 = vmatpush.msra.mxu0 %v2292
        %2313 = vmatpush.msra.mxu0 %v2291
        %2314 = vmatpush.msra.mxu0 %v2290
        %2315 = vmatmul.f32.gmra.mxu0 %v1262
        %v2316 = vpop.f32.mrf.mxu0
        %v2317 = vadd.f32 %v2297, %v2316
        %2318 = vmatmul.f32.gmra.mxu0 %v1265
        %v2319 = vpop.f32.mrf.mxu0
        %v2320 = vadd.f32 %v2297, %v2319
        %2321 = vdwg.mxu0
        %s2322 = scalar_lea.vmem %s13, 32
        %v2323 = vld [vmem:[%s2322] sm:$0xff]
        %v2324 = vld [vmem:[%s2322 + $0x8] sm:$0xff]
        %v2325 = vld [vmem:[%s2322 + $0x10] sm:$0xff]
        %v2326 = vld [vmem:[%s2322 + $0x18] sm:$0xff]
        %s2327 = scalar_lea.vmem %s14, 1
        %v2328 = vld [vmem:[%s2327] sm:$0x1]
        %v2330 = vperm.slane %v2328, 0
        %v2333 = vsel %vm821, %v2288, 0
        %2335 = vmatpush.msra.mxu0 0.0
        %2336 = vmatpush.msra.mxu0 0.0
        %2337 = vmatpush.msra.mxu0 0.0
        %2338 = vmatpush.msra.mxu0 0.0
        %2339 = vmatpush.msra.mxu0 0.0
        %2340 = vmatpush.msra.mxu0 0.0
        %2341 = vmatpush.msra.mxu0 0.0
        %2342 = vmatpush.msra.mxu0 0.0
        %2343 = vmatpush.msra.mxu0 0.0
        %2344 = vmatpush.msra.mxu0 0.0
        %2345 = vmatpush.msra.mxu0 0.0
        %2346 = vmatpush.msra.mxu0 0.0
        %2347 = vmatpush.msra.mxu0 %v2326
        %2348 = vmatpush.msra.mxu0 %v2325
        %2349 = vmatpush.msra.mxu0 %v2324
        %2350 = vmatpush.msra.mxu0 %v2323
        %2351 = vmatmul.f32.gmra.mxu0 %v2333
        %v2352 = vpop.f32.mrf.mxu0
        %v2353 = vadd.f32 %v2330, %v2352
        %2354 = vdwg.mxu0
        %s2355 = scalar_lea.vmem %s15, 32
        %v2356 = vld [vmem:[%s2355] sm:$0xff]
        %v2357 = vld [vmem:[%s2355 + $0x8] sm:$0xff]
        %v2358 = vld [vmem:[%s2355 + $0x10] sm:$0xff]
        %v2359 = vld [vmem:[%s2355 + $0x18] sm:$0xff]
        %s2360 = scalar_lea.vmem %s16, 1
        %v2361 = vld [vmem:[%s2360] sm:$0x1]
        %v2363 = vsel %vm853, %v2353, 0
        %v2366 = vsel %vm853, %v2317, 0
        %v2369 = vsel %vm853, %v2320, 0
        %2371 = vmatpush.xpose.msra.mxu0 0.0
        %2372 = vmatpush.xpose.msra.mxu0 0.0
        %2373 = vmatpush.xpose.msra.mxu0 0.0
        %2374 = vmatpush.xpose.msra.mxu0 0.0
        %2375 = vmatpush.xpose.msra.mxu0 0.0
        %2376 = vmatpush.xpose.msra.mxu0 0.0
        %2377 = vmatpush.xpose.msra.mxu0 0.0
        %2378 = vmatpush.xpose.msra.mxu0 0.0
        %2379 = vmatpush.xpose.msra.mxu0 0.0
        %2380 = vmatpush.xpose.msra.mxu0 0.0
        %2381 = vmatpush.xpose.msra.mxu0 0.0
        %2382 = vmatpush.xpose.msra.mxu0 0.0
        %2383 = vmatpush.xpose.msra.mxu0 0.0
        %2384 = vmatpush.xpose.msra.mxu0 0.0
        %2385 = vmatpush.xpose.msra.mxu0 %v2369
        %2386 = vmatpush.xpose.msra.mxu0 %v2366
        %2387 = vmatmul.f32.gmra.mxu0 %v2363
        %v2388 = vpop.f32.mrf.mxu0
        %v2389 = vadd.f32 0.0, %v2388
        %2390 = vdwg.mxu0
        %v2391 = vmul.f32 %v2389, 0.35355338
        %v2392 = vadd.f32 %v2391, %v1357
        %v2393 = vsel %vm1360, %v2392, -inf
        %2394 = vmax.xlane.f32.xlu0 %v2393
        %v2395 = vpop.xlane.xlu0 %2394
        %v2396 = vsub.f32 %v2392, %v2395
        %v2397 = vmul.f32 %v2396, 1.442695
        %v2398 = vpow.pop %v2397
        %v2399 = vsel %vm1360, %v2398, 0.0
        %2400 = vadd.xlane.f32.xlu0 %v2399
        %v2401 = vpop.xlane.xlu0 %2400
        %v2402 = vrcp.pop %v2401
        %v2403 = vmul.f32 %v2401, %v2402
        %v2404 = vsub.f32 1.0, %v2403
        %v2405 = vmul.f32 %v2402, %v2404
        %v2406 = vadd.f32 %v2402, %v2405
        %vm2407 = vweird.f32 %v2401
        %vm2408 = vweird.f32 %v2402
        %vm2409 = vmor %vm2407, %vm2408
        %v2410 = vsel %vm2409, %v2402, %v2406
        %v2411 = vand.u32 2147483647, %v2401
        %vm2412 = vcmp.eq.f32.partialorder %v2411, 8.507059e+37
        %v2413 = vand.u32 %v2401, 2147483648
        %v2414 = vor.u32 1.1754944e-38, %v2413
        %v2415 = vsel %vm2412, %v2414, %v2410
        %v2416 = vmul.f32 %v2398, %v2415
        %2417 = vrot.lane.b32.xlu0 %v2317, 96
        %v2418 = vpop.permute.xlu0 %2417
        %2419 = vrot.lane.b32.xlu0 %v2320, 96
        %v2420 = vpop.permute.xlu0 %2419
        %v2423 = vsel %vm1360, %v2416, 0
        %v2425 = vsel %vm1393, %v2420, 0
        %2427 = vmatpush.msra.mxu0 0.0
        %2428 = vmatpush.msra.mxu0 0.0
        %2429 = vmatpush.msra.mxu0 0.0
        %2430 = vmatpush.msra.mxu0 0.0
        %2431 = vmatpush.msra.mxu0 0.0
        %2432 = vmatpush.msra.mxu0 0.0
        %2433 = vmatpush.msra.mxu0 0.0
        %2434 = vmatpush.msra.mxu0 0.0
        %2435 = vmatpush.msra.mxu0 0.0
        %2436 = vmatpush.msra.mxu0 0.0
        %2437 = vmatpush.msra.mxu0 0.0
        %2438 = vmatpush.msra.mxu0 0.0
        %2439 = vmatpush.msra.mxu0 0.0
        %2440 = vmatpush.msra.mxu0 0.0
        %2441 = vmatpush.msra.mxu0 %v2425
        %2442 = vmatpush.msra.mxu0 %v2418
        %2443 = vmatmul.f32.gmra.mxu0 %v2423
        %v2444 = vpop.f32.mrf.mxu0
        %v2445 = vadd.f32 0.0, %v2444
        %2446 = vdwg.mxu0
        %2447 = vrot.lane.b32.xlu0 %v2353, 120
        %v2448 = vpop.permute.xlu0 %2447
        %2449 = vrot.lane.b32.xlu0 %v2317, 120
        %v2450 = vpop.permute.xlu0 %2449
        %2451 = vrot.lane.b32.xlu0 %v2320, 120
        %v2452 = vpop.permute.xlu0 %2451
        %v2453 = vsel %vm853, %v2448, 0
        %v2455 = vsel %vm853, %v2450, 0
        %v2457 = vsel %vm853, %v2452, 0
        %2459 = vmatpush.xpose.msra.mxu0 0.0
        %2460 = vmatpush.xpose.msra.mxu0 0.0
        %2461 = vmatpush.xpose.msra.mxu0 0.0
        %2462 = vmatpush.xpose.msra.mxu0 0.0
        %2463 = vmatpush.xpose.msra.mxu0 0.0
        %2464 = vmatpush.xpose.msra.mxu0 0.0
        %2465 = vmatpush.xpose.msra.mxu0 0.0
        %2466 = vmatpush.xpose.msra.mxu0 0.0
        %2467 = vmatpush.xpose.msra.mxu0 0.0
        %2468 = vmatpush.xpose.msra.mxu0 0.0
        %2469 = vmatpush.xpose.msra.mxu0 0.0
        %2470 = vmatpush.xpose.msra.mxu0 0.0
        %2471 = vmatpush.xpose.msra.mxu0 0.0
        %2472 = vmatpush.xpose.msra.mxu0 0.0
        %2473 = vmatpush.xpose.msra.mxu0 %v2457
        %2474 = vmatpush.xpose.msra.mxu0 %v2455
        %2475 = vmatmul.f32.gmra.mxu0 %v2453
        %v2476 = vpop.f32.mrf.mxu0
        %v2477 = vadd.f32 0.0, %v2476
        %2478 = vdwg.mxu0
        %v2479 = vmul.f32 %v2477, 0.35355338
        %v2480 = vadd.f32 %v2479, %v1357
        %v2481 = vsel %vm1360, %v2480, -inf
        %2482 = vmax.xlane.f32.xlu0 %v2481
        %v2483 = vpop.xlane.xlu0 %2482
        %v2484 = vsub.f32 %v2480, %v2483
        %v2485 = vmul.f32 %v2484, 1.442695
        %v2486 = vpow.pop %v2485
        %v2487 = vsel %vm1360, %v2486, 0.0
        %2488 = vadd.xlane.f32.xlu0 %v2487
        %v2489 = vpop.xlane.xlu0 %2488
        %v2490 = vrcp.pop %v2489
        %v2491 = vmul.f32 %v2489, %v2490
        %v2492 = vsub.f32 1.0, %v2491
        %v2493 = vmul.f32 %v2490, %v2492
        %v2494 = vadd.f32 %v2490, %v2493
        %vm2495 = vweird.f32 %v2489
        %vm2496 = vweird.f32 %v2490
        %vm2497 = vmor %vm2495, %vm2496
        %v2498 = vsel %vm2497, %v2490, %v2494
        %v2499 = vand.u32 2147483647, %v2489
        %vm2500 = vcmp.eq.f32.partialorder %v2499, 8.507059e+37
        %v2501 = vand.u32 %v2489, 2147483648
        %v2502 = vor.u32 1.1754944e-38, %v2501
        %v2503 = vsel %vm2500, %v2502, %v2498
        %v2504 = vmul.f32 %v2486, %v2503
        %2505 = vrot.lane.b32.xlu0 %v2317, 88
        %v2506 = vpop.permute.xlu0 %2505
        %2507 = vrot.lane.b32.xlu0 %v2320, 88
        %v2508 = vpop.permute.xlu0 %2507
        %v2511 = vsel %vm1360, %v2504, 0
        %v2513 = vsel %vm1393, %v2508, 0
        %2515 = vmatpush.msra.mxu0 0.0
        %2516 = vmatpush.msra.mxu0 0.0
        %2517 = vmatpush.msra.mxu0 0.0
        %2518 = vmatpush.msra.mxu0 0.0
        %2519 = vmatpush.msra.mxu0 0.0
        %2520 = vmatpush.msra.mxu0 0.0
        %2521 = vmatpush.msra.mxu0 0.0
        %2522 = vmatpush.msra.mxu0 0.0
        %2523 = vmatpush.msra.mxu0 0.0
        %2524 = vmatpush.msra.mxu0 0.0
        %2525 = vmatpush.msra.mxu0 0.0
        %2526 = vmatpush.msra.mxu0 0.0
        %2527 = vmatpush.msra.mxu0 0.0
        %2528 = vmatpush.msra.mxu0 0.0
        %2529 = vmatpush.msra.mxu0 %v2513
        %2530 = vmatpush.msra.mxu0 %v2506
        %2531 = vmatmul.f32.gmra.mxu0 %v2511
        %v2532 = vpop.f32.mrf.mxu0
        %v2533 = vadd.f32 0.0, %v2532
        %2534 = vdwg.mxu0
        %2535 = vrot.lane.b32.xlu0 %v2353, 112
        %v2536 = vpop.permute.xlu0 %2535
        %2537 = vrot.lane.b32.xlu0 %v2317, 112
        %v2538 = vpop.permute.xlu0 %2537
        %2539 = vrot.lane.b32.xlu0 %v2320, 112
        %v2540 = vpop.permute.xlu0 %2539
        %v2541 = vsel %vm853, %v2536, 0
        %v2543 = vsel %vm853, %v2538, 0
        %v2545 = vsel %vm853, %v2540, 0
        %2547 = vmatpush.xpose.msra.mxu0 0.0
        %2548 = vmatpush.xpose.msra.mxu0 0.0
        %2549 = vmatpush.xpose.msra.mxu0 0.0
        %2550 = vmatpush.xpose.msra.mxu0 0.0
        %2551 = vmatpush.xpose.msra.mxu0 0.0
        %2552 = vmatpush.xpose.msra.mxu0 0.0
        %2553 = vmatpush.xpose.msra.mxu0 0.0
        %2554 = vmatpush.xpose.msra.mxu0 0.0
        %2555 = vmatpush.xpose.msra.mxu0 0.0
        %2556 = vmatpush.xpose.msra.mxu0 0.0
        %2557 = vmatpush.xpose.msra.mxu0 0.0
        %2558 = vmatpush.xpose.msra.mxu0 0.0
        %2559 = vmatpush.xpose.msra.mxu0 0.0
        %2560 = vmatpush.xpose.msra.mxu0 0.0
        %2561 = vmatpush.xpose.msra.mxu0 %v2545
        %2562 = vmatpush.xpose.msra.mxu0 %v2543
        %2563 = vmatmul.f32.gmra.mxu0 %v2541
        %v2564 = vpop.f32.mrf.mxu0
        %v2565 = vadd.f32 0.0, %v2564
        %2566 = vdwg.mxu0
        %v2567 = vmul.f32 %v2565, 0.35355338
        %v2568 = vadd.f32 %v2567, %v1357
        %v2569 = vsel %vm1360, %v2568, -inf
        %2570 = vmax.xlane.f32.xlu0 %v2569
        %v2571 = vpop.xlane.xlu0 %2570
        %v2572 = vsub.f32 %v2568, %v2571
        %v2573 = vmul.f32 %v2572, 1.442695
        %v2574 = vpow.pop %v2573
        %v2575 = vsel %vm1360, %v2574, 0.0
        %2576 = vadd.xlane.f32.xlu0 %v2575
        %v2577 = vpop.xlane.xlu0 %2576
        %v2578 = vrcp.pop %v2577
        %v2579 = vmul.f32 %v2577, %v2578
        %v2580 = vsub.f32 1.0, %v2579
        %v2581 = vmul.f32 %v2578, %v2580
        %v2582 = vadd.f32 %v2578, %v2581
        %vm2583 = vweird.f32 %v2577
        %vm2584 = vweird.f32 %v2578
        %vm2585 = vmor %vm2583, %vm2584
        %v2586 = vsel %vm2585, %v2578, %v2582
        %v2587 = vand.u32 2147483647, %v2577
        %vm2588 = vcmp.eq.f32.partialorder %v2587, 8.507059e+37
        %v2589 = vand.u32 %v2577, 2147483648
        %v2590 = vor.u32 1.1754944e-38, %v2589
        %v2591 = vsel %vm2588, %v2590, %v2586
        %v2592 = vmul.f32 %v2574, %v2591
        %2593 = vrot.lane.b32.xlu0 %v2317, 80
        %v2594 = vpop.permute.xlu0 %2593
        %2595 = vrot.lane.b32.xlu0 %v2320, 80
        %v2596 = vpop.permute.xlu0 %2595
        %v2599 = vsel %vm1360, %v2592, 0
        %v2601 = vsel %vm1393, %v2596, 0
        %2603 = vmatpush.msra.mxu0 0.0
        %2604 = vmatpush.msra.mxu0 0.0
        %2605 = vmatpush.msra.mxu0 0.0
        %2606 = vmatpush.msra.mxu0 0.0
        %2607 = vmatpush.msra.mxu0 0.0
        %2608 = vmatpush.msra.mxu0 0.0
        %2609 = vmatpush.msra.mxu0 0.0
        %2610 = vmatpush.msra.mxu0 0.0
        %2611 = vmatpush.msra.mxu0 0.0
        %2612 = vmatpush.msra.mxu0 0.0
        %2613 = vmatpush.msra.mxu0 0.0
        %2614 = vmatpush.msra.mxu0 0.0
        %2615 = vmatpush.msra.mxu0 0.0
        %2616 = vmatpush.msra.mxu0 0.0
        %2617 = vmatpush.msra.mxu0 %v2601
        %2618 = vmatpush.msra.mxu0 %v2594
        %2619 = vmatmul.f32.gmra.mxu0 %v2599
        %v2620 = vpop.f32.mrf.mxu0
        %v2621 = vadd.f32 0.0, %v2620
        %2622 = vdwg.mxu0
        %2623 = vrot.lane.b32.xlu0 %v2353, 104
        %v2624 = vpop.permute.xlu0 %2623
        %2625 = vrot.lane.b32.xlu0 %v2317, 104
        %v2626 = vpop.permute.xlu0 %2625
        %2627 = vrot.lane.b32.xlu0 %v2320, 104
        %v2628 = vpop.permute.xlu0 %2627
        %v2629 = vsel %vm853, %v2624, 0
        %v2631 = vsel %vm853, %v2626, 0
        %v2633 = vsel %vm853, %v2628, 0
        %2635 = vmatpush.xpose.msra.mxu0 0.0
        %2636 = vmatpush.xpose.msra.mxu0 0.0
        %2637 = vmatpush.xpose.msra.mxu0 0.0
        %2638 = vmatpush.xpose.msra.mxu0 0.0
        %2639 = vmatpush.xpose.msra.mxu0 0.0
        %2640 = vmatpush.xpose.msra.mxu0 0.0
        %2641 = vmatpush.xpose.msra.mxu0 0.0
        %2642 = vmatpush.xpose.msra.mxu0 0.0
        %2643 = vmatpush.xpose.msra.mxu0 0.0
        %2644 = vmatpush.xpose.msra.mxu0 0.0
        %2645 = vmatpush.xpose.msra.mxu0 0.0
        %2646 = vmatpush.xpose.msra.mxu0 0.0
        %2647 = vmatpush.xpose.msra.mxu0 0.0
        %2648 = vmatpush.xpose.msra.mxu0 0.0
        %2649 = vmatpush.xpose.msra.mxu0 %v2633
        %2650 = vmatpush.xpose.msra.mxu0 %v2631
        %2651 = vmatmul.f32.gmra.mxu0 %v2629
        %v2652 = vpop.f32.mrf.mxu0
        %v2653 = vadd.f32 0.0, %v2652
        %2654 = vdwg.mxu0
        %v2655 = vmul.f32 %v2653, 0.35355338
        %v2656 = vadd.f32 %v2655, %v1357
        %v2657 = vsel %vm1360, %v2656, -inf
        %2658 = vmax.xlane.f32.xlu0 %v2657
        %v2659 = vpop.xlane.xlu0 %2658
        %v2660 = vsub.f32 %v2656, %v2659
        %v2661 = vmul.f32 %v2660, 1.442695
        %v2662 = vpow.pop %v2661
        %v2663 = vsel %vm1360, %v2662, 0.0
        %2664 = vadd.xlane.f32.xlu0 %v2663
        %v2665 = vpop.xlane.xlu0 %2664
        %v2666 = vrcp.pop %v2665
        %v2667 = vmul.f32 %v2665, %v2666
        %v2668 = vsub.f32 1.0, %v2667
        %v2669 = vmul.f32 %v2666, %v2668
        %v2670 = vadd.f32 %v2666, %v2669
        %vm2671 = vweird.f32 %v2665
        %vm2672 = vweird.f32 %v2666
        %vm2673 = vmor %vm2671, %vm2672
        %v2674 = vsel %vm2673, %v2666, %v2670
        %v2675 = vand.u32 2147483647, %v2665
        %vm2676 = vcmp.eq.f32.partialorder %v2675, 8.507059e+37
        %v2677 = vand.u32 %v2665, 2147483648
        %v2678 = vor.u32 1.1754944e-38, %v2677
        %v2679 = vsel %vm2676, %v2678, %v2674
        %v2680 = vmul.f32 %v2662, %v2679
        %2681 = vrot.lane.b32.xlu0 %v2317, 72
        %v2682 = vpop.permute.xlu0 %2681
        %2683 = vrot.lane.b32.xlu0 %v2320, 72
        %v2684 = vpop.permute.xlu0 %2683
        %v2687 = vsel %vm1360, %v2680, 0
        %v2689 = vsel %vm1393, %v2684, 0
        %2691 = vmatpush.msra.mxu0 0.0
        %2692 = vmatpush.msra.mxu0 0.0
        %2693 = vmatpush.msra.mxu0 0.0
        %2694 = vmatpush.msra.mxu0 0.0
        %2695 = vmatpush.msra.mxu0 0.0
        %2696 = vmatpush.msra.mxu0 0.0
        %2697 = vmatpush.msra.mxu0 0.0
        %2698 = vmatpush.msra.mxu0 0.0
        %2699 = vmatpush.msra.mxu0 0.0
        %2700 = vmatpush.msra.mxu0 0.0
        %2701 = vmatpush.msra.mxu0 0.0
        %2702 = vmatpush.msra.mxu0 0.0
        %2703 = vmatpush.msra.mxu0 0.0
        %2704 = vmatpush.msra.mxu0 0.0
        %2705 = vmatpush.msra.mxu0 %v2689
        %2706 = vmatpush.msra.mxu0 %v2682
        %2707 = vmatmul.f32.gmra.mxu0 %v2687
        %v2708 = vpop.f32.mrf.mxu0
        %v2709 = vadd.f32 0.0, %v2708
        %2710 = vdwg.mxu0
        %2712 = vrot.lane.b32.xlu0 %v2533, 8
        %v2713 = vpop.permute.xlu0 %2712
        %2716 = vrot.lane.b32.xlu0 %v2621, 16
        %v2717 = vpop.permute.xlu0 %2716
        %2720 = vrot.lane.b32.xlu0 %v2709, 24
        %v2721 = vpop.permute.xlu0 %2720
        %v2723 = vsel %vm853, %v2445, %v2713
        %v2724 = vsel %vm1183, %v2723, %v2717
        %v2725 = vsel %vm1185, %v2724, %v2721
        %2726 = vrot.lane.b32.xlu0 %v2504, 10
        %v2727 = vpop.permute.xlu0 %2726
        %2729 = vrot.lane.b32.xlu0 %v2592, 20
        %v2730 = vpop.permute.xlu0 %2729
        %2732 = vrot.lane.b32.xlu0 %v2680, 30
        %v2733 = vpop.permute.xlu0 %2732
        %v2735 = vsel %vm1360, %v2416, %v2727
        %vm2736 = vcmask 162816
        %v2737 = vsel %vm2736, %v2735, %v2730
        %vm2738 = vcmask 244736
        %v2739 = vsel %vm2738, %v2737, %v2733
        %v2741 = vperm.slane %v2361, 0
        %v2744 = vsel %vm821, %v2725, 0
        %2746 = vmatpush.msra.mxu0 0.0
        %2747 = vmatpush.msra.mxu0 0.0
        %2748 = vmatpush.msra.mxu0 0.0
        %2749 = vmatpush.msra.mxu0 0.0
        %2750 = vmatpush.msra.mxu0 0.0
        %2751 = vmatpush.msra.mxu0 0.0
        %2752 = vmatpush.msra.mxu0 0.0
        %2753 = vmatpush.msra.mxu0 0.0
        %2754 = vmatpush.msra.mxu0 0.0
        %2755 = vmatpush.msra.mxu0 0.0
        %2756 = vmatpush.msra.mxu0 0.0
        %2757 = vmatpush.msra.mxu0 0.0
        %2758 = vmatpush.msra.mxu0 %v2359
        %2759 = vmatpush.msra.mxu0 %v2358
        %2760 = vmatpush.msra.mxu0 %v2357
        %2761 = vmatpush.msra.mxu0 %v2356
        %2762 = vmatmul.f32.gmra.mxu0 %v2744
        %v2763 = vpop.f32.mrf.mxu0
        %v2764 = vadd.f32 %v2741, %v2763
        %2765 = vdwg.mxu0
        %v2766 = vmul.f32 %v2764, %v1216
        %vm2767 = vcmask 326656
        %2768 = vst.msk [vmem:[%s791] sm:$0xff] %vm2767, %v2739
        %v2769 = vadd.f32 %v2288, %v2766
        %v2770 = vsel %vm821, %v2769, 0.0
        %2771 = vadd.xlane.f32.xlu0 %v2770
        %v2772 = vpop.xlane.xlu0 %2771
        %v2773 = vmul.f32 %v2772, %v1229
        %v2774 = vsub.f32 %v2769, %v2773
        %v2775 = vmul.f32 %v2774, %v2774
        %v2776 = vsel %vm821, %v2775, 0.0
        %2777 = vadd.xlane.f32.xlu0 %v2776
        %v2778 = vpop.xlane.xlu0 %2777
        %v2779 = vmul.f32 %v2778, %v1229
        %v2780 = vadd.f32 %v2779, 1e-05
        %v2781 = vrsqrt.pop %v2780
        %v2782 = vmul.f32 %v2781, %v2780
        %v2783 = vmul.f32 %v2782, %v2781
        %v2784 = vmul.f32 0.5, %v2783
        %v2785 = vsub.f32 1.5, %v2784
        %v2786 = vmul.f32 %v2781, %v2785
        %vm2787 = vweird.f32 %v2780
        %vm2788 = vweird.f32 %v2781
        %vm2789 = vmor %vm2787, %vm2788
        %v2790 = vsel %vm2789, %v2781, %v2786
        %v2791 = vmul.f32 %v2774, %v2790
        %v2792 = vperm.slane %v1845, 1
        %v2793 = vmul.f32 %v2791, %v2792
        %v2794 = vperm.slane %v1847, 1
        %v2795 = vadd.f32 %v2793, %v2794
        %s2796 = scalar_lea.vmem %s17, 32
        %v2797 = vld [vmem:[%s2796] sm:$0xff]
        %v2798 = vld [vmem:[%s2796 + $0x8] sm:$0xff]
        %v2799 = vld [vmem:[%s2796 + $0x10] sm:$0xff]
        %v2800 = vld [vmem:[%s2796 + $0x18] sm:$0xff]
        %s2801 = scalar_lea.vmem %s18, 1
        %v2802 = vld [vmem:[%s2801] sm:$0x1]
        %v2804 = vperm.slane %v2802, 0
        %v2807 = vsel %vm821, %v2795, 0
        %2809 = vmatpush.msra.mxu0 0.0
        %2810 = vmatpush.msra.mxu0 0.0
        %2811 = vmatpush.msra.mxu0 0.0
        %2812 = vmatpush.msra.mxu0 0.0
        %2813 = vmatpush.msra.mxu0 0.0
        %2814 = vmatpush.msra.mxu0 0.0
        %2815 = vmatpush.msra.mxu0 0.0
        %2816 = vmatpush.msra.mxu0 0.0
        %2817 = vmatpush.msra.mxu0 0.0
        %2818 = vmatpush.msra.mxu0 0.0
        %2819 = vmatpush.msra.mxu0 0.0
        %2820 = vmatpush.msra.mxu0 0.0
        %2821 = vmatpush.msra.mxu0 %v2800
        %2822 = vmatpush.msra.mxu0 %v2799
        %2823 = vmatpush.msra.mxu0 %v2798
        %2824 = vmatpush.msra.mxu0 %v2797
        %2825 = vmatmul.f32.gmra.mxu0 %v2807
        %v2826 = vpop.f32.mrf.mxu0
        %v2827 = vadd.f32 %v2804, %v2826
        %2828 = vdwg.mxu0
        %v2829 = vmax.f32 %v2827, 0.0
        %s2830 = scalar_lea.vmem %s19, 64
        %v2831 = vld [vmem:[%s2830] sm:$0xff]
        %v2832 = vld [vmem:[%s2830 + $0x8] sm:$0xff]
        %v2833 = vld [vmem:[%s2830 + $0x10] sm:$0xff]
        %v2834 = vld [vmem:[%s2830 + $0x18] sm:$0xff]
        %v2835 = vld [vmem:[%s2830 + $0x20] sm:$0xff]
        %v2836 = vld [vmem:[%s2830 + $0x28] sm:$0xff]
        %v2837 = vld [vmem:[%s2830 + $0x30] sm:$0xff]
        %v2838 = vld [vmem:[%s2830 + $0x38] sm:$0xff]
        %s2839 = scalar_lea.vmem %s20, 1
        %v2840 = vld [vmem:[%s2839] sm:$0x1]
        %v2842 = vperm.slane %v2840, 0
        %v2845 = vsel %vm1793, %v2829, 0
        %2847 = vmatpush.msra.mxu0 0.0
        %2848 = vmatpush.msra.mxu0 0.0
        %2849 = vmatpush.msra.mxu0 0.0
        %2850 = vmatpush.msra.mxu0 0.0
        %2851 = vmatpush.msra.mxu0 0.0
        %2852 = vmatpush.msra.mxu0 0.0
        %2853 = vmatpush.msra.mxu0 0.0
        %2854 = vmatpush.msra.mxu0 0.0
        %2855 = vmatpush.msra.mxu0 %v2838
        %2856 = vmatpush.msra.mxu0 %v2837
        %2857 = vmatpush.msra.mxu0 %v2836
        %2858 = vmatpush.msra.mxu0 %v2835
        %2859 = vmatpush.msra.mxu0 %v2834
        %2860 = vmatpush.msra.mxu0 %v2833
        %2861 = vmatpush.msra.mxu0 %v2832
        %2862 = vmatpush.msra.mxu0 %v2831
        %2863 = vmatmul.f32.gmra.mxu0 %v2845
        %v2864 = vpop.f32.mrf.mxu0
        %v2865 = vadd.f32 %v2842, %v2864
        %2866 = vdwg.mxu0
        %v2867 = vadd.f32 %v2795, %v2865
        %v2868 = vsel %vm821, %v2867, 0.0
        %2869 = vadd.xlane.f32.xlu0 %v2868
        %v2870 = vpop.xlane.xlu0 %2869
        %v2871 = vmul.f32 %v2870, %v1229
        %v2872 = vsub.f32 %v2867, %v2871
        %v2873 = vmul.f32 %v2872, %v2872
        %v2874 = vsel %vm821, %v2873, 0.0
        %2875 = vadd.xlane.f32.xlu0 %v2874
        %v2876 = vpop.xlane.xlu0 %2875
        %v2877 = vmul.f32 %v2876, %v1229
        %v2878 = vadd.f32 %v2877, 1e-05
        %v2879 = vrsqrt.pop %v2878
        %v2880 = vmul.f32 %v2879, %v2878
        %v2881 = vmul.f32 %v2880, %v2879
        %v2882 = vmul.f32 0.5, %v2881
        %v2883 = vsub.f32 1.5, %v2882
        %v2884 = vmul.f32 %v2879, %v2883
        %vm2885 = vweird.f32 %v2878
        %vm2886 = vweird.f32 %v2879
        %vm2887 = vmor %vm2885, %vm2886
        %v2888 = vsel %vm2887, %v2879, %v2884
        %v2889 = vmul.f32 %v2872, %v2888
        %v2890 = vperm.slane %v1845, 2
        %v2891 = vmul.f32 %v2889, %v2890
        %v2892 = vperm.slane %v1847, 2
        %v2893 = vadd.f32 %v2891, %v2892
        %2894 = vst.msk [vmem:[%s752] sm:$0xff] %vm821, %v2893
        %s2895 = sand.u32 %s512, 1
        %s2896 = scalar_lea.sflag [#allocation3], %s2895
        %s2897 = sand.u32 %s512, 1
        %s2898 = smul.addr %s2897, 8
        %s2899 = scalar_lea.vmem [#allocation2], %s2898
        %p2900 = scmp.lt.s32.totalorder %s38, 1
        %s2901 = scalar_select %p2900, %s38, 1
        %s2902 = smul.addr %s2901, 8
        %s2903 = scalar_lea.vmem %s22, %s2902
        %p2904 = scmp.lt.s32.totalorder %s38, 1
        %s2905 = scalar_select %p2904, %s38, 1
        %s2906 = smul.addr %s2905, 8
        %s2907 = scalar_lea.vmem %s23, %s2906
        // Predicated region
        $region105: #{self_att_decoder_forward.1} parent=103 // pred_check
          %p2908 = pneg %p522
        $region106: #{self_att_decoder_forward.1} parent=103 // pred_check_branch
          %2910 = sbr.rel (%p2908) target = $region108
        $region107: #{self_att_decoder_forward.1} parent=103 // pred_region
          %2912 = vsyncadd %s2896, 0
          %s2913 = smul.addr %s38, 8
          %s2914 = scalar_lea.hbm %s21, %s2913
          %s2916 = sshll.u32 %s2899, 4
          %s2917 = int_to_ptr.vmem [resolvable:$true] %s2916
          %s2918 = sshll.u32 %s2914, 4
          %s2919 = int_to_ptr.hbm [resolvable:$true] %s2918
          %2921 = dma.vmem_to_hbm [thread:$0]  %s2917, 128, %s2919, %s2896
        $region108: #{self_att_decoder_forward.1} parent=103 // pred_fallthru
          _
        // Predicated region
        $region109: #{self_att_decoder_forward.1} parent=103 // pred_check
          %p2922 = pneg %p548
        $region110: #{self_att_decoder_forward.1} parent=103 // pred_check_branch
          %2924 = sbr.rel (%p2922) target = $region112
        $region111: #{self_att_decoder_forward.1} parent=103 // pred_region
          _
        $region112: #{self_att_decoder_forward.1} parent=103 // pred_fallthru
          _
        // Predicated region
        $region113: #{self_att_decoder_forward.1} parent=103 // pred_check
          %p2925 = pneg %p574
        $region114: #{self_att_decoder_forward.1} parent=103 // pred_check_branch
          %2927 = sbr.rel (%p2925) target = $region116
        $region115: #{self_att_decoder_forward.1} parent=103 // pred_region
          _
        $region116: #{self_att_decoder_forward.1} parent=103 // pred_fallthru
          _
      $region104: #{self_att_decoder_forward.1} parent=5 // pred_fallthru
        _
      %p2928 = scmp.le.s32.totalorder 2, %s33
      // Predicated region
      $region117: #{self_att_decoder_forward.1} parent=5 // pred_check
        %p2929 = pneg %p2928
      $region118: #{self_att_decoder_forward.1} parent=5 // pred_check_branch
        %2931 = sbr.rel (%p2929) target = $region120
      $region119: #{self_att_decoder_forward.1} parent=5 // pred_region
        %s2932 = ssub.s32 %s33, 2
        // Predicated region
        $region121: #{self_att_decoder_forward.1} parent=119 // pred_check
          %p2933 = pneg %p528
        $region122: #{self_att_decoder_forward.1} parent=119 // pred_check_branch
          %2935 = sbr.rel (%p2933) target = $region124
        $region123: #{self_att_decoder_forward.1} parent=119 // pred_region
          %s2936 = sand.u32 %s513, 1
          %s2937 = scalar_lea.sflag [#allocation3], %s2936
          %s2938 = sand.u32 %s513, 1
          %s2939 = smul.addr %s2938, 8
          %s2940 = scalar_lea.vmem [#allocation2], %s2939
          %2942 = dma.done %s2937, 128
        $region124: #{self_att_decoder_forward.1} parent=119 // pred_fallthru
          _
        // Predicated region
        $region125: #{self_att_decoder_forward.1} parent=119 // pred_check
          %p2943 = pneg %p554
        $region126: #{self_att_decoder_forward.1} parent=119 // pred_check_branch
          %2945 = sbr.rel (%p2943) target = $region128
        $region127: #{self_att_decoder_forward.1} parent=119 // pred_region
          %p2946 = scmp.lt.s32.totalorder %s39, 1
          %s2947 = scalar_select %p2946, %s39, 1
          %s2948 = smul.addr %s2947, 8
          %s2949 = scalar_lea.vmem %s22, %s2948
        $region128: #{self_att_decoder_forward.1} parent=119 // pred_fallthru
          _
        // Predicated region
        $region129: #{self_att_decoder_forward.1} parent=119 // pred_check
          %p2950 = pneg %p580
        $region130: #{self_att_decoder_forward.1} parent=119 // pred_check_branch
          %2952 = sbr.rel (%p2950) target = $region132
        $region131: #{self_att_decoder_forward.1} parent=119 // pred_region
          %p2953 = scmp.lt.s32.totalorder %s39, 1
          %s2954 = scalar_select %p2953, %s39, 1
          %s2955 = smul.addr %s2954, 8
          %s2956 = scalar_lea.vmem %s23, %s2955
        $region132: #{self_att_decoder_forward.1} parent=119 // pred_fallthru
          _
      $region120: #{self_att_decoder_forward.1} parent=5 // pred_fallthru
        _
    $region6: #{self_att_decoder_forward.1} parent=1 // loop_footer
      %s37 = sadd.s32 1, %s33
    $region7: #{self_att_decoder_forward.1} parent=1 // loop_footer_branch
      %32 = sbr.rel target = $region3
    $region8: #{self_att_decoder_forward.1} parent=1 // loop_exit
      _
    %2957 = vsyncpa [#allocation3], 1
    %s2958 = scalar_lea.sflag [#allocation3], 1
    %2959 = vsyncpa %s2958, 1

</llo_original>
